<compile_context>
chip_gen: v7x
topology: tpu7x:2x2x1
jax: 0.10.0
libtpu: 0.0.40
codegen_flags: <defaults>
</compile_context>

<pallas_src>
import jax
import jax.numpy as jnp
from jax import lax
from jax.experimental import pallas as pl
from jax.experimental.pallas import tpu as pltpu


# ----------------------------------------------------------------------------
# One conv1d(k=3, valid) + unscaled self-attention block (2-D, one batch elem)
# ----------------------------------------------------------------------------
def _attn_conv_block(x, wc_ref, bc_ref, wqkv_ref, bqkv_ref):
    """x: (T, DP) f32.  Returns (T-2, DP) f32.

    wc_ref:   (3, DP, DP)  bf16   stacked conv taps (tap, in, out)
    bc_ref:   (1, DP)      f32
    wqkv_ref: (DP, 3*DP)   bf16   [Wq^T | Wk^T | Wv^T]
    bqkv_ref: (1, 3*DP)    f32
    """
    T, DP = x.shape
    To = T - 2
    xb = x.astype(jnp.bfloat16)

    # Conv1d(k=3, valid): three accumulating MXU matmuls (no im2col temp).
    y = bc_ref[...]                                                  # (1, DP) f32
    for tap in range(3):
        y = y + jnp.dot(xb[tap:tap + To, :], wc_ref[tap],
                        preferred_element_type=jnp.float32)          # (To, DP) f32

    # Merged QKV projection: one MXU pass, then static lane-aligned slices.
    qkv = jnp.dot(y.astype(jnp.bfloat16), wqkv_ref[...],
                  preferred_element_type=jnp.float32) + bqkv_ref[...]
    q = qkv[:, 0:DP]
    k = qkv[:, DP:2 * DP]
    v = qkv[:, 2 * DP:3 * DP]

    # Unscaled attention scores (exactly as in the PyTorch module): contract
    # the last dims directly instead of materializing k.T.
    s = lax.dot_general(q.astype(jnp.bfloat16), k.astype(jnp.bfloat16),
                        (((1,), (1,)), ((), ())),
                        preferred_element_type=jnp.float32)          # (To, To) f32
    s = s - jnp.max(s, axis=-1, keepdims=True)
    p = jnp.exp(s)
    p = p * pl.reciprocal(jnp.sum(p, axis=-1, keepdims=True), approx=True)

    return jnp.dot(p.astype(jnp.bfloat16), v.astype(jnp.bfloat16),
                   preferred_element_type=jnp.float32)               # (To, DP) f32


def _fused_kernel(x_ref,
                  wc1_ref, bc1_ref, wqkv1_ref, bqkv1_ref,
                  wc2_ref, bc2_ref, wqkv2_ref, bqkv2_ref,
                  o_ref):
    """block1 -> block2 -> mean over time, for Bt batch elements per grid step.

    x_ref: (Bt, T, DP) f32;  o_ref: (Bt, DP) f32
    """
    Bt = x_ref.shape[0]
    outs = []
    for b in range(Bt):                       # static unroll, Bt is small
        xb = x_ref[b]                                             # (T, DP)
        xb = _attn_conv_block(xb, wc1_ref, bc1_ref, wqkv1_ref, bqkv1_ref)
        xb = _attn_conv_block(xb, wc2_ref, bc2_ref, wqkv2_ref, bqkv2_ref)
        outs.append(jnp.mean(xb, axis=0, keepdims=True))          # (1, DP)
    o_ref[...] = jnp.concatenate(outs, axis=0)                    # (Bt, DP)


# ----------------------------------------------------------------------------
# Host-side parameter packing (lane-pad, stack conv taps, merge QKV, bf16)
# ----------------------------------------------------------------------------
def _pack_block_params(p, D, DP):
    pd = DP - D
    wc = jnp.pad(p["wconv"], ((0, 0), (0, pd), (0, pd))).astype(jnp.bfloat16)
    bc = jnp.pad(p["bconv"], ((0, 0), (0, pd)))                      # f32 (1, DP)

    def padw(w):
        return jnp.pad(w, ((0, pd), (0, pd)))

    def padb(b):
        return jnp.pad(b, ((0, 0), (0, pd)))

    wqkv = jnp.concatenate([padw(p["wq"]), padw(p["wk"]), padw(p["wv"])],
                           axis=1).astype(jnp.bfloat16)              # (DP, 3DP)
    bqkv = jnp.concatenate([padb(p["bq"]), padb(p["bk"]), padb(p["bv"])],
                           axis=1)                                   # f32 (1, 3DP)
    return wc, bc, wqkv, bqkv


def _vmem_limit_bytes(frac=0.75, fallback=48 * 1024 * 1024):
    """~75% of physical VMEM (100MiB-ish on v5e/v6e, ~48MiB/TC on v7x)."""
    try:
        cap = int(pltpu.get_tpu_info().vmem_capacity_bytes)
        return int(cap * frac)
    except Exception:
        return fallback


# ----------------------------------------------------------------------------
# Wrapper
# ----------------------------------------------------------------------------
def multi_al_seqnet_forward(x, params, *, lane_pad=128, batch_block=8):
    """Full forward pass.  x: (B, T, D) float32 -> (B, D) float32."""
    if x.ndim < 3:
        # The PyTorch module's unsqueeze path yields T=1 and then fails inside
        # the k=3 valid conv; raise a controlled error instead.
        raise ValueError("multi_al_seqNet requires a rank-3 input (B, T, D)")
    B, T, D = x.shape
    if T < 5:
        raise ValueError("need T >= 5 for two valid kernel_size=3 convolutions")

    # Lane-dense padding of the feature dim; zero padding of x / weights /
    # biases keeps the math exact (padded lanes stay identically zero).
    DP = -(-D // lane_pad) * lane_pad
    Bt = min(B, batch_block)            # batch elements per grid step
    Bp = -(-B // Bt) * Bt               # batch padded to a multiple of Bt

    xp = jnp.pad(x, ((0, Bp - B), (0, 0), (0, DP - D)))
    w1 = _pack_block_params(params[0], D, DP)
    w2 = _pack_block_params(params[1], D, DP)

    # Advisory cost estimate (two conv+attention blocks + pooling).
    To1, To2 = T - 2, T - 4

    def _blk_flops(to):
        return (2 * to * 3 * DP * DP        # conv (3 taps)
                + 2 * to * DP * 3 * DP      # merged QKV
                + 2 * to * to * DP          # scores
                + 2 * to * to * DP)         # attn @ v

    cost = pl.CostEstimate(
        flops=int(Bp * (_blk_flops(To1) + _blk_flops(To2))),
        transcendentals=int(Bp * (To1 * To1 + To2 * To2)),
        bytes_accessed=int(xp.size * 4 + Bp * DP * 4
                           + sum(int(w.size) * w.dtype.itemsize
                                 for w in (*w1, *w2))))

    def build(single_buffer_weights):
        extra = {}
        if single_buffer_weights:
            # Weights never change across the grid -> one VMEM buffer is enough.
            extra = dict(pipeline_mode=pl.Buffered(buffer_count=1))

        def wspec(shape):
            idx = (lambda b: (0, 0, 0)) if len(shape) == 3 else (lambda b: (0, 0))
            return pl.BlockSpec(shape, idx, **extra)

        return pl.pallas_call(
            _fused_kernel,
            out_shape=jax.ShapeDtypeStruct((Bp, DP), jnp.float32),
            grid=(Bp // Bt,),
            in_specs=[
                pl.BlockSpec((Bt, T, DP), lambda b: (b, 0, 0)),   # x batch block
                wspec((3, DP, DP)),       # block1 conv taps (bf16)
                wspec((1, DP)),           # block1 conv bias  (f32)
                wspec((DP, 3 * DP)),      # block1 merged QKV (bf16)
                wspec((1, 3 * DP)),       # block1 QKV bias   (f32)
                wspec((3, DP, DP)),       # block2 conv taps
                wspec((1, DP)),           # block2 conv bias
                wspec((DP, 3 * DP)),      # block2 merged QKV
                wspec((1, 3 * DP)),       # block2 QKV bias
            ],
            out_specs=pl.BlockSpec((Bt, DP), lambda b: (b, 0)),
            compiler_params=pltpu.CompilerParams(
                dimension_semantics=("parallel",),
                vmem_limit_bytes=_vmem_limit_bytes()),
            cost_estimate=cost,
        )

    out, err = None, None
    for single in (True, False):         # fall back if Buffered(1) unsupported
        try:
            out = jax.block_until_ready(build(single)(xp, *w1, *w2))
            break
        except Exception as e:            # noqa: BLE001 - compile-time fallback
            err = e
    if out is None:
        raise err
    return out[:B, :D]


# ----------------------------------------------------------------------------
# Deterministic parameter construction + pure-JAX references
# ----------------------------------------------------------------------------
def make_block_params(key, D, scale=0.1):
    ks = jax.random.split(key, 8)
    return {
        # wconv[k][c, o] == torch Conv1d weight[o, c, k]
        "wconv": scale * jax.random.normal(ks[0], (3, D, D), jnp.float32),
        "bconv": scale * jax.random.normal(ks[1], (1, D), jnp.float32),
        "wq": scale * jax.random.normal(ks[2], (D, D), jnp.float32),
        "bq": scale * jax.random.normal(ks[3], (1, D), jnp.float32),
        "wk": scale * jax.random.normal(ks[4], (D, D), jnp.float32),
        "bk": scale * jax.random.normal(ks[5], (1, D), jnp.float32),
        "wv": scale * jax.random.normal(ks[6], (D, D), jnp.float32),
        "bv": scale * jax.random.normal(ks[7], (1, D), jnp.float32),
    }


def reference_forward(x, params):
    """Exact f32 reference matching the PyTorch forward."""
    for p in params:
        To = x.shape[1] - 2
        y = (x[:, 0:To, :] @ p["wconv"][0]
             + x[:, 1:To + 1, :] @ p["wconv"][1]
             + x[:, 2:To + 2, :] @ p["wconv"][2]
             + p["bconv"])
        q = y @ p["wq"] + p["bq"]
        k = y @ p["wk"] + p["bk"]
        v = y @ p["wv"] + p["bv"]
        s = jnp.einsum("btd,bsd->bts", q, k)
        w = jax.nn.softmax(s, axis=-1)
        x = jnp.einsum("bts,bsd->btd", w, v)
    return jnp.mean(x, axis=1)


def reference_forward_bf16(x, params):
    """Reference mirroring the kernel's bf16 MXU operands (exact softmax)."""
    bf, f32 = jnp.bfloat16, jnp.float32
    for p in params:
        To = x.shape[1] - 2
        xb = x.astype(bf)
        wc = p["wconv"].astype(bf)
        y = p["bconv"]
        for tap in range(3):
            y = y + jnp.einsum("btd,do->bto", xb[:, tap:tap + To], wc[tap],
                               preferred_element_type=f32)
        yb = y.astype(bf)

        def proj(w, b):
            return jnp.einsum("btd,do->bto", yb, w.astype(bf),
                              preferred_element_type=f32) + b

        q, k, v = proj(p["wq"], p["bq"]), proj(p["wk"], p["bk"]), proj(p["wv"], p["bv"])
        s = jnp.einsum("bqd,bkd->bqk", q.astype(bf), k.astype(bf),
                       preferred_element_type=f32)
        w = jax.nn.softmax(s, axis=-1)
        x = jnp.einsum("bqk,bkd->bqd", w.astype(bf), v.astype(bf),
                       preferred_element_type=f32)
    return jnp.mean(x, axis=1)


# ----------------------------------------------------------------------------
if __name__ == "__main__":
    B, T, D = 2, 8, 32            # batch, seq length, inDims == outDims
    key = jax.random.PRNGKey(0)
    kx, k0, k1 = jax.random.split(key, 3)

    x = jax.random.normal(kx, (B, T, D), jnp.float32)
    params = [make_block_params(k0, D), make_block_params(k1, D)]

    out = jax.block_until_ready(multi_al_seqnet_forward(x, params))
    assert out.shape == (B, D), out.shape

    ref_match = jax.block_until_ready(reference_forward_bf16(x, params))
    ref_exact = jax.block_until_ready(reference_forward(x, params))

    # Tight check vs a reference with the same bf16-operand numerics
    # (difference = EUP approximate reciprocal + accumulation order).
    err_m = float(jnp.max(jnp.abs(out - ref_match)))
    assert jnp.allclose(out, ref_match, atol=2e-2, rtol=2e-2), f"bf16-ref err {err_m}"
    # Looser semantic check vs the exact f32 PyTorch-equivalent forward
    # (difference dominated by the bf16 MXU operand casts).
    err_e = float(jnp.max(jnp.abs(out - ref_exact)))
    assert jnp.allclose(out, ref_exact, atol=1e-1, rtol=1e-1), f"f32-ref err {err_e}"

    print("KERNEL_OK")
</pallas_src>

<mosaic_0001>
module attributes {stable_mosaic.version = 11 : i64} {
  func.func @_fused_kernel(%arg0: i32, %arg1: memref<2x8x128xf32, #tpu.memory_space<vmem>>, %arg2: memref<3x128x128xbf16, #tpu.memory_space<vmem>>, %arg3: memref<1x128xf32, #tpu.memory_space<vmem>>, %arg4: memref<128x384xbf16, #tpu.memory_space<vmem>>, %arg5: memref<1x384xf32, #tpu.memory_space<vmem>>, %arg6: memref<3x128x128xbf16, #tpu.memory_space<vmem>>, %arg7: memref<1x128xf32, #tpu.memory_space<vmem>>, %arg8: memref<128x384xbf16, #tpu.memory_space<vmem>>, %arg9: memref<1x384xf32, #tpu.memory_space<vmem>>, %arg10: memref<2x128xf32, #tpu.memory_space<vmem>>) attributes {dimension_semantics = [#tpu.dimension_semantics<parallel>], iteration_bounds = array<i64: 1>, scalar_prefetch = 0 : i64, scratch_operands = 0 : i64, tpu.core_type = #tpu.core_type<tc>, window_params = [{transform_indices = @transform_0, window_bounds = array<i64: 2, 8, 128>}, {pipeline_mode = #tpu.pipeline_mode<synchronous>, transform_indices = @transform_1, window_bounds = array<i64: 3, 128, 128>}, {pipeline_mode = #tpu.pipeline_mode<synchronous>, transform_indices = @transform_2, window_bounds = array<i64: 1, 128>}, {pipeline_mode = #tpu.pipeline_mode<synchronous>, transform_indices = @transform_3, window_bounds = array<i64: 128, 384>}, {pipeline_mode = #tpu.pipeline_mode<synchronous>, transform_indices = @transform_4, window_bounds = array<i64: 1, 384>}, {pipeline_mode = #tpu.pipeline_mode<synchronous>, transform_indices = @transform_5, window_bounds = array<i64: 3, 128, 128>}, {pipeline_mode = #tpu.pipeline_mode<synchronous>, transform_indices = @transform_6, window_bounds = array<i64: 1, 128>}, {pipeline_mode = #tpu.pipeline_mode<synchronous>, transform_indices = @transform_7, window_bounds = array<i64: 128, 384>}, {pipeline_mode = #tpu.pipeline_mode<synchronous>, transform_indices = @transform_8, window_bounds = array<i64: 1, 384>}, {transform_indices = @transform_9, window_bounds = array<i64: 2, 128>}]} {
    %c0 = arith.constant 0 : index
    %c0_0 = arith.constant 0 : index
    %c0_1 = arith.constant 0 : index
    %0 = vector.load %arg1[%c0, %c0_0, %c0_1] : memref<2x8x128xf32, #tpu.memory_space<vmem>>, vector<1x8x128xf32>
    %1 = vector.shape_cast %0 : vector<1x8x128xf32> to vector<8x128xf32>
    %2 = arith.truncf %1 : vector<8x128xf32> to vector<8x128xbf16>
    %c0_2 = arith.constant 0 : index
    %c0_3 = arith.constant 0 : index
    %3 = vector.load %arg3[%c0_2, %c0_3] : memref<1x128xf32, #tpu.memory_space<vmem>>, vector<1x128xf32>
    %4 = vector.extract_strided_slice %2 {offsets = [0, 0], sizes = [6, 128], strides = [1, 1]} : vector<8x128xbf16> to vector<6x128xbf16>
    %c0_4 = arith.constant 0 : index
    %c0_5 = arith.constant 0 : index
    %c0_6 = arith.constant 0 : index
    %5 = vector.load %arg2[%c0_4, %c0_5, %c0_6] : memref<3x128x128xbf16, #tpu.memory_space<vmem>>, vector<1x128x128xbf16>
    %6 = vector.shape_cast %5 : vector<1x128x128xbf16> to vector<128x128xbf16>
    %cst = arith.constant dense<0.000000e+00> : vector<6x128xf32>
    %7 = tpu.matmul %4, %6, %cst {dimension_numbers = #tpu.dot_dimension_numbers<[1], [0], [0], [1], [0, 0, 1, 1], [], []>} : vector<6x128xbf16>, vector<128x128xbf16>, vector<6x128xf32> -> vector<6x128xf32>
    %8 = vector.broadcast %3 : vector<1x128xf32> to vector<6x128xf32>
    %9 = arith.addf %8, %7 : vector<6x128xf32>
    %10 = vector.extract_strided_slice %2 {offsets = [1, 0], sizes = [6, 128], strides = [1, 1]} : vector<8x128xbf16> to vector<6x128xbf16>
    %c1 = arith.constant 1 : index
    %c0_7 = arith.constant 0 : index
    %c0_8 = arith.constant 0 : index
    %11 = vector.load %arg2[%c1, %c0_7, %c0_8] : memref<3x128x128xbf16, #tpu.memory_space<vmem>>, vector<1x128x128xbf16>
    %12 = vector.shape_cast %11 : vector<1x128x128xbf16> to vector<128x128xbf16>
    %cst_9 = arith.constant dense<0.000000e+00> : vector<6x128xf32>
    %13 = tpu.matmul %10, %12, %cst_9 {dimension_numbers = #tpu.dot_dimension_numbers<[1], [0], [0], [1], [0, 0, 1, 1], [], []>} : vector<6x128xbf16>, vector<128x128xbf16>, vector<6x128xf32> -> vector<6x128xf32>
    %14 = arith.addf %9, %13 : vector<6x128xf32>
    %15 = vector.extract_strided_slice %2 {offsets = [2, 0], sizes = [6, 128], strides = [1, 1]} : vector<8x128xbf16> to vector<6x128xbf16>
    %c2 = arith.constant 2 : index
    %c0_10 = arith.constant 0 : index
    %c0_11 = arith.constant 0 : index
    %16 = vector.load %arg2[%c2, %c0_10, %c0_11] : memref<3x128x128xbf16, #tpu.memory_space<vmem>>, vector<1x128x128xbf16>
    %17 = vector.shape_cast %16 : vector<1x128x128xbf16> to vector<128x128xbf16>
    %cst_12 = arith.constant dense<0.000000e+00> : vector<6x128xf32>
    %18 = tpu.matmul %15, %17, %cst_12 {dimension_numbers = #tpu.dot_dimension_numbers<[1], [0], [0], [1], [0, 0, 1, 1], [], []>} : vector<6x128xbf16>, vector<128x128xbf16>, vector<6x128xf32> -> vector<6x128xf32>
    %19 = arith.addf %14, %18 : vector<6x128xf32>
    %20 = arith.truncf %19 : vector<6x128xf32> to vector<6x128xbf16>
    %c0_13 = arith.constant 0 : index
    %c0_14 = arith.constant 0 : index
    %21 = vector.load %arg4[%c0_13, %c0_14] : memref<128x384xbf16, #tpu.memory_space<vmem>>, vector<128x384xbf16>
    %cst_15 = arith.constant dense<0.000000e+00> : vector<6x384xf32>
    %22 = tpu.matmul %20, %21, %cst_15 {dimension_numbers = #tpu.dot_dimension_numbers<[1], [0], [0], [1], [0, 0, 1, 1], [], []>} : vector<6x128xbf16>, vector<128x384xbf16>, vector<6x384xf32> -> vector<6x384xf32>
    %c0_16 = arith.constant 0 : index
    %c0_17 = arith.constant 0 : index
    %23 = vector.load %arg5[%c0_16, %c0_17] : memref<1x384xf32, #tpu.memory_space<vmem>>, vector<1x384xf32>
    %24 = vector.broadcast %23 : vector<1x384xf32> to vector<6x384xf32>
    %25 = arith.addf %22, %24 : vector<6x384xf32>
    %26 = vector.extract_strided_slice %25 {offsets = [0, 0], sizes = [6, 128], strides = [1, 1]} : vector<6x384xf32> to vector<6x128xf32>
    %27 = vector.extract_strided_slice %25 {offsets = [0, 128], sizes = [6, 128], strides = [1, 1]} : vector<6x384xf32> to vector<6x128xf32>
    %28 = vector.extract_strided_slice %25 {offsets = [0, 256], sizes = [6, 128], strides = [1, 1]} : vector<6x384xf32> to vector<6x128xf32>
    %29 = arith.truncf %26 : vector<6x128xf32> to vector<6x128xbf16>
    %30 = arith.truncf %27 : vector<6x128xf32> to vector<6x128xbf16>
    %cst_18 = arith.constant dense<0.000000e+00> : vector<6x6xf32>
    %31 = tpu.matmul %29, %30, %cst_18 {dimension_numbers = #tpu.dot_dimension_numbers<[1], [1], [0], [0], [0, 0, 1, 0], [], []>} : vector<6x128xbf16>, vector<6x128xbf16>, vector<6x6xf32> -> vector<6x6xf32>
    %cst_19 = arith.constant dense<0xFF800000> : vector<6xf32>
    %32 = vector.multi_reduction <maximumf>, %31, %cst_19 [1] : vector<6x6xf32> to vector<6xf32>
    %33 = vector.shape_cast %32 : vector<6xf32> to vector<6x1xf32>
    %34 = vector.broadcast %33 : vector<6x1xf32> to vector<6x6xf32>
    %35 = arith.subf %31, %34 : vector<6x6xf32>
    %36 = math.exp %35 : vector<6x6xf32>
    %cst_20 = arith.constant dense<0.000000e+00> : vector<6xf32>
    %37 = vector.multi_reduction <add>, %36, %cst_20 [1] : vector<6x6xf32> to vector<6xf32>
    %38 = vector.shape_cast %37 : vector<6xf32> to vector<6x1xf32>
    %39 = tpu.reciprocal %38 {approx = true} : vector<6x1xf32> -> vector<6x1xf32>
    %40 = vector.broadcast %39 : vector<6x1xf32> to vector<6x6xf32>
    %41 = arith.mulf %36, %40 : vector<6x6xf32>
    %42 = arith.truncf %41 : vector<6x6xf32> to vector<6x6xbf16>
    %43 = arith.truncf %28 : vector<6x128xf32> to vector<6x128xbf16>
    %cst_21 = arith.constant dense<0.000000e+00> : vector<6x128xf32>
    %44 = tpu.matmul %42, %43, %cst_21 {dimension_numbers = #tpu.dot_dimension_numbers<[1], [0], [0], [1], [0, 0, 1, 1], [], []>} : vector<6x6xbf16>, vector<6x128xbf16>, vector<6x128xf32> -> vector<6x128xf32>
    %45 = arith.truncf %44 : vector<6x128xf32> to vector<6x128xbf16>
    %c0_22 = arith.constant 0 : index
    %c0_23 = arith.constant 0 : index
    %46 = vector.load %arg7[%c0_22, %c0_23] : memref<1x128xf32, #tpu.memory_space<vmem>>, vector<1x128xf32>
    %47 = vector.extract_strided_slice %45 {offsets = [0, 0], sizes = [4, 128], strides = [1, 1]} : vector<6x128xbf16> to vector<4x128xbf16>
    %c0_24 = arith.constant 0 : index
    %c0_25 = arith.constant 0 : index
    %c0_26 = arith.constant 0 : index
    %48 = vector.load %arg6[%c0_24, %c0_25, %c0_26] : memref<3x128x128xbf16, #tpu.memory_space<vmem>>, vector<1x128x128xbf16>
    %49 = vector.shape_cast %48 : vector<1x128x128xbf16> to vector<128x128xbf16>
    %cst_27 = arith.constant dense<0.000000e+00> : vector<4x128xf32>
    %50 = tpu.matmul %47, %49, %cst_27 {dimension_numbers = #tpu.dot_dimension_numbers<[1], [0], [0], [1], [0, 0, 1, 1], [], []>} : vector<4x128xbf16>, vector<128x128xbf16>, vector<4x128xf32> -> vector<4x128xf32>
    %51 = vector.broadcast %46 : vector<1x128xf32> to vector<4x128xf32>
    %52 = arith.addf %51, %50 : vector<4x128xf32>
    %53 = vector.extract_strided_slice %45 {offsets = [1, 0], sizes = [4, 128], strides = [1, 1]} : vector<6x128xbf16> to vector<4x128xbf16>
    %c1_28 = arith.constant 1 : index
    %c0_29 = arith.constant 0 : index
    %c0_30 = arith.constant 0 : index
    %54 = vector.load %arg6[%c1_28, %c0_29, %c0_30] : memref<3x128x128xbf16, #tpu.memory_space<vmem>>, vector<1x128x128xbf16>
    %55 = vector.shape_cast %54 : vector<1x128x128xbf16> to vector<128x128xbf16>
    %cst_31 = arith.constant dense<0.000000e+00> : vector<4x128xf32>
    %56 = tpu.matmul %53, %55, %cst_31 {dimension_numbers = #tpu.dot_dimension_numbers<[1], [0], [0], [1], [0, 0, 1, 1], [], []>} : vector<4x128xbf16>, vector<128x128xbf16>, vector<4x128xf32> -> vector<4x128xf32>
    %57 = arith.addf %52, %56 : vector<4x128xf32>
    %58 = vector.extract_strided_slice %45 {offsets = [2, 0], sizes = [4, 128], strides = [1, 1]} : vector<6x128xbf16> to vector<4x128xbf16>
    %c2_32 = arith.constant 2 : index
    %c0_33 = arith.constant 0 : index
    %c0_34 = arith.constant 0 : index
    %59 = vector.load %arg6[%c2_32, %c0_33, %c0_34] : memref<3x128x128xbf16, #tpu.memory_space<vmem>>, vector<1x128x128xbf16>
    %60 = vector.shape_cast %59 : vector<1x128x128xbf16> to vector<128x128xbf16>
    %cst_35 = arith.constant dense<0.000000e+00> : vector<4x128xf32>
    %61 = tpu.matmul %58, %60, %cst_35 {dimension_numbers = #tpu.dot_dimension_numbers<[1], [0], [0], [1], [0, 0, 1, 1], [], []>} : vector<4x128xbf16>, vector<128x128xbf16>, vector<4x128xf32> -> vector<4x128xf32>
    %62 = arith.addf %57, %61 : vector<4x128xf32>
    %63 = arith.truncf %62 : vector<4x128xf32> to vector<4x128xbf16>
    %c0_36 = arith.constant 0 : index
    %c0_37 = arith.constant 0 : index
    %64 = vector.load %arg8[%c0_36, %c0_37] : memref<128x384xbf16, #tpu.memory_space<vmem>>, vector<128x384xbf16>
    %cst_38 = arith.constant dense<0.000000e+00> : vector<4x384xf32>
    %65 = tpu.matmul %63, %64, %cst_38 {dimension_numbers = #tpu.dot_dimension_numbers<[1], [0], [0], [1], [0, 0, 1, 1], [], []>} : vector<4x128xbf16>, vector<128x384xbf16>, vector<4x384xf32> -> vector<4x384xf32>
    %c0_39 = arith.constant 0 : index
    %c0_40 = arith.constant 0 : index
    %66 = vector.load %arg9[%c0_39, %c0_40] : memref<1x384xf32, #tpu.memory_space<vmem>>, vector<1x384xf32>
    %67 = vector.broadcast %66 : vector<1x384xf32> to vector<4x384xf32>
    %68 = arith.addf %65, %67 : vector<4x384xf32>
    %69 = vector.extract_strided_slice %68 {offsets = [0, 0], sizes = [4, 128], strides = [1, 1]} : vector<4x384xf32> to vector<4x128xf32>
    %70 = vector.extract_strided_slice %68 {offsets = [0, 128], sizes = [4, 128], strides = [1, 1]} : vector<4x384xf32> to vector<4x128xf32>
    %71 = vector.extract_strided_slice %68 {offsets = [0, 256], sizes = [4, 128], strides = [1, 1]} : vector<4x384xf32> to vector<4x128xf32>
    %72 = arith.truncf %69 : vector<4x128xf32> to vector<4x128xbf16>
    %73 = arith.truncf %70 : vector<4x128xf32> to vector<4x128xbf16>
    %cst_41 = arith.constant dense<0.000000e+00> : vector<4x4xf32>
    %74 = tpu.matmul %72, %73, %cst_41 {dimension_numbers = #tpu.dot_dimension_numbers<[1], [1], [0], [0], [0, 0, 1, 0], [], []>} : vector<4x128xbf16>, vector<4x128xbf16>, vector<4x4xf32> -> vector<4x4xf32>
    %cst_42 = arith.constant dense<0xFF800000> : vector<4xf32>
    %75 = vector.multi_reduction <maximumf>, %74, %cst_42 [1] : vector<4x4xf32> to vector<4xf32>
    %76 = vector.shape_cast %75 : vector<4xf32> to vector<4x1xf32>
    %77 = vector.broadcast %76 : vector<4x1xf32> to vector<4x4xf32>
    %78 = arith.subf %74, %77 : vector<4x4xf32>
    %79 = math.exp %78 : vector<4x4xf32>
    %cst_43 = arith.constant dense<0.000000e+00> : vector<4xf32>
    %80 = vector.multi_reduction <add>, %79, %cst_43 [1] : vector<4x4xf32> to vector<4xf32>
    %81 = vector.shape_cast %80 : vector<4xf32> to vector<4x1xf32>
    %82 = tpu.reciprocal %81 {approx = true} : vector<4x1xf32> -> vector<4x1xf32>
    %83 = vector.broadcast %82 : vector<4x1xf32> to vector<4x4xf32>
    %84 = arith.mulf %79, %83 : vector<4x4xf32>
    %85 = arith.truncf %84 : vector<4x4xf32> to vector<4x4xbf16>
    %86 = arith.truncf %71 : vector<4x128xf32> to vector<4x128xbf16>
    %cst_44 = arith.constant dense<0.000000e+00> : vector<4x128xf32>
    %87 = tpu.matmul %85, %86, %cst_44 {dimension_numbers = #tpu.dot_dimension_numbers<[1], [0], [0], [1], [0, 0, 1, 1], [], []>} : vector<4x4xbf16>, vector<4x128xbf16>, vector<4x128xf32> -> vector<4x128xf32>
    %cst_45 = arith.constant dense<0.000000e+00> : vector<128xf32>
    %88 = vector.multi_reduction <add>, %87, %cst_45 [0] : vector<4x128xf32> to vector<128xf32>
    %89 = vector.shape_cast %88 : vector<128xf32> to vector<1x128xf32>
    %cst_46 = arith.constant 4.000000e+00 : f32
    %90 = vector.broadcast %cst_46 : f32 to vector<1x128xf32>
    %91 = arith.divf %89, %90 : vector<1x128xf32>
    %c1_47 = arith.constant 1 : index
    %c0_48 = arith.constant 0 : index
    %c0_49 = arith.constant 0 : index
    %92 = vector.load %arg1[%c1_47, %c0_48, %c0_49] : memref<2x8x128xf32, #tpu.memory_space<vmem>>, vector<1x8x128xf32>
    %93 = vector.shape_cast %92 : vector<1x8x128xf32> to vector<8x128xf32>
    %94 = arith.truncf %93 : vector<8x128xf32> to vector<8x128xbf16>
    %c0_50 = arith.constant 0 : index
    %c0_51 = arith.constant 0 : index
    %95 = vector.load %arg3[%c0_50, %c0_51] : memref<1x128xf32, #tpu.memory_space<vmem>>, vector<1x128xf32>
    %96 = vector.extract_strided_slice %94 {offsets = [0, 0], sizes = [6, 128], strides = [1, 1]} : vector<8x128xbf16> to vector<6x128xbf16>
    %c0_52 = arith.constant 0 : index
    %c0_53 = arith.constant 0 : index
    %c0_54 = arith.constant 0 : index
    %97 = vector.load %arg2[%c0_52, %c0_53, %c0_54] : memref<3x128x128xbf16, #tpu.memory_space<vmem>>, vector<1x128x128xbf16>
    %98 = vector.shape_cast %97 : vector<1x128x128xbf16> to vector<128x128xbf16>
    %cst_55 = arith.constant dense<0.000000e+00> : vector<6x128xf32>
    %99 = tpu.matmul %96, %98, %cst_55 {dimension_numbers = #tpu.dot_dimension_numbers<[1], [0], [0], [1], [0, 0, 1, 1], [], []>} : vector<6x128xbf16>, vector<128x128xbf16>, vector<6x128xf32> -> vector<6x128xf32>
    %100 = vector.broadcast %95 : vector<1x128xf32> to vector<6x128xf32>
    %101 = arith.addf %100, %99 : vector<6x128xf32>
    %102 = vector.extract_strided_slice %94 {offsets = [1, 0], sizes = [6, 128], strides = [1, 1]} : vector<8x128xbf16> to vector<6x128xbf16>
    %c1_56 = arith.constant 1 : index
    %c0_57 = arith.constant 0 : index
    %c0_58 = arith.constant 0 : index
    %103 = vector.load %arg2[%c1_56, %c0_57, %c0_58] : memref<3x128x128xbf16, #tpu.memory_space<vmem>>, vector<1x128x128xbf16>
    %104 = vector.shape_cast %103 : vector<1x128x128xbf16> to vector<128x128xbf16>
    %cst_59 = arith.constant dense<0.000000e+00> : vector<6x128xf32>
    %105 = tpu.matmul %102, %104, %cst_59 {dimension_numbers = #tpu.dot_dimension_numbers<[1], [0], [0], [1], [0, 0, 1, 1], [], []>} : vector<6x128xbf16>, vector<128x128xbf16>, vector<6x128xf32> -> vector<6x128xf32>
    %106 = arith.addf %101, %105 : vector<6x128xf32>
    %107 = vector.extract_strided_slice %94 {offsets = [2, 0], sizes = [6, 128], strides = [1, 1]} : vector<8x128xbf16> to vector<6x128xbf16>
    %c2_60 = arith.constant 2 : index
    %c0_61 = arith.constant 0 : index
    %c0_62 = arith.constant 0 : index
    %108 = vector.load %arg2[%c2_60, %c0_61, %c0_62] : memref<3x128x128xbf16, #tpu.memory_space<vmem>>, vector<1x128x128xbf16>
    %109 = vector.shape_cast %108 : vector<1x128x128xbf16> to vector<128x128xbf16>
    %cst_63 = arith.constant dense<0.000000e+00> : vector<6x128xf32>
    %110 = tpu.matmul %107, %109, %cst_63 {dimension_numbers = #tpu.dot_dimension_numbers<[1], [0], [0], [1], [0, 0, 1, 1], [], []>} : vector<6x128xbf16>, vector<128x128xbf16>, vector<6x128xf32> -> vector<6x128xf32>
    %111 = arith.addf %106, %110 : vector<6x128xf32>
    %112 = arith.truncf %111 : vector<6x128xf32> to vector<6x128xbf16>
    %c0_64 = arith.constant 0 : index
    %c0_65 = arith.constant 0 : index
    %113 = vector.load %arg4[%c0_64, %c0_65] : memref<128x384xbf16, #tpu.memory_space<vmem>>, vector<128x384xbf16>
    %cst_66 = arith.constant dense<0.000000e+00> : vector<6x384xf32>
    %114 = tpu.matmul %112, %113, %cst_66 {dimension_numbers = #tpu.dot_dimension_numbers<[1], [0], [0], [1], [0, 0, 1, 1], [], []>} : vector<6x128xbf16>, vector<128x384xbf16>, vector<6x384xf32> -> vector<6x384xf32>
    %c0_67 = arith.constant 0 : index
    %c0_68 = arith.constant 0 : index
    %115 = vector.load %arg5[%c0_67, %c0_68] : memref<1x384xf32, #tpu.memory_space<vmem>>, vector<1x384xf32>
    %116 = vector.broadcast %115 : vector<1x384xf32> to vector<6x384xf32>
    %117 = arith.addf %114, %116 : vector<6x384xf32>
    %118 = vector.extract_strided_slice %117 {offsets = [0, 0], sizes = [6, 128], strides = [1, 1]} : vector<6x384xf32> to vector<6x128xf32>
    %119 = vector.extract_strided_slice %117 {offsets = [0, 128], sizes = [6, 128], strides = [1, 1]} : vector<6x384xf32> to vector<6x128xf32>
    %120 = vector.extract_strided_slice %117 {offsets = [0, 256], sizes = [6, 128], strides = [1, 1]} : vector<6x384xf32> to vector<6x128xf32>
    %121 = arith.truncf %118 : vector<6x128xf32> to vector<6x128xbf16>
    %122 = arith.truncf %119 : vector<6x128xf32> to vector<6x128xbf16>
    %cst_69 = arith.constant dense<0.000000e+00> : vector<6x6xf32>
    %123 = tpu.matmul %121, %122, %cst_69 {dimension_numbers = #tpu.dot_dimension_numbers<[1], [1], [0], [0], [0, 0, 1, 0], [], []>} : vector<6x128xbf16>, vector<6x128xbf16>, vector<6x6xf32> -> vector<6x6xf32>
    %cst_70 = arith.constant dense<0xFF800000> : vector<6xf32>
    %124 = vector.multi_reduction <maximumf>, %123, %cst_70 [1] : vector<6x6xf32> to vector<6xf32>
    %125 = vector.shape_cast %124 : vector<6xf32> to vector<6x1xf32>
    %126 = vector.broadcast %125 : vector<6x1xf32> to vector<6x6xf32>
    %127 = arith.subf %123, %126 : vector<6x6xf32>
    %128 = math.exp %127 : vector<6x6xf32>
    %cst_71 = arith.constant dense<0.000000e+00> : vector<6xf32>
    %129 = vector.multi_reduction <add>, %128, %cst_71 [1] : vector<6x6xf32> to vector<6xf32>
    %130 = vector.shape_cast %129 : vector<6xf32> to vector<6x1xf32>
    %131 = tpu.reciprocal %130 {approx = true} : vector<6x1xf32> -> vector<6x1xf32>
    %132 = vector.broadcast %131 : vector<6x1xf32> to vector<6x6xf32>
    %133 = arith.mulf %128, %132 : vector<6x6xf32>
    %134 = arith.truncf %133 : vector<6x6xf32> to vector<6x6xbf16>
    %135 = arith.truncf %120 : vector<6x128xf32> to vector<6x128xbf16>
    %cst_72 = arith.constant dense<0.000000e+00> : vector<6x128xf32>
    %136 = tpu.matmul %134, %135, %cst_72 {dimension_numbers = #tpu.dot_dimension_numbers<[1], [0], [0], [1], [0, 0, 1, 1], [], []>} : vector<6x6xbf16>, vector<6x128xbf16>, vector<6x128xf32> -> vector<6x128xf32>
    %137 = arith.truncf %136 : vector<6x128xf32> to vector<6x128xbf16>
    %c0_73 = arith.constant 0 : index
    %c0_74 = arith.constant 0 : index
    %138 = vector.load %arg7[%c0_73, %c0_74] : memref<1x128xf32, #tpu.memory_space<vmem>>, vector<1x128xf32>
    %139 = vector.extract_strided_slice %137 {offsets = [0, 0], sizes = [4, 128], strides = [1, 1]} : vector<6x128xbf16> to vector<4x128xbf16>
    %c0_75 = arith.constant 0 : index
    %c0_76 = arith.constant 0 : index
    %c0_77 = arith.constant 0 : index
    %140 = vector.load %arg6[%c0_75, %c0_76, %c0_77] : memref<3x128x128xbf16, #tpu.memory_space<vmem>>, vector<1x128x128xbf16>
    %141 = vector.shape_cast %140 : vector<1x128x128xbf16> to vector<128x128xbf16>
    %cst_78 = arith.constant dense<0.000000e+00> : vector<4x128xf32>
    %142 = tpu.matmul %139, %141, %cst_78 {dimension_numbers = #tpu.dot_dimension_numbers<[1], [0], [0], [1], [0, 0, 1, 1], [], []>} : vector<4x128xbf16>, vector<128x128xbf16>, vector<4x128xf32> -> vector<4x128xf32>
    %143 = vector.broadcast %138 : vector<1x128xf32> to vector<4x128xf32>
    %144 = arith.addf %143, %142 : vector<4x128xf32>
    %145 = vector.extract_strided_slice %137 {offsets = [1, 0], sizes = [4, 128], strides = [1, 1]} : vector<6x128xbf16> to vector<4x128xbf16>
    %c1_79 = arith.constant 1 : index
    %c0_80 = arith.constant 0 : index
    %c0_81 = arith.constant 0 : index
    %146 = vector.load %arg6[%c1_79, %c0_80, %c0_81] : memref<3x128x128xbf16, #tpu.memory_space<vmem>>, vector<1x128x128xbf16>
    %147 = vector.shape_cast %146 : vector<1x128x128xbf16> to vector<128x128xbf16>
    %cst_82 = arith.constant dense<0.000000e+00> : vector<4x128xf32>
    %148 = tpu.matmul %145, %147, %cst_82 {dimension_numbers = #tpu.dot_dimension_numbers<[1], [0], [0], [1], [0, 0, 1, 1], [], []>} : vector<4x128xbf16>, vector<128x128xbf16>, vector<4x128xf32> -> vector<4x128xf32>
    %149 = arith.addf %144, %148 : vector<4x128xf32>
    %150 = vector.extract_strided_slice %137 {offsets = [2, 0], sizes = [4, 128], strides = [1, 1]} : vector<6x128xbf16> to vector<4x128xbf16>
    %c2_83 = arith.constant 2 : index
    %c0_84 = arith.constant 0 : index
    %c0_85 = arith.constant 0 : index
    %151 = vector.load %arg6[%c2_83, %c0_84, %c0_85] : memref<3x128x128xbf16, #tpu.memory_space<vmem>>, vector<1x128x128xbf16>
    %152 = vector.shape_cast %151 : vector<1x128x128xbf16> to vector<128x128xbf16>
    %cst_86 = arith.constant dense<0.000000e+00> : vector<4x128xf32>
    %153 = tpu.matmul %150, %152, %cst_86 {dimension_numbers = #tpu.dot_dimension_numbers<[1], [0], [0], [1], [0, 0, 1, 1], [], []>} : vector<4x128xbf16>, vector<128x128xbf16>, vector<4x128xf32> -> vector<4x128xf32>
    %154 = arith.addf %149, %153 : vector<4x128xf32>
    %155 = arith.truncf %154 : vector<4x128xf32> to vector<4x128xbf16>
    %c0_87 = arith.constant 0 : index
    %c0_88 = arith.constant 0 : index
    %156 = vector.load %arg8[%c0_87, %c0_88] : memref<128x384xbf16, #tpu.memory_space<vmem>>, vector<128x384xbf16>
    %cst_89 = arith.constant dense<0.000000e+00> : vector<4x384xf32>
    %157 = tpu.matmul %155, %156, %cst_89 {dimension_numbers = #tpu.dot_dimension_numbers<[1], [0], [0], [1], [0, 0, 1, 1], [], []>} : vector<4x128xbf16>, vector<128x384xbf16>, vector<4x384xf32> -> vector<4x384xf32>
    %c0_90 = arith.constant 0 : index
    %c0_91 = arith.constant 0 : index
    %158 = vector.load %arg9[%c0_90, %c0_91] : memref<1x384xf32, #tpu.memory_space<vmem>>, vector<1x384xf32>
    %159 = vector.broadcast %158 : vector<1x384xf32> to vector<4x384xf32>
    %160 = arith.addf %157, %159 : vector<4x384xf32>
    %161 = vector.extract_strided_slice %160 {offsets = [0, 0], sizes = [4, 128], strides = [1, 1]} : vector<4x384xf32> to vector<4x128xf32>
    %162 = vector.extract_strided_slice %160 {offsets = [0, 128], sizes = [4, 128], strides = [1, 1]} : vector<4x384xf32> to vector<4x128xf32>
    %163 = vector.extract_strided_slice %160 {offsets = [0, 256], sizes = [4, 128], strides = [1, 1]} : vector<4x384xf32> to vector<4x128xf32>
    %164 = arith.truncf %161 : vector<4x128xf32> to vector<4x128xbf16>
    %165 = arith.truncf %162 : vector<4x128xf32> to vector<4x128xbf16>
    %cst_92 = arith.constant dense<0.000000e+00> : vector<4x4xf32>
    %166 = tpu.matmul %164, %165, %cst_92 {dimension_numbers = #tpu.dot_dimension_numbers<[1], [1], [0], [0], [0, 0, 1, 0], [], []>} : vector<4x128xbf16>, vector<4x128xbf16>, vector<4x4xf32> -> vector<4x4xf32>
    %cst_93 = arith.constant dense<0xFF800000> : vector<4xf32>
    %167 = vector.multi_reduction <maximumf>, %166, %cst_93 [1] : vector<4x4xf32> to vector<4xf32>
    %168 = vector.shape_cast %167 : vector<4xf32> to vector<4x1xf32>
    %169 = vector.broadcast %168 : vector<4x1xf32> to vector<4x4xf32>
    %170 = arith.subf %166, %169 : vector<4x4xf32>
    %171 = math.exp %170 : vector<4x4xf32>
    %cst_94 = arith.constant dense<0.000000e+00> : vector<4xf32>
    %172 = vector.multi_reduction <add>, %171, %cst_94 [1] : vector<4x4xf32> to vector<4xf32>
    %173 = vector.shape_cast %172 : vector<4xf32> to vector<4x1xf32>
    %174 = tpu.reciprocal %173 {approx = true} : vector<4x1xf32> -> vector<4x1xf32>
    %175 = vector.broadcast %174 : vector<4x1xf32> to vector<4x4xf32>
    %176 = arith.mulf %171, %175 : vector<4x4xf32>
    %177 = arith.truncf %176 : vector<4x4xf32> to vector<4x4xbf16>
    %178 = arith.truncf %163 : vector<4x128xf32> to vector<4x128xbf16>
    %cst_95 = arith.constant dense<0.000000e+00> : vector<4x128xf32>
    %179 = tpu.matmul %177, %178, %cst_95 {dimension_numbers = #tpu.dot_dimension_numbers<[1], [0], [0], [1], [0, 0, 1, 1], [], []>} : vector<4x4xbf16>, vector<4x128xbf16>, vector<4x128xf32> -> vector<4x128xf32>
    %cst_96 = arith.constant dense<0.000000e+00> : vector<128xf32>
    %180 = vector.multi_reduction <add>, %179, %cst_96 [0] : vector<4x128xf32> to vector<128xf32>
    %181 = vector.shape_cast %180 : vector<128xf32> to vector<1x128xf32>
    %cst_97 = arith.constant 4.000000e+00 : f32
    %182 = vector.broadcast %cst_97 : f32 to vector<1x128xf32>
    %183 = arith.divf %181, %182 : vector<1x128xf32>
    %184 = tpu.concatenate %91, %183 in 0 : vector<1x128xf32>, vector<1x128xf32> -> vector<2x128xf32>
    %c0_98 = arith.constant 0 : index
    %c0_99 = arith.constant 0 : index
    %185 = vector.load %arg10[%c0_98, %c0_99] : memref<2x128xf32, #tpu.memory_space<vmem>>, vector<2x128xf32>
    tpu.vector_store %arg10[%c0_98, %c0_99], %184 {strides = array<i32>} : memref<2x128xf32, #tpu.memory_space<vmem>>, vector<2x128xf32>,
    return
  }
  func.func @transform_0(%arg0: i32) -> (i32, i32, i32) {
    %c0_i32 = arith.constant 0 : i32
    %c0_i32_0 = arith.constant 0 : i32
    %c0_i32_1 = arith.constant 0 : i32
    return %arg0, %c0_i32, %c0_i32_0 : i32, i32, i32
  }
  func.func @transform_1(%arg0: i32) -> (i32, i32, i32) {
    %c0_i32 = arith.constant 0 : i32
    %c0_i32_0 = arith.constant 0 : i32
    %c0_i32_1 = arith.constant 0 : i32
    %c0_i32_2 = arith.constant 0 : i32
    return %c0_i32, %c0_i32_0, %c0_i32_1 : i32, i32, i32
  }
  func.func @transform_2(%arg0: i32) -> (i32, i32) {
    %c0_i32 = arith.constant 0 : i32
    %c0_i32_0 = arith.constant 0 : i32
    %c0_i32_1 = arith.constant 0 : i32
    return %c0_i32, %c0_i32_0 : i32, i32
  }
  func.func @transform_3(%arg0: i32) -> (i32, i32) {
    %c0_i32 = arith.constant 0 : i32
    %c0_i32_0 = arith.constant 0 : i32
    %c0_i32_1 = arith.constant 0 : i32
    return %c0_i32, %c0_i32_0 : i32, i32
  }
  func.func @transform_4(%arg0: i32) -> (i32, i32) {
    %c0_i32 = arith.constant 0 : i32
    %c0_i32_0 = arith.constant 0 : i32
    %c0_i32_1 = arith.constant 0 : i32
    return %c0_i32, %c0_i32_0 : i32, i32
  }
  func.func @transform_5(%arg0: i32) -> (i32, i32, i32) {
    %c0_i32 = arith.constant 0 : i32
    %c0_i32_0 = arith.constant 0 : i32
    %c0_i32_1 = arith.constant 0 : i32
    %c0_i32_2 = arith.constant 0 : i32
    return %c0_i32, %c0_i32_0, %c0_i32_1 : i32, i32, i32
  }
  func.func @transform_6(%arg0: i32) -> (i32, i32) {
    %c0_i32 = arith.constant 0 : i32
    %c0_i32_0 = arith.constant 0 : i32
    %c0_i32_1 = arith.constant 0 : i32
    return %c0_i32, %c0_i32_0 : i32, i32
  }
  func.func @transform_7(%arg0: i32) -> (i32, i32) {
    %c0_i32 = arith.constant 0 : i32
    %c0_i32_0 = arith.constant 0 : i32
    %c0_i32_1 = arith.constant 0 : i32
    return %c0_i32, %c0_i32_0 : i32, i32
  }
  func.func @transform_8(%arg0: i32) -> (i32, i32) {
    %c0_i32 = arith.constant 0 : i32
    %c0_i32_0 = arith.constant 0 : i32
    %c0_i32_1 = arith.constant 0 : i32
    return %c0_i32, %c0_i32_0 : i32, i32
  }
  func.func @transform_9(%arg0: i32) -> (i32, i32) {
    %c0_i32 = arith.constant 0 : i32
    %c0_i32_0 = arith.constant 0 : i32
    return %arg0, %c0_i32 : i32, i32
  }
}

module attributes {stable_mosaic.version = 11 : i64} {
  func.func @_fused_kernel(%arg0: i32, %arg1: memref<2x8x128xf32, #tpu.memory_space<vmem>>, %arg2: memref<3x128x128xbf16, #tpu.memory_space<vmem>>, %arg3: memref<1x128xf32, #tpu.memory_space<vmem>>, %arg4: memref<128x384xbf16, #tpu.memory_space<vmem>>, %arg5: memref<1x384xf32, #tpu.memory_space<vmem>>, %arg6: memref<3x128x128xbf16, #tpu.memory_space<vmem>>, %arg7: memref<1x128xf32, #tpu.memory_space<vmem>>, %arg8: memref<128x384xbf16, #tpu.memory_space<vmem>>, %arg9: memref<1x384xf32, #tpu.memory_space<vmem>>, %arg10: memref<2x128xf32, #tpu.memory_space<vmem>>) attributes {dimension_semantics = [#tpu.dimension_semantics<parallel>], iteration_bounds = array<i64: 1>, scalar_prefetch = 0 : i64, scratch_operands = 0 : i64, tpu.core_type = #tpu.core_type<tc>, window_params = [{transform_indices = @transform_0, window_bounds = array<i64: 2, 8, 128>}, {pipeline_mode = #tpu.pipeline_mode<synchronous>, transform_indices = @transform_1, window_bounds = array<i64: 3, 128, 128>}, {pipeline_mode = #tpu.pipeline_mode<synchronous>, transform_indices = @transform_2, window_bounds = array<i64: 1, 128>}, {pipeline_mode = #tpu.pipeline_mode<synchronous>, transform_indices = @transform_3, window_bounds = array<i64: 128, 384>}, {pipeline_mode = #tpu.pipeline_mode<synchronous>, transform_indices = @transform_4, window_bounds = array<i64: 1, 384>}, {pipeline_mode = #tpu.pipeline_mode<synchronous>, transform_indices = @transform_5, window_bounds = array<i64: 3, 128, 128>}, {pipeline_mode = #tpu.pipeline_mode<synchronous>, transform_indices = @transform_6, window_bounds = array<i64: 1, 128>}, {pipeline_mode = #tpu.pipeline_mode<synchronous>, transform_indices = @transform_7, window_bounds = array<i64: 128, 384>}, {pipeline_mode = #tpu.pipeline_mode<synchronous>, transform_indices = @transform_8, window_bounds = array<i64: 1, 384>}, {transform_indices = @transform_9, window_bounds = array<i64: 2, 128>}]} {
    %c0 = arith.constant 0 : index
    %c0_0 = arith.constant 0 : index
    %c0_1 = arith.constant 0 : index
    %0 = vector.load %arg1[%c0, %c0_0, %c0_1] : memref<2x8x128xf32, #tpu.memory_space<vmem>>, vector<1x8x128xf32>
    %1 = vector.shape_cast %0 : vector<1x8x128xf32> to vector<8x128xf32>
    %2 = arith.truncf %1 : vector<8x128xf32> to vector<8x128xbf16>
    %c0_2 = arith.constant 0 : index
    %c0_3 = arith.constant 0 : index
    %3 = vector.load %arg3[%c0_2, %c0_3] : memref<1x128xf32, #tpu.memory_space<vmem>>, vector<1x128xf32>
    %4 = vector.extract_strided_slice %2 {offsets = [0, 0], sizes = [6, 128], strides = [1, 1]} : vector<8x128xbf16> to vector<6x128xbf16>
    %c0_4 = arith.constant 0 : index
    %c0_5 = arith.constant 0 : index
    %c0_6 = arith.constant 0 : index
    %5 = vector.load %arg2[%c0_4, %c0_5, %c0_6] : memref<3x128x128xbf16, #tpu.memory_space<vmem>>, vector<1x128x128xbf16>
    %6 = vector.shape_cast %5 : vector<1x128x128xbf16> to vector<128x128xbf16>
    %cst = arith.constant dense<0.000000e+00> : vector<6x128xf32>
    %7 = tpu.matmul %4, %6, %cst {dimension_numbers = #tpu.dot_dimension_numbers<[1], [0], [0], [1], [0, 0, 1, 1], [], []>} : vector<6x128xbf16>, vector<128x128xbf16>, vector<6x128xf32> -> vector<6x128xf32>
    %8 = vector.broadcast %3 : vector<1x128xf32> to vector<6x128xf32>
    %9 = arith.addf %8, %7 : vector<6x128xf32>
    %10 = vector.extract_strided_slice %2 {offsets = [1, 0], sizes = [6, 128], strides = [1, 1]} : vector<8x128xbf16> to vector<6x128xbf16>
    %c1 = arith.constant 1 : index
    %c0_7 = arith.constant 0 : index
    %c0_8 = arith.constant 0 : index
    %11 = vector.load %arg2[%c1, %c0_7, %c0_8] : memref<3x128x128xbf16, #tpu.memory_space<vmem>>, vector<1x128x128xbf16>
    %12 = vector.shape_cast %11 : vector<1x128x128xbf16> to vector<128x128xbf16>
    %cst_9 = arith.constant dense<0.000000e+00> : vector<6x128xf32>
    %13 = tpu.matmul %10, %12, %cst_9 {dimension_numbers = #tpu.dot_dimension_numbers<[1], [0], [0], [1], [0, 0, 1, 1], [], []>} : vector<6x128xbf16>, vector<128x128xbf16>, vector<6x128xf32> -> vector<6x128xf32>
    %14 = arith.addf %9, %13 : vector<6x128xf32>
    %15 = vector.extract_strided_slice %2 {offsets = [2, 0], sizes = [6, 128], strides = [1, 1]} : vector<8x128xbf16> to vector<6x128xbf16>
    %c2 = arith.constant 2 : index
    %c0_10 = arith.constant 0 : index
    %c0_11 = arith.constant 0 : index
    %16 = vector.load %arg2[%c2, %c0_10, %c0_11] : memref<3x128x128xbf16, #tpu.memory_space<vmem>>, vector<1x128x128xbf16>
    %17 = vector.shape_cast %16 : vector<1x128x128xbf16> to vector<128x128xbf16>
    %cst_12 = arith.constant dense<0.000000e+00> : vector<6x128xf32>
    %18 = tpu.matmul %15, %17, %cst_12 {dimension_numbers = #tpu.dot_dimension_numbers<[1], [0], [0], [1], [0, 0, 1, 1], [], []>} : vector<6x128xbf16>, vector<128x128xbf16>, vector<6x128xf32> -> vector<6x128xf32>
    %19 = arith.addf %14, %18 : vector<6x128xf32>
    %20 = arith.truncf %19 : vector<6x128xf32> to vector<6x128xbf16>
    %c0_13 = arith.constant 0 : index
    %c0_14 = arith.constant 0 : index
    %21 = vector.load %arg4[%c0_13, %c0_14] : memref<128x384xbf16, #tpu.memory_space<vmem>>, vector<128x384xbf16>
    %cst_15 = arith.constant dense<0.000000e+00> : vector<6x384xf32>
    %22 = tpu.matmul %20, %21, %cst_15 {dimension_numbers = #tpu.dot_dimension_numbers<[1], [0], [0], [1], [0, 0, 1, 1], [], []>} : vector<6x128xbf16>, vector<128x384xbf16>, vector<6x384xf32> -> vector<6x384xf32>
    %c0_16 = arith.constant 0 : index
    %c0_17 = arith.constant 0 : index
    %23 = vector.load %arg5[%c0_16, %c0_17] : memref<1x384xf32, #tpu.memory_space<vmem>>, vector<1x384xf32>
    %24 = vector.broadcast %23 : vector<1x384xf32> to vector<6x384xf32>
    %25 = arith.addf %22, %24 : vector<6x384xf32>
    %26 = vector.extract_strided_slice %25 {offsets = [0, 0], sizes = [6, 128], strides = [1, 1]} : vector<6x384xf32> to vector<6x128xf32>
    %27 = vector.extract_strided_slice %25 {offsets = [0, 128], sizes = [6, 128], strides = [1, 1]} : vector<6x384xf32> to vector<6x128xf32>
    %28 = vector.extract_strided_slice %25 {offsets = [0, 256], sizes = [6, 128], strides = [1, 1]} : vector<6x384xf32> to vector<6x128xf32>
    %29 = arith.truncf %26 : vector<6x128xf32> to vector<6x128xbf16>
    %30 = arith.truncf %27 : vector<6x128xf32> to vector<6x128xbf16>
    %cst_18 = arith.constant dense<0.000000e+00> : vector<6x6xf32>
    %31 = tpu.matmul %29, %30, %cst_18 {dimension_numbers = #tpu.dot_dimension_numbers<[1], [1], [0], [0], [0, 0, 1, 0], [], []>} : vector<6x128xbf16>, vector<6x128xbf16>, vector<6x6xf32> -> vector<6x6xf32>
    %cst_19 = arith.constant dense<0xFF800000> : vector<6xf32>
    %32 = vector.multi_reduction <maximumf>, %31, %cst_19 [1] : vector<6x6xf32> to vector<6xf32>
    %33 = vector.shape_cast %32 : vector<6xf32> to vector<6x1xf32>
    %34 = vector.broadcast %33 : vector<6x1xf32> to vector<6x6xf32>
    %35 = arith.subf %31, %34 : vector<6x6xf32>
    %36 = math.exp %35 : vector<6x6xf32>
    %cst_20 = arith.constant dense<0.000000e+00> : vector<6xf32>
    %37 = vector.multi_reduction <add>, %36, %cst_20 [1] : vector<6x6xf32> to vector<6xf32>
    %38 = vector.shape_cast %37 : vector<6xf32> to vector<6x1xf32>
    %39 = tpu.reciprocal %38 {approx = true} : vector<6x1xf32> -> vector<6x1xf32>
    %40 = vector.broadcast %39 : vector<6x1xf32> to vector<6x6xf32>
    %41 = arith.mulf %36, %40 : vector<6x6xf32>
    %42 = arith.truncf %41 : vector<6x6xf32> to vector<6x6xbf16>
    %43 = arith.truncf %28 : vector<6x128xf32> to vector<6x128xbf16>
    %cst_21 = arith.constant dense<0.000000e+00> : vector<6x128xf32>
    %44 = tpu.matmul %42, %43, %cst_21 {dimension_numbers = #tpu.dot_dimension_numbers<[1], [0], [0], [1], [0, 0, 1, 1], [], []>} : vector<6x6xbf16>, vector<6x128xbf16>, vector<6x128xf32> -> vector<6x128xf32>
    %45 = arith.truncf %44 : vector<6x128xf32> to vector<6x128xbf16>
    %c0_22 = arith.constant 0 : index
    %c0_23 = arith.constant 0 : index
    %46 = vector.load %arg7[%c0_22, %c0_23] : memref<1x128xf32, #tpu.memory_space<vmem>>, vector<1x128xf32>
    %47 = vector.extract_strided_slice %45 {offsets = [0, 0], sizes = [4, 128], strides = [1, 1]} : vector<6x128xbf16> to vector<4x128xbf16>
    %c0_24 = arith.constant 0 : index
    %c0_25 = arith.constant 0 : index
    %c0_26 = arith.constant 0 : index
    %48 = vector.load %arg6[%c0_24, %c0_25, %c0_26] : memref<3x128x128xbf16, #tpu.memory_space<vmem>>, vector<1x128x128xbf16>
    %49 = vector.shape_cast %48 : vector<1x128x128xbf16> to vector<128x128xbf16>
    %cst_27 = arith.constant dense<0.000000e+00> : vector<4x128xf32>
    %50 = tpu.matmul %47, %49, %cst_27 {dimension_numbers = #tpu.dot_dimension_numbers<[1], [0], [0], [1], [0, 0, 1, 1], [], []>} : vector<4x128xbf16>, vector<128x128xbf16>, vector<4x128xf32> -> vector<4x128xf32>
    %51 = vector.broadcast %46 : vector<1x128xf32> to vector<4x128xf32>
    %52 = arith.addf %51, %50 : vector<4x128xf32>
    %53 = vector.extract_strided_slice %45 {offsets = [1, 0], sizes = [4, 128], strides = [1, 1]} : vector<6x128xbf16> to vector<4x128xbf16>
    %c1_28 = arith.constant 1 : index
    %c0_29 = arith.constant 0 : index
    %c0_30 = arith.constant 0 : index
    %54 = vector.load %arg6[%c1_28, %c0_29, %c0_30] : memref<3x128x128xbf16, #tpu.memory_space<vmem>>, vector<1x128x128xbf16>
    %55 = vector.shape_cast %54 : vector<1x128x128xbf16> to vector<128x128xbf16>
    %cst_31 = arith.constant dense<0.000000e+00> : vector<4x128xf32>
    %56 = tpu.matmul %53, %55, %cst_31 {dimension_numbers = #tpu.dot_dimension_numbers<[1], [0], [0], [1], [0, 0, 1, 1], [], []>} : vector<4x128xbf16>, vector<128x128xbf16>, vector<4x128xf32> -> vector<4x128xf32>
    %57 = arith.addf %52, %56 : vector<4x128xf32>
    %58 = vector.extract_strided_slice %45 {offsets = [2, 0], sizes = [4, 128], strides = [1, 1]} : vector<6x128xbf16> to vector<4x128xbf16>
    %c2_32 = arith.constant 2 : index
    %c0_33 = arith.constant 0 : index
    %c0_34 = arith.constant 0 : index
    %59 = vector.load %arg6[%c2_32, %c0_33, %c0_34] : memref<3x128x128xbf16, #tpu.memory_space<vmem>>, vector<1x128x128xbf16>
    %60 = vector.shape_cast %59 : vector<1x128x128xbf16> to vector<128x128xbf16>
    %cst_35 = arith.constant dense<0.000000e+00> : vector<4x128xf32>
    %61 = tpu.matmul %58, %60, %cst_35 {dimension_numbers = #tpu.dot_dimension_numbers<[1], [0], [0], [1], [0, 0, 1, 1], [], []>} : vector<4x128xbf16>, vector<128x128xbf16>, vector<4x128xf32> -> vector<4x128xf32>
    %62 = arith.addf %57, %61 : vector<4x128xf32>
    %63 = arith.truncf %62 : vector<4x128xf32> to vector<4x128xbf16>
    %c0_36 = arith.constant 0 : index
    %c0_37 = arith.constant 0 : index
    %64 = vector.load %arg8[%c0_36, %c0_37] : memref<128x384xbf16, #tpu.memory_space<vmem>>, vector<128x384xbf16>
    %cst_38 = arith.constant dense<0.000000e+00> : vector<4x384xf32>
    %65 = tpu.matmul %63, %64, %cst_38 {dimension_numbers = #tpu.dot_dimension_numbers<[1], [0], [0], [1], [0, 0, 1, 1], [], []>} : vector<4x128xbf16>, vector<128x384xbf16>, vector<4x384xf32> -> vector<4x384xf32>
    %c0_39 = arith.constant 0 : index
    %c0_40 = arith.constant 0 : index
    %66 = vector.load %arg9[%c0_39, %c0_40] : memref<1x384xf32, #tpu.memory_space<vmem>>, vector<1x384xf32>
    %67 = vector.broadcast %66 : vector<1x384xf32> to vector<4x384xf32>
    %68 = arith.addf %65, %67 : vector<4x384xf32>
    %69 = vector.extract_strided_slice %68 {offsets = [0, 0], sizes = [4, 128], strides = [1, 1]} : vector<4x384xf32> to vector<4x128xf32>
    %70 = vector.extract_strided_slice %68 {offsets = [0, 128], sizes = [4, 128], strides = [1, 1]} : vector<4x384xf32> to vector<4x128xf32>
    %71 = vector.extract_strided_slice %68 {offsets = [0, 256], sizes = [4, 128], strides = [1, 1]} : vector<4x384xf32> to vector<4x128xf32>
    %72 = arith.truncf %69 : vector<4x128xf32> to vector<4x128xbf16>
    %73 = arith.truncf %70 : vector<4x128xf32> to vector<4x128xbf16>
    %cst_41 = arith.constant dense<0.000000e+00> : vector<4x4xf32>
    %74 = tpu.matmul %72, %73, %cst_41 {dimension_numbers = #tpu.dot_dimension_numbers<[1], [1], [0], [0], [0, 0, 1, 0], [], []>} : vector<4x128xbf16>, vector<4x128xbf16>, vector<4x4xf32> -> vector<4x4xf32>
    %cst_42 = arith.constant dense<0xFF800000> : vector<4xf32>
    %75 = vector.multi_reduction <maximumf>, %74, %cst_42 [1] : vector<4x4xf32> to vector<4xf32>
    %76 = vector.shape_cast %75 : vector<4xf32> to vector<4x1xf32>
    %77 = vector.broadcast %76 : vector<4x1xf32> to vector<4x4xf32>
    %78 = arith.subf %74, %77 : vector<4x4xf32>
    %79 = math.exp %78 : vector<4x4xf32>
    %cst_43 = arith.constant dense<0.000000e+00> : vector<4xf32>
    %80 = vector.multi_reduction <add>, %79, %cst_43 [1] : vector<4x4xf32> to vector<4xf32>
    %81 = vector.shape_cast %80 : vector<4xf32> to vector<4x1xf32>
    %82 = tpu.reciprocal %81 {approx = true} : vector<4x1xf32> -> vector<4x1xf32>
    %83 = vector.broadcast %82 : vector<4x1xf32> to vector<4x4xf32>
    %84 = arith.mulf %79, %83 : vector<4x4xf32>
    %85 = arith.truncf %84 : vector<4x4xf32> to vector<4x4xbf16>
    %86 = arith.truncf %71 : vector<4x128xf32> to vector<4x128xbf16>
    %cst_44 = arith.constant dense<0.000000e+00> : vector<4x128xf32>
    %87 = tpu.matmul %85, %86, %cst_44 {dimension_numbers = #tpu.dot_dimension_numbers<[1], [0], [0], [1], [0, 0, 1, 1], [], []>} : vector<4x4xbf16>, vector<4x128xbf16>, vector<4x128xf32> -> vector<4x128xf32>
    %cst_45 = arith.constant dense<0.000000e+00> : vector<128xf32>
    %88 = vector.multi_reduction <add>, %87, %cst_45 [0] : vector<4x128xf32> to vector<128xf32>
    %89 = vector.shape_cast %88 : vector<128xf32> to vector<1x128xf32>
    %cst_46 = arith.constant 4.000000e+00 : f32
    %90 = vector.broadcast %cst_46 : f32 to vector<1x128xf32>
    %91 = arith.divf %89, %90 : vector<1x128xf32>
    %c1_47 = arith.constant 1 : index
    %c0_48 = arith.constant 0 : index
    %c0_49 = arith.constant 0 : index
    %92 = vector.load %arg1[%c1_47, %c0_48, %c0_49] : memref<2x8x128xf32, #tpu.memory_space<vmem>>, vector<1x8x128xf32>
    %93 = vector.shape_cast %92 : vector<1x8x128xf32> to vector<8x128xf32>
    %94 = arith.truncf %93 : vector<8x128xf32> to vector<8x128xbf16>
    %c0_50 = arith.constant 0 : index
    %c0_51 = arith.constant 0 : index
    %95 = vector.load %arg3[%c0_50, %c0_51] : memref<1x128xf32, #tpu.memory_space<vmem>>, vector<1x128xf32>
    %96 = vector.extract_strided_slice %94 {offsets = [0, 0], sizes = [6, 128], strides = [1, 1]} : vector<8x128xbf16> to vector<6x128xbf16>
    %c0_52 = arith.constant 0 : index
    %c0_53 = arith.constant 0 : index
    %c0_54 = arith.constant 0 : index
    %97 = vector.load %arg2[%c0_52, %c0_53, %c0_54] : memref<3x128x128xbf16, #tpu.memory_space<vmem>>, vector<1x128x128xbf16>
    %98 = vector.shape_cast %97 : vector<1x128x128xbf16> to vector<128x128xbf16>
    %cst_55 = arith.constant dense<0.000000e+00> : vector<6x128xf32>
    %99 = tpu.matmul %96, %98, %cst_55 {dimension_numbers = #tpu.dot_dimension_numbers<[1], [0], [0], [1], [0, 0, 1, 1], [], []>} : vector<6x128xbf16>, vector<128x128xbf16>, vector<6x128xf32> -> vector<6x128xf32>
    %100 = vector.broadcast %95 : vector<1x128xf32> to vector<6x128xf32>
    %101 = arith.addf %100, %99 : vector<6x128xf32>
    %102 = vector.extract_strided_slice %94 {offsets = [1, 0], sizes = [6, 128], strides = [1, 1]} : vector<8x128xbf16> to vector<6x128xbf16>
    %c1_56 = arith.constant 1 : index
    %c0_57 = arith.constant 0 : index
    %c0_58 = arith.constant 0 : index
    %103 = vector.load %arg2[%c1_56, %c0_57, %c0_58] : memref<3x128x128xbf16, #tpu.memory_space<vmem>>, vector<1x128x128xbf16>
    %104 = vector.shape_cast %103 : vector<1x128x128xbf16> to vector<128x128xbf16>
    %cst_59 = arith.constant dense<0.000000e+00> : vector<6x128xf32>
    %105 = tpu.matmul %102, %104, %cst_59 {dimension_numbers = #tpu.dot_dimension_numbers<[1], [0], [0], [1], [0, 0, 1, 1], [], []>} : vector<6x128xbf16>, vector<128x128xbf16>, vector<6x128xf32> -> vector<6x128xf32>
    %106 = arith.addf %101, %105 : vector<6x128xf32>
    %107 = vector.extract_strided_slice %94 {offsets = [2, 0], sizes = [6, 128], strides = [1, 1]} : vector<8x128xbf16> to vector<6x128xbf16>
    %c2_60 = arith.constant 2 : index
    %c0_61 = arith.constant 0 : index
    %c0_62 = arith.constant 0 : index
    %108 = vector.load %arg2[%c2_60, %c0_61, %c0_62] : memref<3x128x128xbf16, #tpu.memory_space<vmem>>, vector<1x128x128xbf16>
    %109 = vector.shape_cast %108 : vector<1x128x128xbf16> to vector<128x128xbf16>
    %cst_63 = arith.constant dense<0.000000e+00> : vector<6x128xf32>
    %110 = tpu.matmul %107, %109, %cst_63 {dimension_numbers = #tpu.dot_dimension_numbers<[1], [0], [0], [1], [0, 0, 1, 1], [], []>} : vector<6x128xbf16>, vector<128x128xbf16>, vector<6x128xf32> -> vector<6x128xf32>
    %111 = arith.addf %106, %110 : vector<6x128xf32>
    %112 = arith.truncf %111 : vector<6x128xf32> to vector<6x128xbf16>
    %c0_64 = arith.constant 0 : index
    %c0_65 = arith.constant 0 : index
    %113 = vector.load %arg4[%c0_64, %c0_65] : memref<128x384xbf16, #tpu.memory_space<vmem>>, vector<128x384xbf16>
    %cst_66 = arith.constant dense<0.000000e+00> : vector<6x384xf32>
    %114 = tpu.matmul %112, %113, %cst_66 {dimension_numbers = #tpu.dot_dimension_numbers<[1], [0], [0], [1], [0, 0, 1, 1], [], []>} : vector<6x128xbf16>, vector<128x384xbf16>, vector<6x384xf32> -> vector<6x384xf32>
    %c0_67 = arith.constant 0 : index
    %c0_68 = arith.constant 0 : index
    %115 = vector.load %arg5[%c0_67, %c0_68] : memref<1x384xf32, #tpu.memory_space<vmem>>, vector<1x384xf32>
    %116 = vector.broadcast %115 : vector<1x384xf32> to vector<6x384xf32>
    %117 = arith.addf %114, %116 : vector<6x384xf32>
    %118 = vector.extract_strided_slice %117 {offsets = [0, 0], sizes = [6, 128], strides = [1, 1]} : vector<6x384xf32> to vector<6x128xf32>
    %119 = vector.extract_strided_slice %117 {offsets = [0, 128], sizes = [6, 128], strides = [1, 1]} : vector<6x384xf32> to vector<6x128xf32>
    %120 = vector.extract_strided_slice %117 {offsets = [0, 256], sizes = [6, 128], strides = [1, 1]} : vector<6x384xf32> to vector<6x128xf32>
    %121 = arith.truncf %118 : vector<6x128xf32> to vector<6x128xbf16>
    %122 = arith.truncf %119 : vector<6x128xf32> to vector<6x128xbf16>
    %cst_69 = arith.constant dense<0.000000e+00> : vector<6x6xf32>
    %123 = tpu.matmul %121, %122, %cst_69 {dimension_numbers = #tpu.dot_dimension_numbers<[1], [1], [0], [0], [0, 0, 1, 0], [], []>} : vector<6x128xbf16>, vector<6x128xbf16>, vector<6x6xf32> -> vector<6x6xf32>
    %cst_70 = arith.constant dense<0xFF800000> : vector<6xf32>
    %124 = vector.multi_reduction <maximumf>, %123, %cst_70 [1] : vector<6x6xf32> to vector<6xf32>
    %125 = vector.shape_cast %124 : vector<6xf32> to vector<6x1xf32>
    %126 = vector.broadcast %125 : vector<6x1xf32> to vector<6x6xf32>
    %127 = arith.subf %123, %126 : vector<6x6xf32>
    %128 = math.exp %127 : vector<6x6xf32>
    %cst_71 = arith.constant dense<0.000000e+00> : vector<6xf32>
    %129 = vector.multi_reduction <add>, %128, %cst_71 [1] : vector<6x6xf32> to vector<6xf32>
    %130 = vector.shape_cast %129 : vector<6xf32> to vector<6x1xf32>
    %131 = tpu.reciprocal %130 {approx = true} : vector<6x1xf32> -> vector<6x1xf32>
    %132 = vector.broadcast %131 : vector<6x1xf32> to vector<6x6xf32>
    %133 = arith.mulf %128, %132 : vector<6x6xf32>
    %134 = arith.truncf %133 : vector<6x6xf32> to vector<6x6xbf16>
    %135 = arith.truncf %120 : vector<6x128xf32> to vector<6x128xbf16>
    %cst_72 = arith.constant dense<0.000000e+00> : vector<6x128xf32>
    %136 = tpu.matmul %134, %135, %cst_72 {dimension_numbers = #tpu.dot_dimension_numbers<[1], [0], [0], [1], [0, 0, 1, 1], [], []>} : vector<6x6xbf16>, vector<6x128xbf16>, vector<6x128xf32> -> vector<6x128xf32>
    %137 = arith.truncf %136 : vector<6x128xf32> to vector<6x128xbf16>
    %c0_73 = arith.constant 0 : index
    %c0_74 = arith.constant 0 : index
    %138 = vector.load %arg7[%c0_73, %c0_74] : memref<1x128xf32, #tpu.memory_space<vmem>>, vector<1x128xf32>
    %139 = vector.extract_strided_slice %137 {offsets = [0, 0], sizes = [4, 128], strides = [1, 1]} : vector<6x128xbf16> to vector<4x128xbf16>
    %c0_75 = arith.constant 0 : index
    %c0_76 = arith.constant 0 : index
    %c0_77 = arith.constant 0 : index
    %140 = vector.load %arg6[%c0_75, %c0_76, %c0_77] : memref<3x128x128xbf16, #tpu.memory_space<vmem>>, vector<1x128x128xbf16>
    %141 = vector.shape_cast %140 : vector<1x128x128xbf16> to vector<128x128xbf16>
    %cst_78 = arith.constant dense<0.000000e+00> : vector<4x128xf32>
    %142 = tpu.matmul %139, %141, %cst_78 {dimension_numbers = #tpu.dot_dimension_numbers<[1], [0], [0], [1], [0, 0, 1, 1], [], []>} : vector<4x128xbf16>, vector<128x128xbf16>, vector<4x128xf32> -> vector<4x128xf32>
    %143 = vector.broadcast %138 : vector<1x128xf32> to vector<4x128xf32>
    %144 = arith.addf %143, %142 : vector<4x128xf32>
    %145 = vector.extract_strided_slice %137 {offsets = [1, 0], sizes = [4, 128], strides = [1, 1]} : vector<6x128xbf16> to vector<4x128xbf16>
    %c1_79 = arith.constant 1 : index
    %c0_80 = arith.constant 0 : index
    %c0_81 = arith.constant 0 : index
    %146 = vector.load %arg6[%c1_79, %c0_80, %c0_81] : memref<3x128x128xbf16, #tpu.memory_space<vmem>>, vector<1x128x128xbf16>
    %147 = vector.shape_cast %146 : vector<1x128x128xbf16> to vector<128x128xbf16>
    %cst_82 = arith.constant dense<0.000000e+00> : vector<4x128xf32>
    %148 = tpu.matmul %145, %147, %cst_82 {dimension_numbers = #tpu.dot_dimension_numbers<[1], [0], [0], [1], [0, 0, 1, 1], [], []>} : vector<4x128xbf16>, vector<128x128xbf16>, vector<4x128xf32> -> vector<4x128xf32>
    %149 = arith.addf %144, %148 : vector<4x128xf32>
    %150 = vector.extract_strided_slice %137 {offsets = [2, 0], sizes = [4, 128], strides = [1, 1]} : vector<6x128xbf16> to vector<4x128xbf16>
    %c2_83 = arith.constant 2 : index
    %c0_84 = arith.constant 0 : index
    %c0_85 = arith.constant 0 : index
    %151 = vector.load %arg6[%c2_83, %c0_84, %c0_85] : memref<3x128x128xbf16, #tpu.memory_space<vmem>>, vector<1x128x128xbf16>
    %152 = vector.shape_cast %151 : vector<1x128x128xbf16> to vector<128x128xbf16>
    %cst_86 = arith.constant dense<0.000000e+00> : vector<4x128xf32>
    %153 = tpu.matmul %150, %152, %cst_86 {dimension_numbers = #tpu.dot_dimension_numbers<[1], [0], [0], [1], [0, 0, 1, 1], [], []>} : vector<4x128xbf16>, vector<128x128xbf16>, vector<4x128xf32> -> vector<4x128xf32>
    %154 = arith.addf %149, %153 : vector<4x128xf32>
    %155 = arith.truncf %154 : vector<4x128xf32> to vector<4x128xbf16>
    %c0_87 = arith.constant 0 : index
    %c0_88 = arith.constant 0 : index
    %156 = vector.load %arg8[%c0_87, %c0_88] : memref<128x384xbf16, #tpu.memory_space<vmem>>, vector<128x384xbf16>
    %cst_89 = arith.constant dense<0.000000e+00> : vector<4x384xf32>
    %157 = tpu.matmul %155, %156, %cst_89 {dimension_numbers = #tpu.dot_dimension_numbers<[1], [0], [0], [1], [0, 0, 1, 1], [], []>} : vector<4x128xbf16>, vector<128x384xbf16>, vector<4x384xf32> -> vector<4x384xf32>
    %c0_90 = arith.constant 0 : index
    %c0_91 = arith.constant 0 : index
    %158 = vector.load %arg9[%c0_90, %c0_91] : memref<1x384xf32, #tpu.memory_space<vmem>>, vector<1x384xf32>
    %159 = vector.broadcast %158 : vector<1x384xf32> to vector<4x384xf32>
    %160 = arith.addf %157, %159 : vector<4x384xf32>
    %161 = vector.extract_strided_slice %160 {offsets = [0, 0], sizes = [4, 128], strides = [1, 1]} : vector<4x384xf32> to vector<4x128xf32>
    %162 = vector.extract_strided_slice %160 {offsets = [0, 128], sizes = [4, 128], strides = [1, 1]} : vector<4x384xf32> to vector<4x128xf32>
    %163 = vector.extract_strided_slice %160 {offsets = [0, 256], sizes = [4, 128], strides = [1, 1]} : vector<4x384xf32> to vector<4x128xf32>
    %164 = arith.truncf %161 : vector<4x128xf32> to vector<4x128xbf16>
    %165 = arith.truncf %162 : vector<4x128xf32> to vector<4x128xbf16>
    %cst_92 = arith.constant dense<0.000000e+00> : vector<4x4xf32>
    %166 = tpu.matmul %164, %165, %cst_92 {dimension_numbers = #tpu.dot_dimension_numbers<[1], [1], [0], [0], [0, 0, 1, 0], [], []>} : vector<4x128xbf16>, vector<4x128xbf16>, vector<4x4xf32> -> vector<4x4xf32>
    %cst_93 = arith.constant dense<0xFF800000> : vector<4xf32>
    %167 = vector.multi_reduction <maximumf>, %166, %cst_93 [1] : vector<4x4xf32> to vector<4xf32>
    %168 = vector.shape_cast %167 : vector<4xf32> to vector<4x1xf32>
    %169 = vector.broadcast %168 : vector<4x1xf32> to vector<4x4xf32>
    %170 = arith.subf %166, %169 : vector<4x4xf32>
    %171 = math.exp %170 : vector<4x4xf32>
    %cst_94 = arith.constant dense<0.000000e+00> : vector<4xf32>
    %172 = vector.multi_reduction <add>, %171, %cst_94 [1] : vector<4x4xf32> to vector<4xf32>
    %173 = vector.shape_cast %172 : vector<4xf32> to vector<4x1xf32>
    %174 = tpu.reciprocal %173 {approx = true} : vector<4x1xf32> -> vector<4x1xf32>
    %175 = vector.broadcast %174 : vector<4x1xf32> to vector<4x4xf32>
    %176 = arith.mulf %171, %175 : vector<4x4xf32>
    %177 = arith.truncf %176 : vector<4x4xf32> to vector<4x4xbf16>
    %178 = arith.truncf %163 : vector<4x128xf32> to vector<4x128xbf16>
    %cst_95 = arith.constant dense<0.000000e+00> : vector<4x128xf32>
    %179 = tpu.matmul %177, %178, %cst_95 {dimension_numbers = #tpu.dot_dimension_numbers<[1], [0], [0], [1], [0, 0, 1, 1], [], []>} : vector<4x4xbf16>, vector<4x128xbf16>, vector<4x128xf32> -> vector<4x128xf32>
    %cst_96 = arith.constant dense<0.000000e+00> : vector<128xf32>
    %180 = vector.multi_reduction <add>, %179, %cst_96 [0] : vector<4x128xf32> to vector<128xf32>
    %181 = vector.shape_cast %180 : vector<128xf32> to vector<1x128xf32>
    %cst_97 = arith.constant 4.000000e+00 : f32
    %182 = vector.broadcast %cst_97 : f32 to vector<1x128xf32>
    %183 = arith.divf %181, %182 : vector<1x128xf32>
    %184 = tpu.concatenate %91, %183 in 0 : vector<1x128xf32>, vector<1x128xf32> -> vector<2x128xf32>
    %c0_98 = arith.constant 0 : index
    %c0_99 = arith.constant 0 : index
    %185 = vector.load %arg10[%c0_98, %c0_99] : memref<2x128xf32, #tpu.memory_space<vmem>>, vector<2x128xf32>
    tpu.vector_store %arg10[%c0_98, %c0_99], %184 {strides = array<i32>} : memref<2x128xf32, #tpu.memory_space<vmem>>, vector<2x128xf32>,
    return
  }
  func.func @transform_0(%arg0: i32) -> (i32, i32, i32) {
    %c0_i32 = arith.constant 0 : i32
    %c0_i32_0 = arith.constant 0 : i32
    %c0_i32_1 = arith.constant 0 : i32
    return %arg0, %c0_i32, %c0_i32_0 : i32, i32, i32
  }
  func.func @transform_1(%arg0: i32) -> (i32, i32, i32) {
    %c0_i32 = arith.constant 0 : i32
    %c0_i32_0 = arith.constant 0 : i32
    %c0_i32_1 = arith.constant 0 : i32
    %c0_i32_2 = arith.constant 0 : i32
    return %c0_i32, %c0_i32_0, %c0_i32_1 : i32, i32, i32
  }
  func.func @transform_2(%arg0: i32) -> (i32, i32) {
    %c0_i32 = arith.constant 0 : i32
    %c0_i32_0 = arith.constant 0 : i32
    %c0_i32_1 = arith.constant 0 : i32
    return %c0_i32, %c0_i32_0 : i32, i32
  }
  func.func @transform_3(%arg0: i32) -> (i32, i32) {
    %c0_i32 = arith.constant 0 : i32
    %c0_i32_0 = arith.constant 0 : i32
    %c0_i32_1 = arith.constant 0 : i32
    return %c0_i32, %c0_i32_0 : i32, i32
  }
  func.func @transform_4(%arg0: i32) -> (i32, i32) {
    %c0_i32 = arith.constant 0 : i32
    %c0_i32_0 = arith.constant 0 : i32
    %c0_i32_1 = arith.constant 0 : i32
    return %c0_i32, %c0_i32_0 : i32, i32
  }
  func.func @transform_5(%arg0: i32) -> (i32, i32, i32) {
    %c0_i32 = arith.constant 0 : i32
    %c0_i32_0 = arith.constant 0 : i32
    %c0_i32_1 = arith.constant 0 : i32
    %c0_i32_2 = arith.constant 0 : i32
    return %c0_i32, %c0_i32_0, %c0_i32_1 : i32, i32, i32
  }
  func.func @transform_6(%arg0: i32) -> (i32, i32) {
    %c0_i32 = arith.constant 0 : i32
    %c0_i32_0 = arith.constant 0 : i32
    %c0_i32_1 = arith.constant 0 : i32
    return %c0_i32, %c0_i32_0 : i32, i32
  }
  func.func @transform_7(%arg0: i32) -> (i32, i32) {
    %c0_i32 = arith.constant 0 : i32
    %c0_i32_0 = arith.constant 0 : i32
    %c0_i32_1 = arith.constant 0 : i32
    return %c0_i32, %c0_i32_0 : i32, i32
  }
  func.func @transform_8(%arg0: i32) -> (i32, i32) {
    %c0_i32 = arith.constant 0 : i32
    %c0_i32_0 = arith.constant 0 : i32
    %c0_i32_1 = arith.constant 0 : i32
    return %c0_i32, %c0_i32_0 : i32, i32
  }
  func.func @transform_9(%arg0: i32) -> (i32, i32) {
    %c0_i32 = arith.constant 0 : i32
    %c0_i32_0 = arith.constant 0 : i32
    return %arg0, %c0_i32 : i32, i32
  }
}

</mosaic_0001>

<llo_original>
// kernel: tpu_custom_call.1
$region0: #{tpu_custom_call.1}
  #allocation0 [shape = 'u32[]', space=smem, size = 0x4, offset = 0x4, fixed_abs, tag = 'smem constant byte address 0x4 - core index']
  #allocation1 [shape = 'u32[144,128]{1,0:T(1,128)}', space=vmem, size = 0x12000, scoped, tag = 'internal scratch']
  %s0 = inlined_call_operand.hbm [shape: f32[2,8,128], index: 0, kind: input, shape index: {}]
  %s1 = inlined_call_operand.hbm [shape: bf16[3,128,128], index: 1, kind: input, shape index: {}]
  %s2 = inlined_call_operand.vmem [shape: f32[1,128], index: 2, kind: input, shape index: {}]
  %s3 = inlined_call_operand.hbm [shape: bf16[128,384], index: 3, kind: input, shape index: {}]
  %s4 = inlined_call_operand.vmem [shape: f32[1,384], index: 4, kind: input, shape index: {}]
  %s5 = inlined_call_operand.hbm [shape: bf16[3,128,128], index: 5, kind: input, shape index: {}]
  %s6 = inlined_call_operand.vmem [shape: f32[1,128], index: 6, kind: input, shape index: {}]
  %s7 = inlined_call_operand.hbm [shape: bf16[128,384], index: 7, kind: input, shape index: {}]
  %s8 = inlined_call_operand.vmem [shape: f32[1,384], index: 8, kind: input, shape index: {}]
  %s9 = inlined_call_operand.hbm [shape: f32[2,128], index: 9, kind: output, shape index: {}]
  %s10 = sld [smem:[#allocation0]]
  $region66: #{tpu_custom_call.1} parent=0
    _
  %s12 = ssub.s32 1, %s10
  %s13 = scalar_select 0, %s12, %s10
  $region1: #{tpu_custom_call.1} parent=0
    #allocation2 [shape = 'u8[8192]{0}', space=vmem, size = 0x2000, scoped, tag = 'input window, operand 0, single buffered']
    #allocation3 [shape = 's32[1]{0}', space=sflag, size = 0x4, scoped, tag = 'scoped memory for tpu_custom_call.1']
    #allocation4 [shape = 's32[1]{0}', space=sflag, size = 0x4, scoped, tag = 'scoped memory for tpu_custom_call.1']
    #allocation5 [shape = 'u8[98304]{0}', space=vmem, size = 0x18000, scoped, tag = 'input window, operand 1, single buffered']
    #allocation6 [shape = 's32[1]{0}', space=sflag, size = 0x4, scoped, tag = 'scoped memory for tpu_custom_call.1']
    #allocation7 [shape = 'u8[98304]{0}', space=vmem, size = 0x18000, scoped, tag = 'input window, operand 3, single buffered']
    #allocation8 [shape = 'u8[98304]{0}', space=vmem, size = 0x18000, scoped, tag = 'input window, operand 5, single buffered']
    #allocation9 [shape = 's32[1]{0}', space=sflag, size = 0x4, scoped, tag = 'scoped memory for tpu_custom_call.1']
    #allocation10 [shape = 'u8[98304]{0}', space=vmem, size = 0x18000, scoped, tag = 'input window, operand 7, single buffered']
    #allocation11 [shape = 'u8[1024]{0}', space=vmem, size = 0x400, scoped, tag = 'output window, operand 0, single buffered']
    %14 = vsyncpa [#allocation3], 0
    %15 = vsyncpa [#allocation6], 0
    %16 = vsyncpa [#allocation9], 0
    %17 = vsyncpa [#allocation4], 0
    // Predicated region
    $region2: #{tpu_custom_call.1} parent=1 // pred_check
      _
    $region3: #{tpu_custom_call.1} parent=1 // pred_check_branch
      %19 = sbr.rel (0) target = $region5
    $region4: #{tpu_custom_call.1} parent=1 // pred_region
      %s21 = ssub.s32 256, 256
      %22 = vsyncadd [#allocation3], %s21
      %s23 = sshll.u32 [#allocation2], 4
      %s24 = int_to_ptr.vmem [resolvable:$true] %s23
      %29 = dma.hbm_to_vmem [thread:$0]  %s0, 256, %s24, [#allocation3], 128, 128, 8
    $region5: #{tpu_custom_call.1} parent=1 // pred_fallthru
      _
    // Predicated region
    $region6: #{tpu_custom_call.1} parent=1 // pred_check
      _
    $region7: #{tpu_custom_call.1} parent=1 // pred_check_branch
      %31 = sbr.rel (0) target = $region9
    $region8: #{tpu_custom_call.1} parent=1 // pred_region
      %s33 = ssub.s32 3072, 3072
      %34 = vsyncadd [#allocation6], %s33
      %s35 = sshll.u32 [#allocation5], 4
      %s36 = int_to_ptr.vmem [resolvable:$true] %s35
      %41 = dma.hbm_to_vmem [thread:$0]  %s1, 3072, %s36, [#allocation6], 64, 64, 4
    $region9: #{tpu_custom_call.1} parent=1 // pred_fallthru
      _
    // Predicated region
    $region10: #{tpu_custom_call.1} parent=1 // pred_check
      _
    $region11: #{tpu_custom_call.1} parent=1 // pred_check_branch
      %43 = sbr.rel (0) target = $region13
    $region12: #{tpu_custom_call.1} parent=1 // pred_region
      _
    $region13: #{tpu_custom_call.1} parent=1 // pred_fallthru
      _
    // Predicated region
    $region14: #{tpu_custom_call.1} parent=1 // pred_check
      _
    $region15: #{tpu_custom_call.1} parent=1 // pred_check_branch
      %45 = sbr.rel (0) target = $region17
    $region16: #{tpu_custom_call.1} parent=1 // pred_region
      %s47 = ssub.s32 3072, 3072
      %48 = vsyncadd [#allocation6], %s47
      %s49 = sshll.u32 [#allocation7], 4
      %s50 = int_to_ptr.vmem [resolvable:$true] %s49
      %55 = dma.hbm_to_vmem [thread:$0]  %s3, 3072, %s50, [#allocation6], 192, 192, 12
    $region17: #{tpu_custom_call.1} parent=1 // pred_fallthru
      _
    // Predicated region
    $region18: #{tpu_custom_call.1} parent=1 // pred_check
      _
    $region19: #{tpu_custom_call.1} parent=1 // pred_check_branch
      %57 = sbr.rel (0) target = $region21
    $region20: #{tpu_custom_call.1} parent=1 // pred_region
      _
    $region21: #{tpu_custom_call.1} parent=1 // pred_fallthru
      _
    // Predicated region
    $region22: #{tpu_custom_call.1} parent=1 // pred_check
      _
    $region23: #{tpu_custom_call.1} parent=1 // pred_check_branch
      %59 = sbr.rel (0) target = $region25
    $region24: #{tpu_custom_call.1} parent=1 // pred_region
      %s61 = ssub.s32 3072, 3072
      %62 = vsyncadd [#allocation9], %s61
      %s63 = sshll.u32 [#allocation8], 4
      %s64 = int_to_ptr.vmem [resolvable:$true] %s63
      %69 = dma.hbm_to_vmem [thread:$0]  %s5, 3072, %s64, [#allocation9], 64, 64, 4
    $region25: #{tpu_custom_call.1} parent=1 // pred_fallthru
      _
    // Predicated region
    $region26: #{tpu_custom_call.1} parent=1 // pred_check
      _
    $region27: #{tpu_custom_call.1} parent=1 // pred_check_branch
      %71 = sbr.rel (0) target = $region29
    $region28: #{tpu_custom_call.1} parent=1 // pred_region
      _
    $region29: #{tpu_custom_call.1} parent=1 // pred_fallthru
      _
    // Predicated region
    $region30: #{tpu_custom_call.1} parent=1 // pred_check
      _
    $region31: #{tpu_custom_call.1} parent=1 // pred_check_branch
      %73 = sbr.rel (0) target = $region33
    $region32: #{tpu_custom_call.1} parent=1 // pred_region
      %s75 = ssub.s32 3072, 3072
      %76 = vsyncadd [#allocation9], %s75
      %s77 = sshll.u32 [#allocation10], 4
      %s78 = int_to_ptr.vmem [resolvable:$true] %s77
      %83 = dma.hbm_to_vmem [thread:$0]  %s7, 3072, %s78, [#allocation9], 192, 192, 12
    $region33: #{tpu_custom_call.1} parent=1 // pred_fallthru
      _
    // Predicated region
    $region34: #{tpu_custom_call.1} parent=1 // pred_check
      _
    $region35: #{tpu_custom_call.1} parent=1 // pred_check_branch
      %85 = sbr.rel (0) target = $region37
    $region36: #{tpu_custom_call.1} parent=1 // pred_region
      _
    $region37: #{tpu_custom_call.1} parent=1 // pred_fallthru
      _
    // Predicated region
    $region38: #{tpu_custom_call.1} parent=1 // pred_check
      _
    $region39: #{tpu_custom_call.1} parent=1 // pred_check_branch
      %87 = sbr.rel (0) target = $region41
    $region40: #{tpu_custom_call.1} parent=1 // pred_region
      %88 = dma.done [#allocation3], 256
    $region41: #{tpu_custom_call.1} parent=1 // pred_fallthru
      _
    // Predicated region
    $region42: #{tpu_custom_call.1} parent=1 // pred_check
      _
    $region43: #{tpu_custom_call.1} parent=1 // pred_check_branch
      %90 = sbr.rel (0) target = $region45
    $region44: #{tpu_custom_call.1} parent=1 // pred_region
      %91 = dma.done [#allocation6], 3072
    $region45: #{tpu_custom_call.1} parent=1 // pred_fallthru
      _
    // Predicated region
    $region46: #{tpu_custom_call.1} parent=1 // pred_check
      _
    $region47: #{tpu_custom_call.1} parent=1 // pred_check_branch
      %93 = sbr.rel (0) target = $region49
    $region48: #{tpu_custom_call.1} parent=1 // pred_region
      %94 = dma.done [#allocation6], 3072
    $region49: #{tpu_custom_call.1} parent=1 // pred_fallthru
      _
    // Predicated region
    $region50: #{tpu_custom_call.1} parent=1 // pred_check
      _
    $region51: #{tpu_custom_call.1} parent=1 // pred_check_branch
      %96 = sbr.rel (0) target = $region53
    $region52: #{tpu_custom_call.1} parent=1 // pred_region
      %97 = dma.done [#allocation9], 3072
    $region53: #{tpu_custom_call.1} parent=1 // pred_fallthru
      _
    // Predicated region
    $region54: #{tpu_custom_call.1} parent=1 // pred_check
      _
    $region55: #{tpu_custom_call.1} parent=1 // pred_check_branch
      %99 = sbr.rel (0) target = $region57
    $region56: #{tpu_custom_call.1} parent=1 // pred_region
      %100 = dma.done [#allocation9], 3072
    $region57: #{tpu_custom_call.1} parent=1 // pred_fallthru
      _
    %v102 = vld [vmem:[#allocation2] sm:$0xff]
    %v103 = vpack.c.bf16 %v102, %v102
    %v104 = vld [vmem:[%s2] sm:$0x1]
    %v105 = vld [vmem:[#allocation5] sm:$0xf]
    %v106 = vld [vmem:[#allocation5 + $0x4] sm:$0xf]
    %v107 = vld [vmem:[#allocation5 + $0x8] sm:$0xf]
    %v108 = vld [vmem:[#allocation5 + $0xc] sm:$0xf]
    %v109 = vld [vmem:[#allocation5 + $0x10] sm:$0xf]
    %v110 = vld [vmem:[#allocation5 + $0x14] sm:$0xf]
    %v111 = vld [vmem:[#allocation5 + $0x18] sm:$0xf]
    %v112 = vld [vmem:[#allocation5 + $0x1c] sm:$0xf]
    %v113 = vld [vmem:[#allocation5 + $0x20] sm:$0xf]
    %v114 = vld [vmem:[#allocation5 + $0x24] sm:$0xf]
    %v115 = vld [vmem:[#allocation5 + $0x28] sm:$0xf]
    %v116 = vld [vmem:[#allocation5 + $0x2c] sm:$0xf]
    %v117 = vld [vmem:[#allocation5 + $0x30] sm:$0xf]
    %v118 = vld [vmem:[#allocation5 + $0x34] sm:$0xf]
    %v119 = vld [vmem:[#allocation5 + $0x38] sm:$0xf]
    %v120 = vld [vmem:[#allocation5 + $0x3c] sm:$0xf]
    %v137 = vunpack.c.l.b16 %v105
    %v138 = vunpack.c.l.b16 %v106
    %v139 = vunpack.c.l.b16 %v107
    %v140 = vunpack.c.l.b16 %v108
    %v141 = vunpack.c.l.b16 %v109
    %v142 = vunpack.c.l.b16 %v110
    %v143 = vunpack.c.l.b16 %v111
    %v144 = vunpack.c.l.b16 %v112
    %v145 = vunpack.c.l.b16 %v113
    %v146 = vunpack.c.l.b16 %v114
    %v147 = vunpack.c.l.b16 %v115
    %v148 = vunpack.c.l.b16 %v116
    %v149 = vunpack.c.l.b16 %v117
    %v150 = vunpack.c.l.b16 %v118
    %v151 = vunpack.c.l.b16 %v119
    %v152 = vunpack.c.l.b16 %v120
    %v153 = vpack.c.b16 %v138, %v137
    %v154 = vpack.c.b16 %v140, %v139
    %v155 = vpack.c.b16 %v142, %v141
    %v156 = vpack.c.b16 %v144, %v143
    %v157 = vpack.c.b16 %v146, %v145
    %v158 = vpack.c.b16 %v148, %v147
    %v159 = vpack.c.b16 %v150, %v149
    %v160 = vpack.c.b16 %v152, %v151
    %169 = vmatprep.subr.bf16.mxu0 0
    %170 = vmatpush1.bf16.msra.mxu0 %v153
    %171 = vmatprep.subr.bf16.mxu0 0
    %172 = vmatpush1.bf16.msra.mxu0 %v154
    %173 = vmatprep.subr.bf16.mxu0 0
    %174 = vmatpush1.bf16.msra.mxu0 %v155
    %175 = vmatprep.subr.bf16.mxu0 0
    %176 = vmatpush1.bf16.msra.mxu0 %v156
    %177 = vmatprep.subr.bf16.mxu0 0
    %178 = vmatpush1.bf16.msra.mxu0 %v157
    %179 = vmatprep.subr.bf16.mxu0 0
    %180 = vmatpush1.bf16.msra.mxu0 %v158
    %181 = vmatprep.subr.bf16.mxu0 0
    %182 = vmatpush1.bf16.msra.mxu0 %v159
    %183 = vmatprep.subr.bf16.mxu0 0
    %184 = vmatpush1.bf16.msra.mxu0 %v160
    %185 = vmatprep.subr.bf16.mxu0 0
    %186 = vmatpush1.bf16.msra.mxu0 0
    %187 = vmatprep.subr.bf16.mxu0 0
    %188 = vmatpush1.bf16.msra.mxu0 0
    %189 = vmatprep.subr.bf16.mxu0 0
    %190 = vmatpush1.bf16.msra.mxu0 0
    %191 = vmatprep.subr.bf16.mxu0 0
    %192 = vmatpush1.bf16.msra.mxu0 0
    %193 = vmatprep.subr.bf16.mxu0 0
    %194 = vmatpush1.bf16.msra.mxu0 0
    %195 = vmatprep.subr.bf16.mxu0 0
    %196 = vmatpush1.bf16.msra.mxu0 0
    %197 = vmatprep.subr.bf16.mxu0 0
    %198 = vmatpush1.bf16.msra.mxu0 0
    %199 = vmatprep.subr.bf16.mxu0 0
    %200 = vmatpush1.bf16.msra.mxu0 0
    %201 = vmatprep.mubr.bf16.mxu0 0
    %202 = vmatmul.mubr.bf16.gmra.mrb[0].mxu0 %v103
    %v203 = vpop.f32.mrb[0].mxu0
    %v204 = vadd.f32 0.0, %v203
    %v205 = vpop.f32.mrb[0].mxu0
    %v206 = vpop.f32.mrb[0].mxu0
    %v207 = vpop.f32.mrb[0].mxu0
    %208 = vdwg.mxu0
    %v210 = vlaneseq
    %v211 = vshrl.u32 %v210, 7
    %v212 = vsub.s32 0, %v211
    %v213 = vrot.slane %v104, %v212
    %v215 = vadd.f32 %v213, %v204
    %s216 = scalar_lea.vmem [#allocation5], 64
    %v217 = vld [vmem:[%s216] sm:$0xf]
    %v218 = vld [vmem:[%s216 + $0x4] sm:$0xf]
    %v219 = vld [vmem:[%s216 + $0x8] sm:$0xf]
    %v220 = vld [vmem:[%s216 + $0xc] sm:$0xf]
    %v221 = vld [vmem:[%s216 + $0x10] sm:$0xf]
    %v222 = vld [vmem:[%s216 + $0x14] sm:$0xf]
    %v223 = vld [vmem:[%s216 + $0x18] sm:$0xf]
    %v224 = vld [vmem:[%s216 + $0x1c] sm:$0xf]
    %v225 = vld [vmem:[%s216 + $0x20] sm:$0xf]
    %v226 = vld [vmem:[%s216 + $0x24] sm:$0xf]
    %v227 = vld [vmem:[%s216 + $0x28] sm:$0xf]
    %v228 = vld [vmem:[%s216 + $0x2c] sm:$0xf]
    %v229 = vld [vmem:[%s216 + $0x30] sm:$0xf]
    %v230 = vld [vmem:[%s216 + $0x34] sm:$0xf]
    %v231 = vld [vmem:[%s216 + $0x38] sm:$0xf]
    %v232 = vld [vmem:[%s216 + $0x3c] sm:$0xf]
    %v234 = vshrl.u32 %v103, 16
    %v236 = vshll.u32 %v103, 16
    %v238 = vrot.slane %v236, 1
    %v239 = vor.u32 %v234, %v238
    %v257 = vunpack.c.l.b16 %v217
    %v258 = vunpack.c.l.b16 %v218
    %v259 = vunpack.c.l.b16 %v219
    %v260 = vunpack.c.l.b16 %v220
    %v261 = vunpack.c.l.b16 %v221
    %v262 = vunpack.c.l.b16 %v222
    %v263 = vunpack.c.l.b16 %v223
    %v264 = vunpack.c.l.b16 %v224
    %v265 = vunpack.c.l.b16 %v225
    %v266 = vunpack.c.l.b16 %v226
    %v267 = vunpack.c.l.b16 %v227
    %v268 = vunpack.c.l.b16 %v228
    %v269 = vunpack.c.l.b16 %v229
    %v270 = vunpack.c.l.b16 %v230
    %v271 = vunpack.c.l.b16 %v231
    %v272 = vunpack.c.l.b16 %v232
    %v273 = vpack.c.b16 %v258, %v257
    %v274 = vpack.c.b16 %v260, %v259
    %v275 = vpack.c.b16 %v262, %v261
    %v276 = vpack.c.b16 %v264, %v263
    %v277 = vpack.c.b16 %v266, %v265
    %v278 = vpack.c.b16 %v268, %v267
    %v279 = vpack.c.b16 %v270, %v269
    %v280 = vpack.c.b16 %v272, %v271
    %289 = vmatprep.subr.bf16.mxu0 0
    %290 = vmatpush1.bf16.msra.mxu0 %v273
    %291 = vmatprep.subr.bf16.mxu0 0
    %292 = vmatpush1.bf16.msra.mxu0 %v274
    %293 = vmatprep.subr.bf16.mxu0 0
    %294 = vmatpush1.bf16.msra.mxu0 %v275
    %295 = vmatprep.subr.bf16.mxu0 0
    %296 = vmatpush1.bf16.msra.mxu0 %v276
    %297 = vmatprep.subr.bf16.mxu0 0
    %298 = vmatpush1.bf16.msra.mxu0 %v277
    %299 = vmatprep.subr.bf16.mxu0 0
    %300 = vmatpush1.bf16.msra.mxu0 %v278
    %301 = vmatprep.subr.bf16.mxu0 0
    %302 = vmatpush1.bf16.msra.mxu0 %v279
    %303 = vmatprep.subr.bf16.mxu0 0
    %304 = vmatpush1.bf16.msra.mxu0 %v280
    %305 = vmatprep.subr.bf16.mxu0 0
    %306 = vmatpush1.bf16.msra.mxu0 0
    %307 = vmatprep.subr.bf16.mxu0 0
    %308 = vmatpush1.bf16.msra.mxu0 0
    %309 = vmatprep.subr.bf16.mxu0 0
    %310 = vmatpush1.bf16.msra.mxu0 0
    %311 = vmatprep.subr.bf16.mxu0 0
    %312 = vmatpush1.bf16.msra.mxu0 0
    %313 = vmatprep.subr.bf16.mxu0 0
    %314 = vmatpush1.bf16.msra.mxu0 0
    %315 = vmatprep.subr.bf16.mxu0 0
    %316 = vmatpush1.bf16.msra.mxu0 0
    %317 = vmatprep.subr.bf16.mxu0 0
    %318 = vmatpush1.bf16.msra.mxu0 0
    %319 = vmatprep.subr.bf16.mxu0 0
    %320 = vmatpush1.bf16.msra.mxu0 0
    %321 = vmatprep.mubr.bf16.mxu0 0
    %322 = vmatmul.mubr.bf16.gmra.mrb[0].mxu0 %v239
    %v323 = vpop.f32.mrb[0].mxu0
    %v324 = vadd.f32 0.0, %v323
    %v325 = vpop.f32.mrb[0].mxu0
    %v326 = vpop.f32.mrb[0].mxu0
    %v327 = vpop.f32.mrb[0].mxu0
    %328 = vdwg.mxu0
    %v329 = vadd.f32 %v215, %v324
    %s330 = scalar_lea.vmem [#allocation5], 128
    %v331 = vld [vmem:[%s330] sm:$0xf]
    %v332 = vld [vmem:[%s330 + $0x4] sm:$0xf]
    %v333 = vld [vmem:[%s330 + $0x8] sm:$0xf]
    %v334 = vld [vmem:[%s330 + $0xc] sm:$0xf]
    %v335 = vld [vmem:[%s330 + $0x10] sm:$0xf]
    %v336 = vld [vmem:[%s330 + $0x14] sm:$0xf]
    %v337 = vld [vmem:[%s330 + $0x18] sm:$0xf]
    %v338 = vld [vmem:[%s330 + $0x1c] sm:$0xf]
    %v339 = vld [vmem:[%s330 + $0x20] sm:$0xf]
    %v340 = vld [vmem:[%s330 + $0x24] sm:$0xf]
    %v341 = vld [vmem:[%s330 + $0x28] sm:$0xf]
    %v342 = vld [vmem:[%s330 + $0x2c] sm:$0xf]
    %v343 = vld [vmem:[%s330 + $0x30] sm:$0xf]
    %v344 = vld [vmem:[%s330 + $0x34] sm:$0xf]
    %v345 = vld [vmem:[%s330 + $0x38] sm:$0xf]
    %v346 = vld [vmem:[%s330 + $0x3c] sm:$0xf]
    %v348 = vrot.slane %v103, 1
    %v366 = vunpack.c.l.b16 %v331
    %v367 = vunpack.c.l.b16 %v332
    %v368 = vunpack.c.l.b16 %v333
    %v369 = vunpack.c.l.b16 %v334
    %v370 = vunpack.c.l.b16 %v335
    %v371 = vunpack.c.l.b16 %v336
    %v372 = vunpack.c.l.b16 %v337
    %v373 = vunpack.c.l.b16 %v338
    %v374 = vunpack.c.l.b16 %v339
    %v375 = vunpack.c.l.b16 %v340
    %v376 = vunpack.c.l.b16 %v341
    %v377 = vunpack.c.l.b16 %v342
    %v378 = vunpack.c.l.b16 %v343
    %v379 = vunpack.c.l.b16 %v344
    %v380 = vunpack.c.l.b16 %v345
    %v381 = vunpack.c.l.b16 %v346
    %v382 = vpack.c.b16 %v367, %v366
    %v383 = vpack.c.b16 %v369, %v368
    %v384 = vpack.c.b16 %v371, %v370
    %v385 = vpack.c.b16 %v373, %v372
    %v386 = vpack.c.b16 %v375, %v374
    %v387 = vpack.c.b16 %v377, %v376
    %v388 = vpack.c.b16 %v379, %v378
    %v389 = vpack.c.b16 %v381, %v380
    %398 = vmatprep.subr.bf16.mxu0 0
    %399 = vmatpush1.bf16.msra.mxu0 %v382
    %400 = vmatprep.subr.bf16.mxu0 0
    %401 = vmatpush1.bf16.msra.mxu0 %v383
    %402 = vmatprep.subr.bf16.mxu0 0
    %403 = vmatpush1.bf16.msra.mxu0 %v384
    %404 = vmatprep.subr.bf16.mxu0 0
    %405 = vmatpush1.bf16.msra.mxu0 %v385
    %406 = vmatprep.subr.bf16.mxu0 0
    %407 = vmatpush1.bf16.msra.mxu0 %v386
    %408 = vmatprep.subr.bf16.mxu0 0
    %409 = vmatpush1.bf16.msra.mxu0 %v387
    %410 = vmatprep.subr.bf16.mxu0 0
    %411 = vmatpush1.bf16.msra.mxu0 %v388
    %412 = vmatprep.subr.bf16.mxu0 0
    %413 = vmatpush1.bf16.msra.mxu0 %v389
    %414 = vmatprep.subr.bf16.mxu0 0
    %415 = vmatpush1.bf16.msra.mxu0 0
    %416 = vmatprep.subr.bf16.mxu0 0
    %417 = vmatpush1.bf16.msra.mxu0 0
    %418 = vmatprep.subr.bf16.mxu0 0
    %419 = vmatpush1.bf16.msra.mxu0 0
    %420 = vmatprep.subr.bf16.mxu0 0
    %421 = vmatpush1.bf16.msra.mxu0 0
    %422 = vmatprep.subr.bf16.mxu0 0
    %423 = vmatpush1.bf16.msra.mxu0 0
    %424 = vmatprep.subr.bf16.mxu0 0
    %425 = vmatpush1.bf16.msra.mxu0 0
    %426 = vmatprep.subr.bf16.mxu0 0
    %427 = vmatpush1.bf16.msra.mxu0 0
    %428 = vmatprep.subr.bf16.mxu0 0
    %429 = vmatpush1.bf16.msra.mxu0 0
    %430 = vmatprep.mubr.bf16.mxu0 0
    %431 = vmatmul.mubr.bf16.gmra.mrb[0].mxu0 %v348
    %v432 = vpop.f32.mrb[0].mxu0
    %v433 = vadd.f32 0.0, %v432
    %v434 = vpop.f32.mrb[0].mxu0
    %v435 = vpop.f32.mrb[0].mxu0
    %v436 = vpop.f32.mrb[0].mxu0
    %437 = vdwg.mxu0
    %v438 = vadd.f32 %v329, %v433
    %v439 = vpack.c.bf16 %v438, %v438
    %v440 = vld [vmem:[#allocation7] sm:$0xff]
    %v441 = vld [vmem:[#allocation7 + $0x8] sm:$0xf]
    %v442 = vld [vmem:[#allocation7 + $0xc] sm:$0xff]
    %v443 = vld [vmem:[#allocation7 + $0x14] sm:$0xf]
    %v444 = vld [vmem:[#allocation7 + $0x18] sm:$0xff]
    %v445 = vld [vmem:[#allocation7 + $0x20] sm:$0xf]
    %v446 = vld [vmem:[#allocation7 + $0x24] sm:$0xff]
    %v447 = vld [vmem:[#allocation7 + $0x2c] sm:$0xf]
    %v448 = vld [vmem:[#allocation7 + $0x30] sm:$0xff]
    %v449 = vld [vmem:[#allocation7 + $0x38] sm:$0xf]
    %v450 = vld [vmem:[#allocation7 + $0x3c] sm:$0xff]
    %v451 = vld [vmem:[#allocation7 + $0x44] sm:$0xf]
    %v452 = vld [vmem:[#allocation7 + $0x48] sm:$0xff]
    %v453 = vld [vmem:[#allocation7 + $0x50] sm:$0xf]
    %v454 = vld [vmem:[#allocation7 + $0x54] sm:$0xff]
    %v455 = vld [vmem:[#allocation7 + $0x5c] sm:$0xf]
    %v456 = vld [vmem:[#allocation7 + $0x60] sm:$0xff]
    %v457 = vld [vmem:[#allocation7 + $0x68] sm:$0xf]
    %v458 = vld [vmem:[#allocation7 + $0x6c] sm:$0xff]
    %v459 = vld [vmem:[#allocation7 + $0x74] sm:$0xf]
    %v460 = vld [vmem:[#allocation7 + $0x78] sm:$0xff]
    %v461 = vld [vmem:[#allocation7 + $0x80] sm:$0xf]
    %v462 = vld [vmem:[#allocation7 + $0x84] sm:$0xff]
    %v463 = vld [vmem:[#allocation7 + $0x8c] sm:$0xf]
    %v464 = vld [vmem:[#allocation7 + $0x90] sm:$0xff]
    %v465 = vld [vmem:[#allocation7 + $0x98] sm:$0xf]
    %v466 = vld [vmem:[#allocation7 + $0x9c] sm:$0xff]
    %v467 = vld [vmem:[#allocation7 + $0xa4] sm:$0xf]
    %v468 = vld [vmem:[#allocation7 + $0xa8] sm:$0xff]
    %v469 = vld [vmem:[#allocation7 + $0xb0] sm:$0xf]
    %v470 = vld [vmem:[#allocation7 + $0xb4] sm:$0xff]
    %v471 = vld [vmem:[#allocation7 + $0xbc] sm:$0xf]
    %v472 = vld [vmem:[%s4] sm:$0x7]
    %v474 = vlaneseq
    %v475 = vshrl.u32 %v474, 7
    %v476 = vsub.s32 0, %v475
    %v477 = vrot.slane %v472, %v476
    %v478 = vlaneseq
    %v479 = vshrl.u32 %v478, 7
    %v480 = vsub.s32 1, %v479
    %v481 = vrot.slane %v472, %v480
    %v482 = vlaneseq
    %v483 = vshrl.u32 %v482, 7
    %v484 = vsub.s32 2, %v483
    %v485 = vrot.slane %v472, %v484
    %v521 = vunpack.c.l.b16 %v440
    %v522 = vunpack.c.h.b16 %v440
    %v523 = vunpack.c.l.b16 %v441
    %v524 = vunpack.c.l.b16 %v442
    %v525 = vunpack.c.h.b16 %v442
    %v526 = vunpack.c.l.b16 %v443
    %v527 = vunpack.c.l.b16 %v444
    %v528 = vunpack.c.h.b16 %v444
    %v529 = vunpack.c.l.b16 %v445
    %v530 = vunpack.c.l.b16 %v446
    %v531 = vunpack.c.h.b16 %v446
    %v532 = vunpack.c.l.b16 %v447
    %v533 = vunpack.c.l.b16 %v448
    %v534 = vunpack.c.h.b16 %v448
    %v535 = vunpack.c.l.b16 %v449
    %v536 = vunpack.c.l.b16 %v450
    %v537 = vunpack.c.h.b16 %v450
    %v538 = vunpack.c.l.b16 %v451
    %v539 = vunpack.c.l.b16 %v452
    %v540 = vunpack.c.h.b16 %v452
    %v541 = vunpack.c.l.b16 %v453
    %v542 = vunpack.c.l.b16 %v454
    %v543 = vunpack.c.h.b16 %v454
    %v544 = vunpack.c.l.b16 %v455
    %v545 = vunpack.c.l.b16 %v456
    %v546 = vunpack.c.h.b16 %v456
    %v547 = vunpack.c.l.b16 %v457
    %v548 = vunpack.c.l.b16 %v458
    %v549 = vunpack.c.h.b16 %v458
    %v550 = vunpack.c.l.b16 %v459
    %v551 = vunpack.c.l.b16 %v460
    %v552 = vunpack.c.h.b16 %v460
    %v553 = vunpack.c.l.b16 %v461
    %v554 = vunpack.c.l.b16 %v462
    %v555 = vunpack.c.h.b16 %v462
    %v556 = vunpack.c.l.b16 %v463
    %v557 = vunpack.c.l.b16 %v464
    %v558 = vunpack.c.h.b16 %v464
    %v559 = vunpack.c.l.b16 %v465
    %v560 = vunpack.c.l.b16 %v466
    %v561 = vunpack.c.h.b16 %v466
    %v562 = vunpack.c.l.b16 %v467
    %v563 = vunpack.c.l.b16 %v468
    %v564 = vunpack.c.h.b16 %v468
    %v565 = vunpack.c.l.b16 %v469
    %v566 = vunpack.c.l.b16 %v470
    %v567 = vunpack.c.h.b16 %v470
    %v568 = vunpack.c.l.b16 %v471
    %v569 = vpack.c.b16 %v524, %v521
    %v570 = vpack.c.b16 %v525, %v522
    %v571 = vpack.c.b16 %v526, %v523
    %v572 = vpack.c.b16 %v530, %v527
    %v573 = vpack.c.b16 %v531, %v528
    %v574 = vpack.c.b16 %v532, %v529
    %v575 = vpack.c.b16 %v536, %v533
    %v576 = vpack.c.b16 %v537, %v534
    %v577 = vpack.c.b16 %v538, %v535
    %v578 = vpack.c.b16 %v542, %v539
    %v579 = vpack.c.b16 %v543, %v540
    %v580 = vpack.c.b16 %v544, %v541
    %v581 = vpack.c.b16 %v548, %v545
    %v582 = vpack.c.b16 %v549, %v546
    %v583 = vpack.c.b16 %v550, %v547
    %v584 = vpack.c.b16 %v554, %v551
    %v585 = vpack.c.b16 %v555, %v552
    %v586 = vpack.c.b16 %v556, %v553
    %v587 = vpack.c.b16 %v560, %v557
    %v588 = vpack.c.b16 %v561, %v558
    %v589 = vpack.c.b16 %v562, %v559
    %v590 = vpack.c.b16 %v566, %v563
    %v591 = vpack.c.b16 %v567, %v564
    %v592 = vpack.c.b16 %v568, %v565
    %617 = vmatprep.subr.bf16.mxu0 %v570
    %618 = vmatpush1.bf16.msra.mxu0 %v569
    %619 = vmatprep.subr.bf16.mxu0 %v573
    %620 = vmatpush1.bf16.msra.mxu0 %v572
    %621 = vmatprep.subr.bf16.mxu0 %v576
    %622 = vmatpush1.bf16.msra.mxu0 %v575
    %623 = vmatprep.subr.bf16.mxu0 %v579
    %624 = vmatpush1.bf16.msra.mxu0 %v578
    %625 = vmatprep.subr.bf16.mxu0 %v582
    %626 = vmatpush1.bf16.msra.mxu0 %v581
    %627 = vmatprep.subr.bf16.mxu0 %v585
    %628 = vmatpush1.bf16.msra.mxu0 %v584
    %629 = vmatprep.subr.bf16.mxu0 %v588
    %630 = vmatpush1.bf16.msra.mxu0 %v587
    %631 = vmatprep.subr.bf16.mxu0 %v591
    %632 = vmatpush1.bf16.msra.mxu0 %v590
    %633 = vmatprep.subr.bf16.mxu0 0
    %634 = vmatpush1.bf16.msra.mxu0 0
    %635 = vmatprep.subr.bf16.mxu0 0
    %636 = vmatpush1.bf16.msra.mxu0 0
    %637 = vmatprep.subr.bf16.mxu0 0
    %638 = vmatpush1.bf16.msra.mxu0 0
    %639 = vmatprep.subr.bf16.mxu0 0
    %640 = vmatpush1.bf16.msra.mxu0 0
    %641 = vmatprep.subr.bf16.mxu0 0
    %642 = vmatpush1.bf16.msra.mxu0 0
    %643 = vmatprep.subr.bf16.mxu0 0
    %644 = vmatpush1.bf16.msra.mxu0 0
    %645 = vmatprep.subr.bf16.mxu0 0
    %646 = vmatpush1.bf16.msra.mxu0 0
    %647 = vmatprep.subr.bf16.mxu0 0
    %648 = vmatpush1.bf16.msra.mxu0 0
    %649 = vmatprep.mubr.bf16.mxu0 0
    %650 = vmatmul.mubr.bf16.gmra.mrb[0].mxu0 %v439
    %v651 = vpop.f32.mrb[0].mxu0
    %v652 = vadd.f32 %v477, %v651
    %v653 = vpop.f32.mrb[0].mxu0
    %v654 = vadd.f32 %v481, %v653
    %v655 = vpop.f32.mrb[0].mxu0
    %v656 = vpop.f32.mrb[0].mxu0
    %657 = vdwg.mxu0
    %658 = vmatprep.subr.bf16.mxu0 0
    %659 = vmatpush1.bf16.msra.mxu0 %v571
    %660 = vmatprep.subr.bf16.mxu0 0
    %661 = vmatpush1.bf16.msra.mxu0 %v574
    %662 = vmatprep.subr.bf16.mxu0 0
    %663 = vmatpush1.bf16.msra.mxu0 %v577
    %664 = vmatprep.subr.bf16.mxu0 0
    %665 = vmatpush1.bf16.msra.mxu0 %v580
    %666 = vmatprep.subr.bf16.mxu0 0
    %667 = vmatpush1.bf16.msra.mxu0 %v583
    %668 = vmatprep.subr.bf16.mxu0 0
    %669 = vmatpush1.bf16.msra.mxu0 %v586
    %670 = vmatprep.subr.bf16.mxu0 0
    %671 = vmatpush1.bf16.msra.mxu0 %v589
    %672 = vmatprep.subr.bf16.mxu0 0
    %673 = vmatpush1.bf16.msra.mxu0 %v592
    %674 = vmatprep.subr.bf16.mxu0 0
    %675 = vmatpush1.bf16.msra.mxu0 0
    %676 = vmatprep.subr.bf16.mxu0 0
    %677 = vmatpush1.bf16.msra.mxu0 0
    %678 = vmatprep.subr.bf16.mxu0 0
    %679 = vmatpush1.bf16.msra.mxu0 0
    %680 = vmatprep.subr.bf16.mxu0 0
    %681 = vmatpush1.bf16.msra.mxu0 0
    %682 = vmatprep.subr.bf16.mxu0 0
    %683 = vmatpush1.bf16.msra.mxu0 0
    %684 = vmatprep.subr.bf16.mxu0 0
    %685 = vmatpush1.bf16.msra.mxu0 0
    %686 = vmatprep.subr.bf16.mxu0 0
    %687 = vmatpush1.bf16.msra.mxu0 0
    %688 = vmatprep.subr.bf16.mxu0 0
    %689 = vmatpush1.bf16.msra.mxu0 0
    %690 = vmatprep.mubr.bf16.mxu0 0
    %691 = vmatmul.mubr.bf16.gmra.mrb[0].mxu0 %v439
    %v692 = vpop.f32.mrb[0].mxu0
    %v693 = vadd.f32 %v485, %v692
    %v694 = vpop.f32.mrb[0].mxu0
    %v695 = vpop.f32.mrb[0].mxu0
    %v696 = vpop.f32.mrb[0].mxu0
    %697 = vdwg.mxu0
    %v698 = vpack.c.bf16 %v652, %v652
    %v699 = vpack.c.bf16 %v654, %v654
    %700 = vmatprep.subr.bf16.mxu0 0
    %701 = vmatpush1.bf16.xpose.msra.mxu0 %v699
    %702 = vmatprep.subr.bf16.mxu0 0
    %703 = vmatpush1.bf16.xpose.msra.mxu0 0
    %704 = vmatprep.subr.bf16.mxu0 0
    %705 = vmatpush1.bf16.xpose.msra.mxu0 0
    %706 = vmatprep.subr.bf16.mxu0 0
    %707 = vmatpush1.bf16.xpose.msra.mxu0 0
    %708 = vmatprep.subr.bf16.mxu0 0
    %709 = vmatpush1.bf16.xpose.msra.mxu0 0
    %710 = vmatprep.subr.bf16.mxu0 0
    %711 = vmatpush1.bf16.xpose.msra.mxu0 0
    %712 = vmatprep.subr.bf16.mxu0 0
    %713 = vmatpush1.bf16.xpose.msra.mxu0 0
    %714 = vmatprep.subr.bf16.mxu0 0
    %715 = vmatpush1.bf16.xpose.msra.mxu0 0
    %716 = vmatprep.subr.bf16.mxu0 0
    %717 = vmatpush1.bf16.xpose.msra.mxu0 0
    %718 = vmatprep.subr.bf16.mxu0 0
    %719 = vmatpush1.bf16.xpose.msra.mxu0 0
    %720 = vmatprep.subr.bf16.mxu0 0
    %721 = vmatpush1.bf16.xpose.msra.mxu0 0
    %722 = vmatprep.subr.bf16.mxu0 0
    %723 = vmatpush1.bf16.xpose.msra.mxu0 0
    %724 = vmatprep.subr.bf16.mxu0 0
    %725 = vmatpush1.bf16.xpose.msra.mxu0 0
    %726 = vmatprep.subr.bf16.mxu0 0
    %727 = vmatpush1.bf16.xpose.msra.mxu0 0
    %728 = vmatprep.subr.bf16.mxu0 0
    %729 = vmatpush1.bf16.xpose.msra.mxu0 0
    %730 = vmatprep.subr.bf16.mxu0 0
    %731 = vmatpush1.bf16.xpose.msra.mxu0 0
    %732 = vmatprep.mubr.bf16.mxu0 0
    %733 = vmatmul.mubr.bf16.gmra.mrb[0].mxu0 %v698
    %v734 = vpop.f32.mrb[0].mxu0
    %v735 = vadd.f32 0.0, %v734
    %v736 = vpop.f32.mrb[0].mxu0
    %v737 = vpop.f32.mrb[0].mxu0
    %v738 = vpop.f32.mrb[0].mxu0
    %739 = vdwg.mxu0
    %vm740 = vcmask 46080
    %v741 = vsel %vm740, %v735, -inf
    %742 = vmax.xlane.f32.xlu0 %v741
    %v743 = vpop.xlane.xlu0 %742
    %v744 = vsub.f32 %v735, %v743
    %v745 = vmul.f32 %v744, 1.442695
    %v746 = vpow.pop %v745
    %v747 = vsel %vm740, %v746, 0.0
    %748 = vadd.xlane.f32.xlu0 %v747
    %v749 = vpop.xlane.xlu0 %748
    %v750 = vrcp.pop %v749
    %v751 = vmul.f32 %v746, %v750
    %v752 = vpack.c.bf16 %v751, %v751
    %v753 = vpack.c.bf16 %v693, %v693
    %vm754 = vcmask 48128
    %v756 = vsel %vm754, %v752, 0
    %vm758 = vcmask 1042432
    %v760 = vsel %vm758, %v753, 0
    %762 = vmatprep.subr.bf16.mxu0 0
    %763 = vmatpush1.bf16.msra.mxu0 %v760
    %764 = vmatprep.subr.bf16.mxu0 0
    %765 = vmatpush1.bf16.msra.mxu0 0
    %766 = vmatprep.subr.bf16.mxu0 0
    %767 = vmatpush1.bf16.msra.mxu0 0
    %768 = vmatprep.subr.bf16.mxu0 0
    %769 = vmatpush1.bf16.msra.mxu0 0
    %770 = vmatprep.subr.bf16.mxu0 0
    %771 = vmatpush1.bf16.msra.mxu0 0
    %772 = vmatprep.subr.bf16.mxu0 0
    %773 = vmatpush1.bf16.msra.mxu0 0
    %774 = vmatprep.subr.bf16.mxu0 0
    %775 = vmatpush1.bf16.msra.mxu0 0
    %776 = vmatprep.subr.bf16.mxu0 0
    %777 = vmatpush1.bf16.msra.mxu0 0
    %778 = vmatprep.subr.bf16.mxu0 0
    %779 = vmatpush1.bf16.msra.mxu0 0
    %780 = vmatprep.subr.bf16.mxu0 0
    %781 = vmatpush1.bf16.msra.mxu0 0
    %782 = vmatprep.subr.bf16.mxu0 0
    %783 = vmatpush1.bf16.msra.mxu0 0
    %784 = vmatprep.subr.bf16.mxu0 0
    %785 = vmatpush1.bf16.msra.mxu0 0
    %786 = vmatprep.subr.bf16.mxu0 0
    %787 = vmatpush1.bf16.msra.mxu0 0
    %788 = vmatprep.subr.bf16.mxu0 0
    %789 = vmatpush1.bf16.msra.mxu0 0
    %790 = vmatprep.subr.bf16.mxu0 0
    %791 = vmatpush1.bf16.msra.mxu0 0
    %792 = vmatprep.subr.bf16.mxu0 0
    %793 = vmatpush1.bf16.msra.mxu0 0
    %794 = vmatprep.mubr.bf16.mxu0 0
    %795 = vmatmul.mubr.bf16.gmra.mrb[0].mxu0 %v756
    %v796 = vpop.f32.mrb[0].mxu0
    %v797 = vadd.f32 0.0, %v796
    %v798 = vpop.f32.mrb[0].mxu0
    %v799 = vpop.f32.mrb[0].mxu0
    %v800 = vpop.f32.mrb[0].mxu0
    %801 = vdwg.mxu0
    %v802 = vpack.c.bf16 %v797, %v797
    %v803 = vld [vmem:[%s6] sm:$0x1]
    %v804 = vld [vmem:[#allocation8] sm:$0xf]
    %v805 = vld [vmem:[#allocation8 + $0x4] sm:$0xf]
    %v806 = vld [vmem:[#allocation8 + $0x8] sm:$0xf]
    %v807 = vld [vmem:[#allocation8 + $0xc] sm:$0xf]
    %v808 = vld [vmem:[#allocation8 + $0x10] sm:$0xf]
    %v809 = vld [vmem:[#allocation8 + $0x14] sm:$0xf]
    %v810 = vld [vmem:[#allocation8 + $0x18] sm:$0xf]
    %v811 = vld [vmem:[#allocation8 + $0x1c] sm:$0xf]
    %v812 = vld [vmem:[#allocation8 + $0x20] sm:$0xf]
    %v813 = vld [vmem:[#allocation8 + $0x24] sm:$0xf]
    %v814 = vld [vmem:[#allocation8 + $0x28] sm:$0xf]
    %v815 = vld [vmem:[#allocation8 + $0x2c] sm:$0xf]
    %v816 = vld [vmem:[#allocation8 + $0x30] sm:$0xf]
    %v817 = vld [vmem:[#allocation8 + $0x34] sm:$0xf]
    %v818 = vld [vmem:[#allocation8 + $0x38] sm:$0xf]
    %v819 = vld [vmem:[#allocation8 + $0x3c] sm:$0xf]
    %v836 = vunpack.c.l.b16 %v804
    %v837 = vunpack.c.l.b16 %v805
    %v838 = vunpack.c.l.b16 %v806
    %v839 = vunpack.c.l.b16 %v807
    %v840 = vunpack.c.l.b16 %v808
    %v841 = vunpack.c.l.b16 %v809
    %v842 = vunpack.c.l.b16 %v810
    %v843 = vunpack.c.l.b16 %v811
    %v844 = vunpack.c.l.b16 %v812
    %v845 = vunpack.c.l.b16 %v813
    %v846 = vunpack.c.l.b16 %v814
    %v847 = vunpack.c.l.b16 %v815
    %v848 = vunpack.c.l.b16 %v816
    %v849 = vunpack.c.l.b16 %v817
    %v850 = vunpack.c.l.b16 %v818
    %v851 = vunpack.c.l.b16 %v819
    %v852 = vpack.c.b16 %v837, %v836
    %v853 = vpack.c.b16 %v839, %v838
    %v854 = vpack.c.b16 %v841, %v840
    %v855 = vpack.c.b16 %v843, %v842
    %v856 = vpack.c.b16 %v845, %v844
    %v857 = vpack.c.b16 %v847, %v846
    %v858 = vpack.c.b16 %v849, %v848
    %v859 = vpack.c.b16 %v851, %v850
    %868 = vmatprep.subr.bf16.mxu0 0
    %869 = vmatpush1.bf16.msra.mxu0 %v852
    %870 = vmatprep.subr.bf16.mxu0 0
    %871 = vmatpush1.bf16.msra.mxu0 %v853
    %872 = vmatprep.subr.bf16.mxu0 0
    %873 = vmatpush1.bf16.msra.mxu0 %v854
    %874 = vmatprep.subr.bf16.mxu0 0
    %875 = vmatpush1.bf16.msra.mxu0 %v855
    %876 = vmatprep.subr.bf16.mxu0 0
    %877 = vmatpush1.bf16.msra.mxu0 %v856
    %878 = vmatprep.subr.bf16.mxu0 0
    %879 = vmatpush1.bf16.msra.mxu0 %v857
    %880 = vmatprep.subr.bf16.mxu0 0
    %881 = vmatpush1.bf16.msra.mxu0 %v858
    %882 = vmatprep.subr.bf16.mxu0 0
    %883 = vmatpush1.bf16.msra.mxu0 %v859
    %884 = vmatprep.subr.bf16.mxu0 0
    %885 = vmatpush1.bf16.msra.mxu0 0
    %886 = vmatprep.subr.bf16.mxu0 0
    %887 = vmatpush1.bf16.msra.mxu0 0
    %888 = vmatprep.subr.bf16.mxu0 0
    %889 = vmatpush1.bf16.msra.mxu0 0
    %890 = vmatprep.subr.bf16.mxu0 0
    %891 = vmatpush1.bf16.msra.mxu0 0
    %892 = vmatprep.subr.bf16.mxu0 0
    %893 = vmatpush1.bf16.msra.mxu0 0
    %894 = vmatprep.subr.bf16.mxu0 0
    %895 = vmatpush1.bf16.msra.mxu0 0
    %896 = vmatprep.subr.bf16.mxu0 0
    %897 = vmatpush1.bf16.msra.mxu0 0
    %898 = vmatprep.subr.bf16.mxu0 0
    %899 = vmatpush1.bf16.msra.mxu0 0
    %900 = vmatprep.mubr.bf16.mxu0 0
    %901 = vmatmul.mubr.bf16.gmra.mrb[0].mxu0 %v802
    %v902 = vpop.f32.mrb[0].mxu0
    %v903 = vadd.f32 0.0, %v902
    %v904 = vpop.f32.mrb[0].mxu0
    %v905 = vpop.f32.mrb[0].mxu0
    %v906 = vpop.f32.mrb[0].mxu0
    %907 = vdwg.mxu0
    %v909 = vlaneseq
    %v910 = vshrl.u32 %v909, 7
    %v911 = vsub.s32 0, %v910
    %v912 = vrot.slane %v803, %v911
    %v914 = vadd.f32 %v912, %v903
    %s915 = scalar_lea.vmem [#allocation8], 64
    %v916 = vld [vmem:[%s915] sm:$0xf]
    %v917 = vld [vmem:[%s915 + $0x4] sm:$0xf]
    %v918 = vld [vmem:[%s915 + $0x8] sm:$0xf]
    %v919 = vld [vmem:[%s915 + $0xc] sm:$0xf]
    %v920 = vld [vmem:[%s915 + $0x10] sm:$0xf]
    %v921 = vld [vmem:[%s915 + $0x14] sm:$0xf]
    %v922 = vld [vmem:[%s915 + $0x18] sm:$0xf]
    %v923 = vld [vmem:[%s915 + $0x1c] sm:$0xf]
    %v924 = vld [vmem:[%s915 + $0x20] sm:$0xf]
    %v925 = vld [vmem:[%s915 + $0x24] sm:$0xf]
    %v926 = vld [vmem:[%s915 + $0x28] sm:$0xf]
    %v927 = vld [vmem:[%s915 + $0x2c] sm:$0xf]
    %v928 = vld [vmem:[%s915 + $0x30] sm:$0xf]
    %v929 = vld [vmem:[%s915 + $0x34] sm:$0xf]
    %v930 = vld [vmem:[%s915 + $0x38] sm:$0xf]
    %v931 = vld [vmem:[%s915 + $0x3c] sm:$0xf]
    %v933 = vshrl.u32 %v802, 16
    %v935 = vshll.u32 %v802, 16
    %v937 = vrot.slane %v935, 1
    %v938 = vor.u32 %v933, %v937
    %v956 = vunpack.c.l.b16 %v916
    %v957 = vunpack.c.l.b16 %v917
    %v958 = vunpack.c.l.b16 %v918
    %v959 = vunpack.c.l.b16 %v919
    %v960 = vunpack.c.l.b16 %v920
    %v961 = vunpack.c.l.b16 %v921
    %v962 = vunpack.c.l.b16 %v922
    %v963 = vunpack.c.l.b16 %v923
    %v964 = vunpack.c.l.b16 %v924
    %v965 = vunpack.c.l.b16 %v925
    %v966 = vunpack.c.l.b16 %v926
    %v967 = vunpack.c.l.b16 %v927
    %v968 = vunpack.c.l.b16 %v928
    %v969 = vunpack.c.l.b16 %v929
    %v970 = vunpack.c.l.b16 %v930
    %v971 = vunpack.c.l.b16 %v931
    %v972 = vpack.c.b16 %v957, %v956
    %v973 = vpack.c.b16 %v959, %v958
    %v974 = vpack.c.b16 %v961, %v960
    %v975 = vpack.c.b16 %v963, %v962
    %v976 = vpack.c.b16 %v965, %v964
    %v977 = vpack.c.b16 %v967, %v966
    %v978 = vpack.c.b16 %v969, %v968
    %v979 = vpack.c.b16 %v971, %v970
    %988 = vmatprep.subr.bf16.mxu0 0
    %989 = vmatpush1.bf16.msra.mxu0 %v972
    %990 = vmatprep.subr.bf16.mxu0 0
    %991 = vmatpush1.bf16.msra.mxu0 %v973
    %992 = vmatprep.subr.bf16.mxu0 0
    %993 = vmatpush1.bf16.msra.mxu0 %v974
    %994 = vmatprep.subr.bf16.mxu0 0
    %995 = vmatpush1.bf16.msra.mxu0 %v975
    %996 = vmatprep.subr.bf16.mxu0 0
    %997 = vmatpush1.bf16.msra.mxu0 %v976
    %998 = vmatprep.subr.bf16.mxu0 0
    %999 = vmatpush1.bf16.msra.mxu0 %v977
    %1000 = vmatprep.subr.bf16.mxu0 0
    %1001 = vmatpush1.bf16.msra.mxu0 %v978
    %1002 = vmatprep.subr.bf16.mxu0 0
    %1003 = vmatpush1.bf16.msra.mxu0 %v979
    %1004 = vmatprep.subr.bf16.mxu0 0
    %1005 = vmatpush1.bf16.msra.mxu0 0
    %1006 = vmatprep.subr.bf16.mxu0 0
    %1007 = vmatpush1.bf16.msra.mxu0 0
    %1008 = vmatprep.subr.bf16.mxu0 0
    %1009 = vmatpush1.bf16.msra.mxu0 0
    %1010 = vmatprep.subr.bf16.mxu0 0
    %1011 = vmatpush1.bf16.msra.mxu0 0
    %1012 = vmatprep.subr.bf16.mxu0 0
    %1013 = vmatpush1.bf16.msra.mxu0 0
    %1014 = vmatprep.subr.bf16.mxu0 0
    %1015 = vmatpush1.bf16.msra.mxu0 0
    %1016 = vmatprep.subr.bf16.mxu0 0
    %1017 = vmatpush1.bf16.msra.mxu0 0
    %1018 = vmatprep.subr.bf16.mxu0 0
    %1019 = vmatpush1.bf16.msra.mxu0 0
    %1020 = vmatprep.mubr.bf16.mxu0 0
    %1021 = vmatmul.mubr.bf16.gmra.mrb[0].mxu0 %v938
    %v1022 = vpop.f32.mrb[0].mxu0
    %v1023 = vadd.f32 0.0, %v1022
    %v1024 = vpop.f32.mrb[0].mxu0
    %v1025 = vpop.f32.mrb[0].mxu0
    %v1026 = vpop.f32.mrb[0].mxu0
    %1027 = vdwg.mxu0
    %v1028 = vadd.f32 %v914, %v1023
    %s1029 = scalar_lea.vmem [#allocation8], 128
    %v1030 = vld [vmem:[%s1029] sm:$0xf]
    %v1031 = vld [vmem:[%s1029 + $0x4] sm:$0xf]
    %v1032 = vld [vmem:[%s1029 + $0x8] sm:$0xf]
    %v1033 = vld [vmem:[%s1029 + $0xc] sm:$0xf]
    %v1034 = vld [vmem:[%s1029 + $0x10] sm:$0xf]
    %v1035 = vld [vmem:[%s1029 + $0x14] sm:$0xf]
    %v1036 = vld [vmem:[%s1029 + $0x18] sm:$0xf]
    %v1037 = vld [vmem:[%s1029 + $0x1c] sm:$0xf]
    %v1038 = vld [vmem:[%s1029 + $0x20] sm:$0xf]
    %v1039 = vld [vmem:[%s1029 + $0x24] sm:$0xf]
    %v1040 = vld [vmem:[%s1029 + $0x28] sm:$0xf]
    %v1041 = vld [vmem:[%s1029 + $0x2c] sm:$0xf]
    %v1042 = vld [vmem:[%s1029 + $0x30] sm:$0xf]
    %v1043 = vld [vmem:[%s1029 + $0x34] sm:$0xf]
    %v1044 = vld [vmem:[%s1029 + $0x38] sm:$0xf]
    %v1045 = vld [vmem:[%s1029 + $0x3c] sm:$0xf]
    %v1047 = vrot.slane %v802, 1
    %v1065 = vunpack.c.l.b16 %v1030
    %v1066 = vunpack.c.l.b16 %v1031
    %v1067 = vunpack.c.l.b16 %v1032
    %v1068 = vunpack.c.l.b16 %v1033
    %v1069 = vunpack.c.l.b16 %v1034
    %v1070 = vunpack.c.l.b16 %v1035
    %v1071 = vunpack.c.l.b16 %v1036
    %v1072 = vunpack.c.l.b16 %v1037
    %v1073 = vunpack.c.l.b16 %v1038
    %v1074 = vunpack.c.l.b16 %v1039
    %v1075 = vunpack.c.l.b16 %v1040
    %v1076 = vunpack.c.l.b16 %v1041
    %v1077 = vunpack.c.l.b16 %v1042
    %v1078 = vunpack.c.l.b16 %v1043
    %v1079 = vunpack.c.l.b16 %v1044
    %v1080 = vunpack.c.l.b16 %v1045
    %v1081 = vpack.c.b16 %v1066, %v1065
    %v1082 = vpack.c.b16 %v1068, %v1067
    %v1083 = vpack.c.b16 %v1070, %v1069
    %v1084 = vpack.c.b16 %v1072, %v1071
    %v1085 = vpack.c.b16 %v1074, %v1073
    %v1086 = vpack.c.b16 %v1076, %v1075
    %v1087 = vpack.c.b16 %v1078, %v1077
    %v1088 = vpack.c.b16 %v1080, %v1079
    %1097 = vmatprep.subr.bf16.mxu0 0
    %1098 = vmatpush1.bf16.msra.mxu0 %v1081
    %1099 = vmatprep.subr.bf16.mxu0 0
    %1100 = vmatpush1.bf16.msra.mxu0 %v1082
    %1101 = vmatprep.subr.bf16.mxu0 0
    %1102 = vmatpush1.bf16.msra.mxu0 %v1083
    %1103 = vmatprep.subr.bf16.mxu0 0
    %1104 = vmatpush1.bf16.msra.mxu0 %v1084
    %1105 = vmatprep.subr.bf16.mxu0 0
    %1106 = vmatpush1.bf16.msra.mxu0 %v1085
    %1107 = vmatprep.subr.bf16.mxu0 0
    %1108 = vmatpush1.bf16.msra.mxu0 %v1086
    %1109 = vmatprep.subr.bf16.mxu0 0
    %1110 = vmatpush1.bf16.msra.mxu0 %v1087
    %1111 = vmatprep.subr.bf16.mxu0 0
    %1112 = vmatpush1.bf16.msra.mxu0 %v1088
    %1113 = vmatprep.subr.bf16.mxu0 0
    %1114 = vmatpush1.bf16.msra.mxu0 0
    %1115 = vmatprep.subr.bf16.mxu0 0
    %1116 = vmatpush1.bf16.msra.mxu0 0
    %1117 = vmatprep.subr.bf16.mxu0 0
    %1118 = vmatpush1.bf16.msra.mxu0 0
    %1119 = vmatprep.subr.bf16.mxu0 0
    %1120 = vmatpush1.bf16.msra.mxu0 0
    %1121 = vmatprep.subr.bf16.mxu0 0
    %1122 = vmatpush1.bf16.msra.mxu0 0
    %1123 = vmatprep.subr.bf16.mxu0 0
    %1124 = vmatpush1.bf16.msra.mxu0 0
    %1125 = vmatprep.subr.bf16.mxu0 0
    %1126 = vmatpush1.bf16.msra.mxu0 0
    %1127 = vmatprep.subr.bf16.mxu0 0
    %1128 = vmatpush1.bf16.msra.mxu0 0
    %1129 = vmatprep.mubr.bf16.mxu0 0
    %1130 = vmatmul.mubr.bf16.gmra.mrb[0].mxu0 %v1047
    %v1131 = vpop.f32.mrb[0].mxu0
    %v1132 = vadd.f32 0.0, %v1131
    %v1133 = vpop.f32.mrb[0].mxu0
    %v1134 = vpop.f32.mrb[0].mxu0
    %v1135 = vpop.f32.mrb[0].mxu0
    %1136 = vdwg.mxu0
    %v1137 = vadd.f32 %v1028, %v1132
    %v1138 = vpack.c.bf16 %v1137, %v1137
    %v1139 = vld [vmem:[#allocation10] sm:$0xff]
    %v1140 = vld [vmem:[#allocation10 + $0x8] sm:$0xf]
    %v1141 = vld [vmem:[#allocation10 + $0xc] sm:$0xff]
    %v1142 = vld [vmem:[#allocation10 + $0x14] sm:$0xf]
    %v1143 = vld [vmem:[#allocation10 + $0x18] sm:$0xff]
    %v1144 = vld [vmem:[#allocation10 + $0x20] sm:$0xf]
    %v1145 = vld [vmem:[#allocation10 + $0x24] sm:$0xff]
    %v1146 = vld [vmem:[#allocation10 + $0x2c] sm:$0xf]
    %v1147 = vld [vmem:[#allocation10 + $0x30] sm:$0xff]
    %v1148 = vld [vmem:[#allocation10 + $0x38] sm:$0xf]
    %v1149 = vld [vmem:[#allocation10 + $0x3c] sm:$0xff]
    %v1150 = vld [vmem:[#allocation10 + $0x44] sm:$0xf]
    %v1151 = vld [vmem:[#allocation10 + $0x48] sm:$0xff]
    %v1152 = vld [vmem:[#allocation10 + $0x50] sm:$0xf]
    %v1153 = vld [vmem:[#allocation10 + $0x54] sm:$0xff]
    %v1154 = vld [vmem:[#allocation10 + $0x5c] sm:$0xf]
    %v1155 = vld [vmem:[#allocation10 + $0x60] sm:$0xff]
    %v1156 = vld [vmem:[#allocation10 + $0x68] sm:$0xf]
    %v1157 = vld [vmem:[#allocation10 + $0x6c] sm:$0xff]
    %v1158 = vld [vmem:[#allocation10 + $0x74] sm:$0xf]
    %v1159 = vld [vmem:[#allocation10 + $0x78] sm:$0xff]
    %v1160 = vld [vmem:[#allocation10 + $0x80] sm:$0xf]
    %v1161 = vld [vmem:[#allocation10 + $0x84] sm:$0xff]
    %v1162 = vld [vmem:[#allocation10 + $0x8c] sm:$0xf]
    %v1163 = vld [vmem:[#allocation10 + $0x90] sm:$0xff]
    %v1164 = vld [vmem:[#allocation10 + $0x98] sm:$0xf]
    %v1165 = vld [vmem:[#allocation10 + $0x9c] sm:$0xff]
    %v1166 = vld [vmem:[#allocation10 + $0xa4] sm:$0xf]
    %v1167 = vld [vmem:[#allocation10 + $0xa8] sm:$0xff]
    %v1168 = vld [vmem:[#allocation10 + $0xb0] sm:$0xf]
    %v1169 = vld [vmem:[#allocation10 + $0xb4] sm:$0xff]
    %v1170 = vld [vmem:[#allocation10 + $0xbc] sm:$0xf]
    %v1171 = vld [vmem:[%s8] sm:$0x7]
    %v1173 = vlaneseq
    %v1174 = vshrl.u32 %v1173, 7
    %v1175 = vsub.s32 0, %v1174
    %v1176 = vrot.slane %v1171, %v1175
    %v1177 = vlaneseq
    %v1178 = vshrl.u32 %v1177, 7
    %v1179 = vsub.s32 1, %v1178
    %v1180 = vrot.slane %v1171, %v1179
    %v1181 = vlaneseq
    %v1182 = vshrl.u32 %v1181, 7
    %v1183 = vsub.s32 2, %v1182
    %v1184 = vrot.slane %v1171, %v1183
    %v1220 = vunpack.c.l.b16 %v1139
    %v1221 = vunpack.c.h.b16 %v1139
    %v1222 = vunpack.c.l.b16 %v1140
    %v1223 = vunpack.c.l.b16 %v1141
    %v1224 = vunpack.c.h.b16 %v1141
    %v1225 = vunpack.c.l.b16 %v1142
    %v1226 = vunpack.c.l.b16 %v1143
    %v1227 = vunpack.c.h.b16 %v1143
    %v1228 = vunpack.c.l.b16 %v1144
    %v1229 = vunpack.c.l.b16 %v1145
    %v1230 = vunpack.c.h.b16 %v1145
    %v1231 = vunpack.c.l.b16 %v1146
    %v1232 = vunpack.c.l.b16 %v1147
    %v1233 = vunpack.c.h.b16 %v1147
    %v1234 = vunpack.c.l.b16 %v1148
    %v1235 = vunpack.c.l.b16 %v1149
    %v1236 = vunpack.c.h.b16 %v1149
    %v1237 = vunpack.c.l.b16 %v1150
    %v1238 = vunpack.c.l.b16 %v1151
    %v1239 = vunpack.c.h.b16 %v1151
    %v1240 = vunpack.c.l.b16 %v1152
    %v1241 = vunpack.c.l.b16 %v1153
    %v1242 = vunpack.c.h.b16 %v1153
    %v1243 = vunpack.c.l.b16 %v1154
    %v1244 = vunpack.c.l.b16 %v1155
    %v1245 = vunpack.c.h.b16 %v1155
    %v1246 = vunpack.c.l.b16 %v1156
    %v1247 = vunpack.c.l.b16 %v1157
    %v1248 = vunpack.c.h.b16 %v1157
    %v1249 = vunpack.c.l.b16 %v1158
    %v1250 = vunpack.c.l.b16 %v1159
    %v1251 = vunpack.c.h.b16 %v1159
    %v1252 = vunpack.c.l.b16 %v1160
    %v1253 = vunpack.c.l.b16 %v1161
    %v1254 = vunpack.c.h.b16 %v1161
    %v1255 = vunpack.c.l.b16 %v1162
    %v1256 = vunpack.c.l.b16 %v1163
    %v1257 = vunpack.c.h.b16 %v1163
    %v1258 = vunpack.c.l.b16 %v1164
    %v1259 = vunpack.c.l.b16 %v1165
    %v1260 = vunpack.c.h.b16 %v1165
    %v1261 = vunpack.c.l.b16 %v1166
    %v1262 = vunpack.c.l.b16 %v1167
    %v1263 = vunpack.c.h.b16 %v1167
    %v1264 = vunpack.c.l.b16 %v1168
    %v1265 = vunpack.c.l.b16 %v1169
    %v1266 = vunpack.c.h.b16 %v1169
    %v1267 = vunpack.c.l.b16 %v1170
    %v1268 = vpack.c.b16 %v1223, %v1220
    %v1269 = vpack.c.b16 %v1224, %v1221
    %v1270 = vpack.c.b16 %v1225, %v1222
    %v1271 = vpack.c.b16 %v1229, %v1226
    %v1272 = vpack.c.b16 %v1230, %v1227
    %v1273 = vpack.c.b16 %v1231, %v1228
    %v1274 = vpack.c.b16 %v1235, %v1232
    %v1275 = vpack.c.b16 %v1236, %v1233
    %v1276 = vpack.c.b16 %v1237, %v1234
    %v1277 = vpack.c.b16 %v1241, %v1238
    %v1278 = vpack.c.b16 %v1242, %v1239
    %v1279 = vpack.c.b16 %v1243, %v1240
    %v1280 = vpack.c.b16 %v1247, %v1244
    %v1281 = vpack.c.b16 %v1248, %v1245
    %v1282 = vpack.c.b16 %v1249, %v1246
    %v1283 = vpack.c.b16 %v1253, %v1250
    %v1284 = vpack.c.b16 %v1254, %v1251
    %v1285 = vpack.c.b16 %v1255, %v1252
    %v1286 = vpack.c.b16 %v1259, %v1256
    %v1287 = vpack.c.b16 %v1260, %v1257
    %v1288 = vpack.c.b16 %v1261, %v1258
    %v1289 = vpack.c.b16 %v1265, %v1262
    %v1290 = vpack.c.b16 %v1266, %v1263
    %v1291 = vpack.c.b16 %v1267, %v1264
    %1316 = vmatprep.subr.bf16.mxu0 %v1269
    %1317 = vmatpush1.bf16.msra.mxu0 %v1268
    %1318 = vmatprep.subr.bf16.mxu0 %v1272
    %1319 = vmatpush1.bf16.msra.mxu0 %v1271
    %1320 = vmatprep.subr.bf16.mxu0 %v1275
    %1321 = vmatpush1.bf16.msra.mxu0 %v1274
    %1322 = vmatprep.subr.bf16.mxu0 %v1278
    %1323 = vmatpush1.bf16.msra.mxu0 %v1277
    %1324 = vmatprep.subr.bf16.mxu0 %v1281
    %1325 = vmatpush1.bf16.msra.mxu0 %v1280
    %1326 = vmatprep.subr.bf16.mxu0 %v1284
    %1327 = vmatpush1.bf16.msra.mxu0 %v1283
    %1328 = vmatprep.subr.bf16.mxu0 %v1287
    %1329 = vmatpush1.bf16.msra.mxu0 %v1286
    %1330 = vmatprep.subr.bf16.mxu0 %v1290
    %1331 = vmatpush1.bf16.msra.mxu0 %v1289
    %1332 = vmatprep.subr.bf16.mxu0 0
    %1333 = vmatpush1.bf16.msra.mxu0 0
    %1334 = vmatprep.subr.bf16.mxu0 0
    %1335 = vmatpush1.bf16.msra.mxu0 0
    %1336 = vmatprep.subr.bf16.mxu0 0
    %1337 = vmatpush1.bf16.msra.mxu0 0
    %1338 = vmatprep.subr.bf16.mxu0 0
    %1339 = vmatpush1.bf16.msra.mxu0 0
    %1340 = vmatprep.subr.bf16.mxu0 0
    %1341 = vmatpush1.bf16.msra.mxu0 0
    %1342 = vmatprep.subr.bf16.mxu0 0
    %1343 = vmatpush1.bf16.msra.mxu0 0
    %1344 = vmatprep.subr.bf16.mxu0 0
    %1345 = vmatpush1.bf16.msra.mxu0 0
    %1346 = vmatprep.subr.bf16.mxu0 0
    %1347 = vmatpush1.bf16.msra.mxu0 0
    %1348 = vmatprep.mubr.bf16.mxu0 0
    %1349 = vmatmul.mubr.bf16.gmra.mrb[0].mxu0 %v1138
    %v1350 = vpop.f32.mrb[0].mxu0
    %v1351 = vadd.f32 %v1176, %v1350
    %v1352 = vpop.f32.mrb[0].mxu0
    %v1353 = vadd.f32 %v1180, %v1352
    %v1354 = vpop.f32.mrb[0].mxu0
    %v1355 = vpop.f32.mrb[0].mxu0
    %1356 = vdwg.mxu0
    %1357 = vmatprep.subr.bf16.mxu0 0
    %1358 = vmatpush1.bf16.msra.mxu0 %v1270
    %1359 = vmatprep.subr.bf16.mxu0 0
    %1360 = vmatpush1.bf16.msra.mxu0 %v1273
    %1361 = vmatprep.subr.bf16.mxu0 0
    %1362 = vmatpush1.bf16.msra.mxu0 %v1276
    %1363 = vmatprep.subr.bf16.mxu0 0
    %1364 = vmatpush1.bf16.msra.mxu0 %v1279
    %1365 = vmatprep.subr.bf16.mxu0 0
    %1366 = vmatpush1.bf16.msra.mxu0 %v1282
    %1367 = vmatprep.subr.bf16.mxu0 0
    %1368 = vmatpush1.bf16.msra.mxu0 %v1285
    %1369 = vmatprep.subr.bf16.mxu0 0
    %1370 = vmatpush1.bf16.msra.mxu0 %v1288
    %1371 = vmatprep.subr.bf16.mxu0 0
    %1372 = vmatpush1.bf16.msra.mxu0 %v1291
    %1373 = vmatprep.subr.bf16.mxu0 0
    %1374 = vmatpush1.bf16.msra.mxu0 0
    %1375 = vmatprep.subr.bf16.mxu0 0
    %1376 = vmatpush1.bf16.msra.mxu0 0
    %1377 = vmatprep.subr.bf16.mxu0 0
    %1378 = vmatpush1.bf16.msra.mxu0 0
    %1379 = vmatprep.subr.bf16.mxu0 0
    %1380 = vmatpush1.bf16.msra.mxu0 0
    %1381 = vmatprep.subr.bf16.mxu0 0
    %1382 = vmatpush1.bf16.msra.mxu0 0
    %1383 = vmatprep.subr.bf16.mxu0 0
    %1384 = vmatpush1.bf16.msra.mxu0 0
    %1385 = vmatprep.subr.bf16.mxu0 0
    %1386 = vmatpush1.bf16.msra.mxu0 0
    %1387 = vmatprep.subr.bf16.mxu0 0
    %1388 = vmatpush1.bf16.msra.mxu0 0
    %1389 = vmatprep.mubr.bf16.mxu0 0
    %1390 = vmatmul.mubr.bf16.gmra.mrb[0].mxu0 %v1138
    %v1391 = vpop.f32.mrb[0].mxu0
    %v1392 = vadd.f32 %v1184, %v1391
    %v1393 = vpop.f32.mrb[0].mxu0
    %v1394 = vpop.f32.mrb[0].mxu0
    %v1395 = vpop.f32.mrb[0].mxu0
    %1396 = vdwg.mxu0
    %v1397 = vpack.c.bf16 %v1351, %v1351
    %v1398 = vpack.c.bf16 %v1353, %v1353
    %1399 = vmatprep.subr.bf16.mxu0 0
    %1400 = vmatpush1.bf16.xpose.msra.mxu0 %v1398
    %1401 = vmatprep.subr.bf16.mxu0 0
    %1402 = vmatpush1.bf16.xpose.msra.mxu0 0
    %1403 = vmatprep.subr.bf16.mxu0 0
    %1404 = vmatpush1.bf16.xpose.msra.mxu0 0
    %1405 = vmatprep.subr.bf16.mxu0 0
    %1406 = vmatpush1.bf16.xpose.msra.mxu0 0
    %1407 = vmatprep.subr.bf16.mxu0 0
    %1408 = vmatpush1.bf16.xpose.msra.mxu0 0
    %1409 = vmatprep.subr.bf16.mxu0 0
    %1410 = vmatpush1.bf16.xpose.msra.mxu0 0
    %1411 = vmatprep.subr.bf16.mxu0 0
    %1412 = vmatpush1.bf16.xpose.msra.mxu0 0
    %1413 = vmatprep.subr.bf16.mxu0 0
    %1414 = vmatpush1.bf16.xpose.msra.mxu0 0
    %1415 = vmatprep.subr.bf16.mxu0 0
    %1416 = vmatpush1.bf16.xpose.msra.mxu0 0
    %1417 = vmatprep.subr.bf16.mxu0 0
    %1418 = vmatpush1.bf16.xpose.msra.mxu0 0
    %1419 = vmatprep.subr.bf16.mxu0 0
    %1420 = vmatpush1.bf16.xpose.msra.mxu0 0
    %1421 = vmatprep.subr.bf16.mxu0 0
    %1422 = vmatpush1.bf16.xpose.msra.mxu0 0
    %1423 = vmatprep.subr.bf16.mxu0 0
    %1424 = vmatpush1.bf16.xpose.msra.mxu0 0
    %1425 = vmatprep.subr.bf16.mxu0 0
    %1426 = vmatpush1.bf16.xpose.msra.mxu0 0
    %1427 = vmatprep.subr.bf16.mxu0 0
    %1428 = vmatpush1.bf16.xpose.msra.mxu0 0
    %1429 = vmatprep.subr.bf16.mxu0 0
    %1430 = vmatpush1.bf16.xpose.msra.mxu0 0
    %1431 = vmatprep.mubr.bf16.mxu0 0
    %1432 = vmatmul.mubr.bf16.gmra.mrb[0].mxu0 %v1397
    %v1433 = vpop.f32.mrb[0].mxu0
    %v1434 = vadd.f32 0.0, %v1433
    %v1435 = vpop.f32.mrb[0].mxu0
    %v1436 = vpop.f32.mrb[0].mxu0
    %v1437 = vpop.f32.mrb[0].mxu0
    %1438 = vdwg.mxu0
    %vm1439 = vcmask 27648
    %v1440 = vsel %vm1439, %v1434, -inf
    %1441 = vmax.xlane.f32.xlu0 %v1440
    %v1442 = vpop.xlane.xlu0 %1441
    %v1443 = vsub.f32 %v1434, %v1442
    %v1444 = vmul.f32 %v1443, 1.442695
    %v1445 = vpow.pop %v1444
    %v1446 = vsel %vm1439, %v1445, 0.0
    %1447 = vadd.xlane.f32.xlu0 %v1446
    %v1448 = vpop.xlane.xlu0 %1447
    %v1449 = vrcp.pop %v1448
    %v1450 = vmul.f32 %v1445, %v1449
    %v1451 = vpack.c.bf16 %v1450, %v1450
    %v1452 = vpack.c.bf16 %v1392, %v1392
    %vm1453 = vcmask 31744
    %v1455 = vsel %vm1453, %v1451, 0
    %vm1457 = vcmask 1041408
    %v1459 = vsel %vm1457, %v1452, 0
    %1461 = vmatprep.subr.bf16.mxu0 0
    %1462 = vmatpush1.bf16.msra.mxu0 %v1459
    %1463 = vmatprep.subr.bf16.mxu0 0
    %1464 = vmatpush1.bf16.msra.mxu0 0
    %1465 = vmatprep.subr.bf16.mxu0 0
    %1466 = vmatpush1.bf16.msra.mxu0 0
    %1467 = vmatprep.subr.bf16.mxu0 0
    %1468 = vmatpush1.bf16.msra.mxu0 0
    %1469 = vmatprep.subr.bf16.mxu0 0
    %1470 = vmatpush1.bf16.msra.mxu0 0
    %1471 = vmatprep.subr.bf16.mxu0 0
    %1472 = vmatpush1.bf16.msra.mxu0 0
    %1473 = vmatprep.subr.bf16.mxu0 0
    %1474 = vmatpush1.bf16.msra.mxu0 0
    %1475 = vmatprep.subr.bf16.mxu0 0
    %1476 = vmatpush1.bf16.msra.mxu0 0
    %1477 = vmatprep.subr.bf16.mxu0 0
    %1478 = vmatpush1.bf16.msra.mxu0 0
    %1479 = vmatprep.subr.bf16.mxu0 0
    %1480 = vmatpush1.bf16.msra.mxu0 0
    %1481 = vmatprep.subr.bf16.mxu0 0
    %1482 = vmatpush1.bf16.msra.mxu0 0
    %1483 = vmatprep.subr.bf16.mxu0 0
    %1484 = vmatpush1.bf16.msra.mxu0 0
    %1485 = vmatprep.subr.bf16.mxu0 0
    %1486 = vmatpush1.bf16.msra.mxu0 0
    %1487 = vmatprep.subr.bf16.mxu0 0
    %1488 = vmatpush1.bf16.msra.mxu0 0
    %1489 = vmatprep.subr.bf16.mxu0 0
    %1490 = vmatpush1.bf16.msra.mxu0 0
    %1491 = vmatprep.subr.bf16.mxu0 0
    %1492 = vmatpush1.bf16.msra.mxu0 0
    %1493 = vmatprep.mubr.bf16.mxu0 0
    %1494 = vmatmul.mubr.bf16.gmra.mrb[0].mxu0 %v1455
    %v1495 = vpop.f32.mrb[0].mxu0
    %v1496 = vadd.f32 0.0, %v1495
    %v1497 = vpop.f32.mrb[0].mxu0
    %v1498 = vpop.f32.mrb[0].mxu0
    %v1499 = vpop.f32.mrb[0].mxu0
    %1500 = vdwg.mxu0
    %vm1501 = vcmask 1043456
    %v1502 = vsel %vm1501, %v1496, 0.0
    %v1503 = vrot.slane %v1502, 4
    %v1504 = vadd.f32 %v1502, %v1503
    %v1505 = vrot.slane %v1504, 2
    %v1506 = vadd.f32 %v1504, %v1505
    %v1507 = vrot.slane %v1506, 1
    %v1508 = vadd.f32 %v1506, %v1507
    %v1509 = vrcp.pop 4.0
    %v1510 = vmul.f32 %v1508, %v1509
    %s1511 = scalar_lea.vmem [#allocation2], 8
    %v1512 = vld [vmem:[%s1511] sm:$0xff]
    %v1513 = vpack.c.bf16 %v1512, %v1512
    %1514 = vmatprep.subr.bf16.mxu0 0
    %1515 = vmatpush1.bf16.msra.mxu0 %v153
    %1516 = vmatprep.subr.bf16.mxu0 0
    %1517 = vmatpush1.bf16.msra.mxu0 %v154
    %1518 = vmatprep.subr.bf16.mxu0 0
    %1519 = vmatpush1.bf16.msra.mxu0 %v155
    %1520 = vmatprep.subr.bf16.mxu0 0
    %1521 = vmatpush1.bf16.msra.mxu0 %v156
    %1522 = vmatprep.subr.bf16.mxu0 0
    %1523 = vmatpush1.bf16.msra.mxu0 %v157
    %1524 = vmatprep.subr.bf16.mxu0 0
    %1525 = vmatpush1.bf16.msra.mxu0 %v158
    %1526 = vmatprep.subr.bf16.mxu0 0
    %1527 = vmatpush1.bf16.msra.mxu0 %v159
    %1528 = vmatprep.subr.bf16.mxu0 0
    %1529 = vmatpush1.bf16.msra.mxu0 %v160
    %1530 = vmatprep.subr.bf16.mxu0 0
    %1531 = vmatpush1.bf16.msra.mxu0 0
    %1532 = vmatprep.subr.bf16.mxu0 0
    %1533 = vmatpush1.bf16.msra.mxu0 0
    %1534 = vmatprep.subr.bf16.mxu0 0
    %1535 = vmatpush1.bf16.msra.mxu0 0
    %1536 = vmatprep.subr.bf16.mxu0 0
    %1537 = vmatpush1.bf16.msra.mxu0 0
    %1538 = vmatprep.subr.bf16.mxu0 0
    %1539 = vmatpush1.bf16.msra.mxu0 0
    %1540 = vmatprep.subr.bf16.mxu0 0
    %1541 = vmatpush1.bf16.msra.mxu0 0
    %1542 = vmatprep.subr.bf16.mxu0 0
    %1543 = vmatpush1.bf16.msra.mxu0 0
    %1544 = vmatprep.subr.bf16.mxu0 0
    %1545 = vmatpush1.bf16.msra.mxu0 0
    %1546 = vmatprep.mubr.bf16.mxu0 0
    %1547 = vmatmul.mubr.bf16.gmra.mrb[0].mxu0 %v1513
    %v1548 = vpop.f32.mrb[0].mxu0
    %v1549 = vadd.f32 0.0, %v1548
    %v1550 = vpop.f32.mrb[0].mxu0
    %v1551 = vpop.f32.mrb[0].mxu0
    %v1552 = vpop.f32.mrb[0].mxu0
    %1553 = vdwg.mxu0
    %v1554 = vadd.f32 %v213, %v1549
    %v1556 = vshrl.u32 %v1513, 16
    %v1558 = vshll.u32 %v1513, 16
    %v1560 = vrot.slane %v1558, 1
    %v1561 = vor.u32 %v1556, %v1560
    %1563 = vmatprep.subr.bf16.mxu0 0
    %1564 = vmatpush1.bf16.msra.mxu0 %v273
    %1565 = vmatprep.subr.bf16.mxu0 0
    %1566 = vmatpush1.bf16.msra.mxu0 %v274
    %1567 = vmatprep.subr.bf16.mxu0 0
    %1568 = vmatpush1.bf16.msra.mxu0 %v275
    %1569 = vmatprep.subr.bf16.mxu0 0
    %1570 = vmatpush1.bf16.msra.mxu0 %v276
    %1571 = vmatprep.subr.bf16.mxu0 0
    %1572 = vmatpush1.bf16.msra.mxu0 %v277
    %1573 = vmatprep.subr.bf16.mxu0 0
    %1574 = vmatpush1.bf16.msra.mxu0 %v278
    %1575 = vmatprep.subr.bf16.mxu0 0
    %1576 = vmatpush1.bf16.msra.mxu0 %v279
    %1577 = vmatprep.subr.bf16.mxu0 0
    %1578 = vmatpush1.bf16.msra.mxu0 %v280
    %1579 = vmatprep.subr.bf16.mxu0 0
    %1580 = vmatpush1.bf16.msra.mxu0 0
    %1581 = vmatprep.subr.bf16.mxu0 0
    %1582 = vmatpush1.bf16.msra.mxu0 0
    %1583 = vmatprep.subr.bf16.mxu0 0
    %1584 = vmatpush1.bf16.msra.mxu0 0
    %1585 = vmatprep.subr.bf16.mxu0 0
    %1586 = vmatpush1.bf16.msra.mxu0 0
    %1587 = vmatprep.subr.bf16.mxu0 0
    %1588 = vmatpush1.bf16.msra.mxu0 0
    %1589 = vmatprep.subr.bf16.mxu0 0
    %1590 = vmatpush1.bf16.msra.mxu0 0
    %1591 = vmatprep.subr.bf16.mxu0 0
    %1592 = vmatpush1.bf16.msra.mxu0 0
    %1593 = vmatprep.subr.bf16.mxu0 0
    %1594 = vmatpush1.bf16.msra.mxu0 0
    %1595 = vmatprep.mubr.bf16.mxu0 0
    %1596 = vmatmul.mubr.bf16.gmra.mrb[0].mxu0 %v1561
    %v1597 = vpop.f32.mrb[0].mxu0
    %v1598 = vadd.f32 0.0, %v1597
    %v1599 = vpop.f32.mrb[0].mxu0
    %v1600 = vpop.f32.mrb[0].mxu0
    %v1601 = vpop.f32.mrb[0].mxu0
    %1602 = vdwg.mxu0
    %v1603 = vadd.f32 %v1554, %v1598
    %v1605 = vrot.slane %v1513, 1
    %1607 = vmatprep.subr.bf16.mxu0 0
    %1608 = vmatpush1.bf16.msra.mxu0 %v382
    %1609 = vmatprep.subr.bf16.mxu0 0
    %1610 = vmatpush1.bf16.msra.mxu0 %v383
    %1611 = vmatprep.subr.bf16.mxu0 0
    %1612 = vmatpush1.bf16.msra.mxu0 %v384
    %1613 = vmatprep.subr.bf16.mxu0 0
    %1614 = vmatpush1.bf16.msra.mxu0 %v385
    %1615 = vmatprep.subr.bf16.mxu0 0
    %1616 = vmatpush1.bf16.msra.mxu0 %v386
    %1617 = vmatprep.subr.bf16.mxu0 0
    %1618 = vmatpush1.bf16.msra.mxu0 %v387
    %1619 = vmatprep.subr.bf16.mxu0 0
    %1620 = vmatpush1.bf16.msra.mxu0 %v388
    %1621 = vmatprep.subr.bf16.mxu0 0
    %1622 = vmatpush1.bf16.msra.mxu0 %v389
    %1623 = vmatprep.subr.bf16.mxu0 0
    %1624 = vmatpush1.bf16.msra.mxu0 0
    %1625 = vmatprep.subr.bf16.mxu0 0
    %1626 = vmatpush1.bf16.msra.mxu0 0
    %1627 = vmatprep.subr.bf16.mxu0 0
    %1628 = vmatpush1.bf16.msra.mxu0 0
    %1629 = vmatprep.subr.bf16.mxu0 0
    %1630 = vmatpush1.bf16.msra.mxu0 0
    %1631 = vmatprep.subr.bf16.mxu0 0
    %1632 = vmatpush1.bf16.msra.mxu0 0
    %1633 = vmatprep.subr.bf16.mxu0 0
    %1634 = vmatpush1.bf16.msra.mxu0 0
    %1635 = vmatprep.subr.bf16.mxu0 0
    %1636 = vmatpush1.bf16.msra.mxu0 0
    %1637 = vmatprep.subr.bf16.mxu0 0
    %1638 = vmatpush1.bf16.msra.mxu0 0
    %1639 = vmatprep.mubr.bf16.mxu0 0
    %1640 = vmatmul.mubr.bf16.gmra.mrb[0].mxu0 %v1605
    %v1641 = vpop.f32.mrb[0].mxu0
    %v1642 = vadd.f32 0.0, %v1641
    %v1643 = vpop.f32.mrb[0].mxu0
    %v1644 = vpop.f32.mrb[0].mxu0
    %v1645 = vpop.f32.mrb[0].mxu0
    %1646 = vdwg.mxu0
    %v1647 = vadd.f32 %v1603, %v1642
    %v1648 = vpack.c.bf16 %v1647, %v1647
    %1649 = vmatprep.subr.bf16.mxu0 %v570
    %1650 = vmatpush1.bf16.msra.mxu0 %v569
    %1651 = vmatprep.subr.bf16.mxu0 %v573
    %1652 = vmatpush1.bf16.msra.mxu0 %v572
    %1653 = vmatprep.subr.bf16.mxu0 %v576
    %1654 = vmatpush1.bf16.msra.mxu0 %v575
    %1655 = vmatprep.subr.bf16.mxu0 %v579
    %1656 = vmatpush1.bf16.msra.mxu0 %v578
    %1657 = vmatprep.subr.bf16.mxu0 %v582
    %1658 = vmatpush1.bf16.msra.mxu0 %v581
    %1659 = vmatprep.subr.bf16.mxu0 %v585
    %1660 = vmatpush1.bf16.msra.mxu0 %v584
    %1661 = vmatprep.subr.bf16.mxu0 %v588
    %1662 = vmatpush1.bf16.msra.mxu0 %v587
    %1663 = vmatprep.subr.bf16.mxu0 %v591
    %1664 = vmatpush1.bf16.msra.mxu0 %v590
    %1665 = vmatprep.subr.bf16.mxu0 0
    %1666 = vmatpush1.bf16.msra.mxu0 0
    %1667 = vmatprep.subr.bf16.mxu0 0
    %1668 = vmatpush1.bf16.msra.mxu0 0
    %1669 = vmatprep.subr.bf16.mxu0 0
    %1670 = vmatpush1.bf16.msra.mxu0 0
    %1671 = vmatprep.subr.bf16.mxu0 0
    %1672 = vmatpush1.bf16.msra.mxu0 0
    %1673 = vmatprep.subr.bf16.mxu0 0
    %1674 = vmatpush1.bf16.msra.mxu0 0
    %1675 = vmatprep.subr.bf16.mxu0 0
    %1676 = vmatpush1.bf16.msra.mxu0 0
    %1677 = vmatprep.subr.bf16.mxu0 0
    %1678 = vmatpush1.bf16.msra.mxu0 0
    %1679 = vmatprep.subr.bf16.mxu0 0
    %1680 = vmatpush1.bf16.msra.mxu0 0
    %1681 = vmatprep.mubr.bf16.mxu0 0
    %1682 = vmatmul.mubr.bf16.gmra.mrb[0].mxu0 %v1648
    %v1683 = vpop.f32.mrb[0].mxu0
    %v1684 = vadd.f32 %v477, %v1683
    %v1685 = vpop.f32.mrb[0].mxu0
    %v1686 = vadd.f32 %v481, %v1685
    %v1687 = vpop.f32.mrb[0].mxu0
    %v1688 = vpop.f32.mrb[0].mxu0
    %1689 = vdwg.mxu0
    %1690 = vmatprep.subr.bf16.mxu0 0
    %1691 = vmatpush1.bf16.msra.mxu0 %v571
    %1692 = vmatprep.subr.bf16.mxu0 0
    %1693 = vmatpush1.bf16.msra.mxu0 %v574
    %1694 = vmatprep.subr.bf16.mxu0 0
    %1695 = vmatpush1.bf16.msra.mxu0 %v577
    %1696 = vmatprep.subr.bf16.mxu0 0
    %1697 = vmatpush1.bf16.msra.mxu0 %v580
    %1698 = vmatprep.subr.bf16.mxu0 0
    %1699 = vmatpush1.bf16.msra.mxu0 %v583
    %1700 = vmatprep.subr.bf16.mxu0 0
    %1701 = vmatpush1.bf16.msra.mxu0 %v586
    %1702 = vmatprep.subr.bf16.mxu0 0
    %1703 = vmatpush1.bf16.msra.mxu0 %v589
    %1704 = vmatprep.subr.bf16.mxu0 0
    %1705 = vmatpush1.bf16.msra.mxu0 %v592
    %1706 = vmatprep.subr.bf16.mxu0 0
    %1707 = vmatpush1.bf16.msra.mxu0 0
    %1708 = vmatprep.subr.bf16.mxu0 0
    %1709 = vmatpush1.bf16.msra.mxu0 0
    %1710 = vmatprep.subr.bf16.mxu0 0
    %1711 = vmatpush1.bf16.msra.mxu0 0
    %1712 = vmatprep.subr.bf16.mxu0 0
    %1713 = vmatpush1.bf16.msra.mxu0 0
    %1714 = vmatprep.subr.bf16.mxu0 0
    %1715 = vmatpush1.bf16.msra.mxu0 0
    %1716 = vmatprep.subr.bf16.mxu0 0
    %1717 = vmatpush1.bf16.msra.mxu0 0
    %1718 = vmatprep.subr.bf16.mxu0 0
    %1719 = vmatpush1.bf16.msra.mxu0 0
    %1720 = vmatprep.subr.bf16.mxu0 0
    %1721 = vmatpush1.bf16.msra.mxu0 0
    %1722 = vmatprep.mubr.bf16.mxu0 0
    %1723 = vmatmul.mubr.bf16.gmra.mrb[0].mxu0 %v1648
    %v1724 = vpop.f32.mrb[0].mxu0
    %v1725 = vadd.f32 %v485, %v1724
    %v1726 = vpop.f32.mrb[0].mxu0
    %v1727 = vpop.f32.mrb[0].mxu0
    %v1728 = vpop.f32.mrb[0].mxu0
    %1729 = vdwg.mxu0
    %v1730 = vpack.c.bf16 %v1684, %v1684
    %v1731 = vpack.c.bf16 %v1686, %v1686
    %1732 = vmatprep.subr.bf16.mxu0 0
    %1733 = vmatpush1.bf16.xpose.msra.mxu0 %v1731
    %1734 = vmatprep.subr.bf16.mxu0 0
    %1735 = vmatpush1.bf16.xpose.msra.mxu0 0
    %1736 = vmatprep.subr.bf16.mxu0 0
    %1737 = vmatpush1.bf16.xpose.msra.mxu0 0
    %1738 = vmatprep.subr.bf16.mxu0 0
    %1739 = vmatpush1.bf16.xpose.msra.mxu0 0
    %1740 = vmatprep.subr.bf16.mxu0 0
    %1741 = vmatpush1.bf16.xpose.msra.mxu0 0
    %1742 = vmatprep.subr.bf16.mxu0 0
    %1743 = vmatpush1.bf16.xpose.msra.mxu0 0
    %1744 = vmatprep.subr.bf16.mxu0 0
    %1745 = vmatpush1.bf16.xpose.msra.mxu0 0
    %1746 = vmatprep.subr.bf16.mxu0 0
    %1747 = vmatpush1.bf16.xpose.msra.mxu0 0
    %1748 = vmatprep.subr.bf16.mxu0 0
    %1749 = vmatpush1.bf16.xpose.msra.mxu0 0
    %1750 = vmatprep.subr.bf16.mxu0 0
    %1751 = vmatpush1.bf16.xpose.msra.mxu0 0
    %1752 = vmatprep.subr.bf16.mxu0 0
    %1753 = vmatpush1.bf16.xpose.msra.mxu0 0
    %1754 = vmatprep.subr.bf16.mxu0 0
    %1755 = vmatpush1.bf16.xpose.msra.mxu0 0
    %1756 = vmatprep.subr.bf16.mxu0 0
    %1757 = vmatpush1.bf16.xpose.msra.mxu0 0
    %1758 = vmatprep.subr.bf16.mxu0 0
    %1759 = vmatpush1.bf16.xpose.msra.mxu0 0
    %1760 = vmatprep.subr.bf16.mxu0 0
    %1761 = vmatpush1.bf16.xpose.msra.mxu0 0
    %1762 = vmatprep.subr.bf16.mxu0 0
    %1763 = vmatpush1.bf16.xpose.msra.mxu0 0
    %1764 = vmatprep.mubr.bf16.mxu0 0
    %1765 = vmatmul.mubr.bf16.gmra.mrb[0].mxu0 %v1730
    %v1766 = vpop.f32.mrb[0].mxu0
    %v1767 = vadd.f32 0.0, %v1766
    %v1768 = vpop.f32.mrb[0].mxu0
    %v1769 = vpop.f32.mrb[0].mxu0
    %v1770 = vpop.f32.mrb[0].mxu0
    %1771 = vdwg.mxu0
    %v1772 = vsel %vm740, %v1767, -inf
    %1773 = vmax.xlane.f32.xlu0 %v1772
    %v1774 = vpop.xlane.xlu0 %1773
    %v1775 = vsub.f32 %v1767, %v1774
    %v1776 = vmul.f32 %v1775, 1.442695
    %v1777 = vpow.pop %v1776
    %v1778 = vsel %vm740, %v1777, 0.0
    %1779 = vadd.xlane.f32.xlu0 %v1778
    %v1780 = vpop.xlane.xlu0 %1779
    %v1781 = vrcp.pop %v1780
    %v1782 = vmul.f32 %v1777, %v1781
    %v1783 = vpack.c.bf16 %v1782, %v1782
    %v1784 = vpack.c.bf16 %v1725, %v1725
    %v1786 = vsel %vm754, %v1783, 0
    %v1789 = vsel %vm758, %v1784, 0
    %1791 = vmatprep.subr.bf16.mxu0 0
    %1792 = vmatpush1.bf16.msra.mxu0 %v1789
    %1793 = vmatprep.subr.bf16.mxu0 0
    %1794 = vmatpush1.bf16.msra.mxu0 0
    %1795 = vmatprep.subr.bf16.mxu0 0
    %1796 = vmatpush1.bf16.msra.mxu0 0
    %1797 = vmatprep.subr.bf16.mxu0 0
    %1798 = vmatpush1.bf16.msra.mxu0 0
    %1799 = vmatprep.subr.bf16.mxu0 0
    %1800 = vmatpush1.bf16.msra.mxu0 0
    %1801 = vmatprep.subr.bf16.mxu0 0
    %1802 = vmatpush1.bf16.msra.mxu0 0
    %1803 = vmatprep.subr.bf16.mxu0 0
    %1804 = vmatpush1.bf16.msra.mxu0 0
    %1805 = vmatprep.subr.bf16.mxu0 0
    %1806 = vmatpush1.bf16.msra.mxu0 0
    %1807 = vmatprep.subr.bf16.mxu0 0
    %1808 = vmatpush1.bf16.msra.mxu0 0
    %1809 = vmatprep.subr.bf16.mxu0 0
    %1810 = vmatpush1.bf16.msra.mxu0 0
    %1811 = vmatprep.subr.bf16.mxu0 0
    %1812 = vmatpush1.bf16.msra.mxu0 0
    %1813 = vmatprep.subr.bf16.mxu0 0
    %1814 = vmatpush1.bf16.msra.mxu0 0
    %1815 = vmatprep.subr.bf16.mxu0 0
    %1816 = vmatpush1.bf16.msra.mxu0 0
    %1817 = vmatprep.subr.bf16.mxu0 0
    %1818 = vmatpush1.bf16.msra.mxu0 0
    %1819 = vmatprep.subr.bf16.mxu0 0
    %1820 = vmatpush1.bf16.msra.mxu0 0
    %1821 = vmatprep.subr.bf16.mxu0 0
    %1822 = vmatpush1.bf16.msra.mxu0 0
    %1823 = vmatprep.mubr.bf16.mxu0 0
    %1824 = vmatmul.mubr.bf16.gmra.mrb[0].mxu0 %v1786
    %v1825 = vpop.f32.mrb[0].mxu0
    %v1826 = vadd.f32 0.0, %v1825
    %v1827 = vpop.f32.mrb[0].mxu0
    %v1828 = vpop.f32.mrb[0].mxu0
    %v1829 = vpop.f32.mrb[0].mxu0
    %1830 = vdwg.mxu0
    %v1831 = vpack.c.bf16 %v1826, %v1826
    %1832 = vmatprep.subr.bf16.mxu0 0
    %1833 = vmatpush1.bf16.msra.mxu0 %v852
    %1834 = vmatprep.subr.bf16.mxu0 0
    %1835 = vmatpush1.bf16.msra.mxu0 %v853
    %1836 = vmatprep.subr.bf16.mxu0 0
    %1837 = vmatpush1.bf16.msra.mxu0 %v854
    %1838 = vmatprep.subr.bf16.mxu0 0
    %1839 = vmatpush1.bf16.msra.mxu0 %v855
    %1840 = vmatprep.subr.bf16.mxu0 0
    %1841 = vmatpush1.bf16.msra.mxu0 %v856
    %1842 = vmatprep.subr.bf16.mxu0 0
    %1843 = vmatpush1.bf16.msra.mxu0 %v857
    %1844 = vmatprep.subr.bf16.mxu0 0
    %1845 = vmatpush1.bf16.msra.mxu0 %v858
    %1846 = vmatprep.subr.bf16.mxu0 0
    %1847 = vmatpush1.bf16.msra.mxu0 %v859
    %1848 = vmatprep.subr.bf16.mxu0 0
    %1849 = vmatpush1.bf16.msra.mxu0 0
    %1850 = vmatprep.subr.bf16.mxu0 0
    %1851 = vmatpush1.bf16.msra.mxu0 0
    %1852 = vmatprep.subr.bf16.mxu0 0
    %1853 = vmatpush1.bf16.msra.mxu0 0
    %1854 = vmatprep.subr.bf16.mxu0 0
    %1855 = vmatpush1.bf16.msra.mxu0 0
    %1856 = vmatprep.subr.bf16.mxu0 0
    %1857 = vmatpush1.bf16.msra.mxu0 0
    %1858 = vmatprep.subr.bf16.mxu0 0
    %1859 = vmatpush1.bf16.msra.mxu0 0
    %1860 = vmatprep.subr.bf16.mxu0 0
    %1861 = vmatpush1.bf16.msra.mxu0 0
    %1862 = vmatprep.subr.bf16.mxu0 0
    %1863 = vmatpush1.bf16.msra.mxu0 0
    %1864 = vmatprep.mubr.bf16.mxu0 0
    %1865 = vmatmul.mubr.bf16.gmra.mrb[0].mxu0 %v1831
    %v1866 = vpop.f32.mrb[0].mxu0
    %v1867 = vadd.f32 0.0, %v1866
    %v1868 = vpop.f32.mrb[0].mxu0
    %v1869 = vpop.f32.mrb[0].mxu0
    %v1870 = vpop.f32.mrb[0].mxu0
    %1871 = vdwg.mxu0
    %v1872 = vadd.f32 %v912, %v1867
    %v1874 = vshrl.u32 %v1831, 16
    %v1876 = vshll.u32 %v1831, 16
    %v1878 = vrot.slane %v1876, 1
    %v1879 = vor.u32 %v1874, %v1878
    %1881 = vmatprep.subr.bf16.mxu0 0
    %1882 = vmatpush1.bf16.msra.mxu0 %v972
    %1883 = vmatprep.subr.bf16.mxu0 0
    %1884 = vmatpush1.bf16.msra.mxu0 %v973
    %1885 = vmatprep.subr.bf16.mxu0 0
    %1886 = vmatpush1.bf16.msra.mxu0 %v974
    %1887 = vmatprep.subr.bf16.mxu0 0
    %1888 = vmatpush1.bf16.msra.mxu0 %v975
    %1889 = vmatprep.subr.bf16.mxu0 0
    %1890 = vmatpush1.bf16.msra.mxu0 %v976
    %1891 = vmatprep.subr.bf16.mxu0 0
    %1892 = vmatpush1.bf16.msra.mxu0 %v977
    %1893 = vmatprep.subr.bf16.mxu0 0
    %1894 = vmatpush1.bf16.msra.mxu0 %v978
    %1895 = vmatprep.subr.bf16.mxu0 0
    %1896 = vmatpush1.bf16.msra.mxu0 %v979
    %1897 = vmatprep.subr.bf16.mxu0 0
    %1898 = vmatpush1.bf16.msra.mxu0 0
    %1899 = vmatprep.subr.bf16.mxu0 0
    %1900 = vmatpush1.bf16.msra.mxu0 0
    %1901 = vmatprep.subr.bf16.mxu0 0
    %1902 = vmatpush1.bf16.msra.mxu0 0
    %1903 = vmatprep.subr.bf16.mxu0 0
    %1904 = vmatpush1.bf16.msra.mxu0 0
    %1905 = vmatprep.subr.bf16.mxu0 0
    %1906 = vmatpush1.bf16.msra.mxu0 0
    %1907 = vmatprep.subr.bf16.mxu0 0
    %1908 = vmatpush1.bf16.msra.mxu0 0
    %1909 = vmatprep.subr.bf16.mxu0 0
    %1910 = vmatpush1.bf16.msra.mxu0 0
    %1911 = vmatprep.subr.bf16.mxu0 0
    %1912 = vmatpush1.bf16.msra.mxu0 0
    %1913 = vmatprep.mubr.bf16.mxu0 0
    %1914 = vmatmul.mubr.bf16.gmra.mrb[0].mxu0 %v1879
    %v1915 = vpop.f32.mrb[0].mxu0
    %v1916 = vadd.f32 0.0, %v1915
    %v1917 = vpop.f32.mrb[0].mxu0
    %v1918 = vpop.f32.mrb[0].mxu0
    %v1919 = vpop.f32.mrb[0].mxu0
    %1920 = vdwg.mxu0
    %v1921 = vadd.f32 %v1872, %v1916
    %v1923 = vrot.slane %v1831, 1
    %1925 = vmatprep.subr.bf16.mxu0 0
    %1926 = vmatpush1.bf16.msra.mxu0 %v1081
    %1927 = vmatprep.subr.bf16.mxu0 0
    %1928 = vmatpush1.bf16.msra.mxu0 %v1082
    %1929 = vmatprep.subr.bf16.mxu0 0
    %1930 = vmatpush1.bf16.msra.mxu0 %v1083
    %1931 = vmatprep.subr.bf16.mxu0 0
    %1932 = vmatpush1.bf16.msra.mxu0 %v1084
    %1933 = vmatprep.subr.bf16.mxu0 0
    %1934 = vmatpush1.bf16.msra.mxu0 %v1085
    %1935 = vmatprep.subr.bf16.mxu0 0
    %1936 = vmatpush1.bf16.msra.mxu0 %v1086
    %1937 = vmatprep.subr.bf16.mxu0 0
    %1938 = vmatpush1.bf16.msra.mxu0 %v1087
    %1939 = vmatprep.subr.bf16.mxu0 0
    %1940 = vmatpush1.bf16.msra.mxu0 %v1088
    %1941 = vmatprep.subr.bf16.mxu0 0
    %1942 = vmatpush1.bf16.msra.mxu0 0
    %1943 = vmatprep.subr.bf16.mxu0 0
    %1944 = vmatpush1.bf16.msra.mxu0 0
    %1945 = vmatprep.subr.bf16.mxu0 0
    %1946 = vmatpush1.bf16.msra.mxu0 0
    %1947 = vmatprep.subr.bf16.mxu0 0
    %1948 = vmatpush1.bf16.msra.mxu0 0
    %1949 = vmatprep.subr.bf16.mxu0 0
    %1950 = vmatpush1.bf16.msra.mxu0 0
    %1951 = vmatprep.subr.bf16.mxu0 0
    %1952 = vmatpush1.bf16.msra.mxu0 0
    %1953 = vmatprep.subr.bf16.mxu0 0
    %1954 = vmatpush1.bf16.msra.mxu0 0
    %1955 = vmatprep.subr.bf16.mxu0 0
    %1956 = vmatpush1.bf16.msra.mxu0 0
    %1957 = vmatprep.mubr.bf16.mxu0 0
    %1958 = vmatmul.mubr.bf16.gmra.mrb[0].mxu0 %v1923
    %v1959 = vpop.f32.mrb[0].mxu0
    %v1960 = vadd.f32 0.0, %v1959
    %v1961 = vpop.f32.mrb[0].mxu0
    %v1962 = vpop.f32.mrb[0].mxu0
    %v1963 = vpop.f32.mrb[0].mxu0
    %1964 = vdwg.mxu0
    %v1965 = vadd.f32 %v1921, %v1960
    %v1966 = vpack.c.bf16 %v1965, %v1965
    %1967 = vmatprep.subr.bf16.mxu0 %v1269
    %1968 = vmatpush1.bf16.msra.mxu0 %v1268
    %1969 = vmatprep.subr.bf16.mxu0 %v1272
    %1970 = vmatpush1.bf16.msra.mxu0 %v1271
    %1971 = vmatprep.subr.bf16.mxu0 %v1275
    %1972 = vmatpush1.bf16.msra.mxu0 %v1274
    %1973 = vmatprep.subr.bf16.mxu0 %v1278
    %1974 = vmatpush1.bf16.msra.mxu0 %v1277
    %1975 = vmatprep.subr.bf16.mxu0 %v1281
    %1976 = vmatpush1.bf16.msra.mxu0 %v1280
    %1977 = vmatprep.subr.bf16.mxu0 %v1284
    %1978 = vmatpush1.bf16.msra.mxu0 %v1283
    %1979 = vmatprep.subr.bf16.mxu0 %v1287
    %1980 = vmatpush1.bf16.msra.mxu0 %v1286
    %1981 = vmatprep.subr.bf16.mxu0 %v1290
    %1982 = vmatpush1.bf16.msra.mxu0 %v1289
    %1983 = vmatprep.subr.bf16.mxu0 0
    %1984 = vmatpush1.bf16.msra.mxu0 0
    %1985 = vmatprep.subr.bf16.mxu0 0
    %1986 = vmatpush1.bf16.msra.mxu0 0
    %1987 = vmatprep.subr.bf16.mxu0 0
    %1988 = vmatpush1.bf16.msra.mxu0 0
    %1989 = vmatprep.subr.bf16.mxu0 0
    %1990 = vmatpush1.bf16.msra.mxu0 0
    %1991 = vmatprep.subr.bf16.mxu0 0
    %1992 = vmatpush1.bf16.msra.mxu0 0
    %1993 = vmatprep.subr.bf16.mxu0 0
    %1994 = vmatpush1.bf16.msra.mxu0 0
    %1995 = vmatprep.subr.bf16.mxu0 0
    %1996 = vmatpush1.bf16.msra.mxu0 0
    %1997 = vmatprep.subr.bf16.mxu0 0
    %1998 = vmatpush1.bf16.msra.mxu0 0
    %1999 = vmatprep.mubr.bf16.mxu0 0
    %2000 = vmatmul.mubr.bf16.gmra.mrb[0].mxu0 %v1966
    %v2001 = vpop.f32.mrb[0].mxu0
    %v2002 = vadd.f32 %v1176, %v2001
    %v2003 = vpop.f32.mrb[0].mxu0
    %v2004 = vadd.f32 %v1180, %v2003
    %v2005 = vpop.f32.mrb[0].mxu0
    %v2006 = vpop.f32.mrb[0].mxu0
    %2007 = vdwg.mxu0
    %2008 = vmatprep.subr.bf16.mxu0 0
    %2009 = vmatpush1.bf16.msra.mxu0 %v1270
    %2010 = vmatprep.subr.bf16.mxu0 0
    %2011 = vmatpush1.bf16.msra.mxu0 %v1273
    %2012 = vmatprep.subr.bf16.mxu0 0
    %2013 = vmatpush1.bf16.msra.mxu0 %v1276
    %2014 = vmatprep.subr.bf16.mxu0 0
    %2015 = vmatpush1.bf16.msra.mxu0 %v1279
    %2016 = vmatprep.subr.bf16.mxu0 0
    %2017 = vmatpush1.bf16.msra.mxu0 %v1282
    %2018 = vmatprep.subr.bf16.mxu0 0
    %2019 = vmatpush1.bf16.msra.mxu0 %v1285
    %2020 = vmatprep.subr.bf16.mxu0 0
    %2021 = vmatpush1.bf16.msra.mxu0 %v1288
    %2022 = vmatprep.subr.bf16.mxu0 0
    %2023 = vmatpush1.bf16.msra.mxu0 %v1291
    %2024 = vmatprep.subr.bf16.mxu0 0
    %2025 = vmatpush1.bf16.msra.mxu0 0
    %2026 = vmatprep.subr.bf16.mxu0 0
    %2027 = vmatpush1.bf16.msra.mxu0 0
    %2028 = vmatprep.subr.bf16.mxu0 0
    %2029 = vmatpush1.bf16.msra.mxu0 0
    %2030 = vmatprep.subr.bf16.mxu0 0
    %2031 = vmatpush1.bf16.msra.mxu0 0
    %2032 = vmatprep.subr.bf16.mxu0 0
    %2033 = vmatpush1.bf16.msra.mxu0 0
    %2034 = vmatprep.subr.bf16.mxu0 0
    %2035 = vmatpush1.bf16.msra.mxu0 0
    %2036 = vmatprep.subr.bf16.mxu0 0
    %2037 = vmatpush1.bf16.msra.mxu0 0
    %2038 = vmatprep.subr.bf16.mxu0 0
    %2039 = vmatpush1.bf16.msra.mxu0 0
    %2040 = vmatprep.mubr.bf16.mxu0 0
    %2041 = vmatmul.mubr.bf16.gmra.mrb[0].mxu0 %v1966
    %v2042 = vpop.f32.mrb[0].mxu0
    %v2043 = vadd.f32 %v1184, %v2042
    %v2044 = vpop.f32.mrb[0].mxu0
    %v2045 = vpop.f32.mrb[0].mxu0
    %v2046 = vpop.f32.mrb[0].mxu0
    %2047 = vdwg.mxu0
    %v2048 = vpack.c.bf16 %v2002, %v2002
    %v2049 = vpack.c.bf16 %v2004, %v2004
    %2050 = vmatprep.subr.bf16.mxu0 0
    %2051 = vmatpush1.bf16.xpose.msra.mxu0 %v2049
    %2052 = vmatprep.subr.bf16.mxu0 0
    %2053 = vmatpush1.bf16.xpose.msra.mxu0 0
    %2054 = vmatprep.subr.bf16.mxu0 0
    %2055 = vmatpush1.bf16.xpose.msra.mxu0 0
    %2056 = vmatprep.subr.bf16.mxu0 0
    %2057 = vmatpush1.bf16.xpose.msra.mxu0 0
    %2058 = vmatprep.subr.bf16.mxu0 0
    %2059 = vmatpush1.bf16.xpose.msra.mxu0 0
    %2060 = vmatprep.subr.bf16.mxu0 0
    %2061 = vmatpush1.bf16.xpose.msra.mxu0 0
    %2062 = vmatprep.subr.bf16.mxu0 0
    %2063 = vmatpush1.bf16.xpose.msra.mxu0 0
    %2064 = vmatprep.subr.bf16.mxu0 0
    %2065 = vmatpush1.bf16.xpose.msra.mxu0 0
    %2066 = vmatprep.subr.bf16.mxu0 0
    %2067 = vmatpush1.bf16.xpose.msra.mxu0 0
    %2068 = vmatprep.subr.bf16.mxu0 0
    %2069 = vmatpush1.bf16.xpose.msra.mxu0 0
    %2070 = vmatprep.subr.bf16.mxu0 0
    %2071 = vmatpush1.bf16.xpose.msra.mxu0 0
    %2072 = vmatprep.subr.bf16.mxu0 0
    %2073 = vmatpush1.bf16.xpose.msra.mxu0 0
    %2074 = vmatprep.subr.bf16.mxu0 0
    %2075 = vmatpush1.bf16.xpose.msra.mxu0 0
    %2076 = vmatprep.subr.bf16.mxu0 0
    %2077 = vmatpush1.bf16.xpose.msra.mxu0 0
    %2078 = vmatprep.subr.bf16.mxu0 0
    %2079 = vmatpush1.bf16.xpose.msra.mxu0 0
    %2080 = vmatprep.subr.bf16.mxu0 0
    %2081 = vmatpush1.bf16.xpose.msra.mxu0 0
    %2082 = vmatprep.mubr.bf16.mxu0 0
    %2083 = vmatmul.mubr.bf16.gmra.mrb[0].mxu0 %v2048
    %v2084 = vpop.f32.mrb[0].mxu0
    %v2085 = vadd.f32 0.0, %v2084
    %v2086 = vpop.f32.mrb[0].mxu0
    %v2087 = vpop.f32.mrb[0].mxu0
    %v2088 = vpop.f32.mrb[0].mxu0
    %2089 = vdwg.mxu0
    %v2090 = vsel %vm1439, %v2085, -inf
    %2091 = vmax.xlane.f32.xlu0 %v2090
    %v2092 = vpop.xlane.xlu0 %2091
    %v2093 = vsub.f32 %v2085, %v2092
    %v2094 = vmul.f32 %v2093, 1.442695
    %v2095 = vpow.pop %v2094
    %v2096 = vsel %vm1439, %v2095, 0.0
    %2097 = vadd.xlane.f32.xlu0 %v2096
    %v2098 = vpop.xlane.xlu0 %2097
    %v2099 = vrcp.pop %v2098
    %v2100 = vmul.f32 %v2095, %v2099
    %v2101 = vpack.c.bf16 %v2100, %v2100
    %v2102 = vpack.c.bf16 %v2043, %v2043
    %v2104 = vsel %vm1453, %v2101, 0
    %v2107 = vsel %vm1457, %v2102, 0
    %2109 = vmatprep.subr.bf16.mxu0 0
    %2110 = vmatpush1.bf16.msra.mxu0 %v2107
    %2111 = vmatprep.subr.bf16.mxu0 0
    %2112 = vmatpush1.bf16.msra.mxu0 0
    %2113 = vmatprep.subr.bf16.mxu0 0
    %2114 = vmatpush1.bf16.msra.mxu0 0
    %2115 = vmatprep.subr.bf16.mxu0 0
    %2116 = vmatpush1.bf16.msra.mxu0 0
    %2117 = vmatprep.subr.bf16.mxu0 0
    %2118 = vmatpush1.bf16.msra.mxu0 0
    %2119 = vmatprep.subr.bf16.mxu0 0
    %2120 = vmatpush1.bf16.msra.mxu0 0
    %2121 = vmatprep.subr.bf16.mxu0 0
    %2122 = vmatpush1.bf16.msra.mxu0 0
    %2123 = vmatprep.subr.bf16.mxu0 0
    %2124 = vmatpush1.bf16.msra.mxu0 0
    %2125 = vmatprep.subr.bf16.mxu0 0
    %2126 = vmatpush1.bf16.msra.mxu0 0
    %2127 = vmatprep.subr.bf16.mxu0 0
    %2128 = vmatpush1.bf16.msra.mxu0 0
    %2129 = vmatprep.subr.bf16.mxu0 0
    %2130 = vmatpush1.bf16.msra.mxu0 0
    %2131 = vmatprep.subr.bf16.mxu0 0
    %2132 = vmatpush1.bf16.msra.mxu0 0
    %2133 = vmatprep.subr.bf16.mxu0 0
    %2134 = vmatpush1.bf16.msra.mxu0 0
    %2135 = vmatprep.subr.bf16.mxu0 0
    %2136 = vmatpush1.bf16.msra.mxu0 0
    %2137 = vmatprep.subr.bf16.mxu0 0
    %2138 = vmatpush1.bf16.msra.mxu0 0
    %2139 = vmatprep.subr.bf16.mxu0 0
    %2140 = vmatpush1.bf16.msra.mxu0 0
    %2141 = vmatprep.mubr.bf16.mxu0 0
    %2142 = vmatmul.mubr.bf16.gmra.mrb[0].mxu0 %v2104
    %v2143 = vpop.f32.mrb[0].mxu0
    %v2144 = vadd.f32 0.0, %v2143
    %v2145 = vpop.f32.mrb[0].mxu0
    %v2146 = vpop.f32.mrb[0].mxu0
    %v2147 = vpop.f32.mrb[0].mxu0
    %2148 = vdwg.mxu0
    %v2149 = vsel %vm1501, %v2144, 0.0
    %v2150 = vrot.slane %v2149, 4
    %v2151 = vadd.f32 %v2149, %v2150
    %v2152 = vrot.slane %v2151, 2
    %v2153 = vadd.f32 %v2151, %v2152
    %v2154 = vrot.slane %v2153, 1
    %v2155 = vadd.f32 %v2153, %v2154
    %v2156 = vmul.f32 %v2155, %v1509
    %vm2157 = vcmask 1040384
    %v2158 = vsel %vm2157, %v1510, %v2156
    %2159 = vst [vmem:[#allocation11] sm:$0x3] %v2158
    // Predicated region
    $region58: #{tpu_custom_call.1} parent=1 // pred_check
      _
    $region59: #{tpu_custom_call.1} parent=1 // pred_check_branch
      %2161 = sbr.rel (0) target = $region61
    $region60: #{tpu_custom_call.1} parent=1 // pred_region
      %s2163 = ssub.s32 32, 32
      %2164 = vsyncadd [#allocation4], %s2163
      %s2166 = sshll.u32 [#allocation11], 4
      %s2167 = int_to_ptr.vmem [resolvable:$true] %s2166
      %2169 = dma.vmem_to_hbm [thread:$0]  %s2167, 32, %s9, [#allocation4]
    $region61: #{tpu_custom_call.1} parent=1 // pred_fallthru
      _
    // Predicated region
    $region62: #{tpu_custom_call.1} parent=1 // pred_check
      _
    $region63: #{tpu_custom_call.1} parent=1 // pred_check_branch
      %2171 = sbr.rel (0) target = $region65
    $region64: #{tpu_custom_call.1} parent=1 // pred_region
      %2172 = dma.done [#allocation4], 32
    $region65: #{tpu_custom_call.1} parent=1 // pred_fallthru
      _
    %2173 = vsyncpa [#allocation3], 1
    %2174 = vsyncpa [#allocation6], 1
    %2175 = vsyncpa [#allocation9], 1
    %2176 = vsyncpa [#allocation4], 1

// kernel: tpu_custom_call.1
$region0: #{tpu_custom_call.1}
  #allocation0 [shape = 'u32[]', space=smem, size = 0x4, offset = 0x4, fixed_abs, tag = 'smem constant byte address 0x4 - core index']
  #allocation1 [shape = 'u32[144,128]{1,0:T(1,128)}', space=vmem, size = 0x12000, scoped, tag = 'internal scratch']
  %s0 = inlined_call_operand.hbm [shape: f32[2,8,128], index: 0, kind: input, shape index: {}]
  %s1 = inlined_call_operand.hbm [shape: bf16[3,128,128], index: 1, kind: input, shape index: {}]
  %s2 = inlined_call_operand.vmem [shape: f32[1,128], index: 2, kind: input, shape index: {}]
  %s3 = inlined_call_operand.hbm [shape: bf16[128,384], index: 3, kind: input, shape index: {}]
  %s4 = inlined_call_operand.vmem [shape: f32[1,384], index: 4, kind: input, shape index: {}]
  %s5 = inlined_call_operand.hbm [shape: bf16[3,128,128], index: 5, kind: input, shape index: {}]
  %s6 = inlined_call_operand.vmem [shape: f32[1,128], index: 6, kind: input, shape index: {}]
  %s7 = inlined_call_operand.hbm [shape: bf16[128,384], index: 7, kind: input, shape index: {}]
  %s8 = inlined_call_operand.vmem [shape: f32[1,384], index: 8, kind: input, shape index: {}]
  %s9 = inlined_call_operand.hbm [shape: f32[2,128], index: 9, kind: output, shape index: {}]
  %s10 = sld [smem:[#allocation0]]
  $region66: #{tpu_custom_call.1} parent=0
    _
  %s12 = ssub.s32 1, %s10
  %s13 = scalar_select 0, %s12, %s10
  $region1: #{tpu_custom_call.1} parent=0
    #allocation2 [shape = 'u8[8192]{0}', space=vmem, size = 0x2000, scoped, tag = 'input window, operand 0, single buffered']
    #allocation3 [shape = 's32[1]{0}', space=sflag, size = 0x4, scoped, tag = 'scoped memory for tpu_custom_call.1']
    #allocation4 [shape = 's32[1]{0}', space=sflag, size = 0x4, scoped, tag = 'scoped memory for tpu_custom_call.1']
    #allocation5 [shape = 'u8[98304]{0}', space=vmem, size = 0x18000, scoped, tag = 'input window, operand 1, single buffered']
    #allocation6 [shape = 's32[1]{0}', space=sflag, size = 0x4, scoped, tag = 'scoped memory for tpu_custom_call.1']
    #allocation7 [shape = 'u8[98304]{0}', space=vmem, size = 0x18000, scoped, tag = 'input window, operand 3, single buffered']
    #allocation8 [shape = 'u8[98304]{0}', space=vmem, size = 0x18000, scoped, tag = 'input window, operand 5, single buffered']
    #allocation9 [shape = 's32[1]{0}', space=sflag, size = 0x4, scoped, tag = 'scoped memory for tpu_custom_call.1']
    #allocation10 [shape = 'u8[98304]{0}', space=vmem, size = 0x18000, scoped, tag = 'input window, operand 7, single buffered']
    #allocation11 [shape = 'u8[1024]{0}', space=vmem, size = 0x400, scoped, tag = 'output window, operand 0, single buffered']
    %14 = vsyncpa [#allocation3], 0
    %15 = vsyncpa [#allocation6], 0
    %16 = vsyncpa [#allocation9], 0
    %17 = vsyncpa [#allocation4], 0
    // Predicated region
    $region2: #{tpu_custom_call.1} parent=1 // pred_check
      _
    $region3: #{tpu_custom_call.1} parent=1 // pred_check_branch
      %19 = sbr.rel (0) target = $region5
    $region4: #{tpu_custom_call.1} parent=1 // pred_region
      %s21 = ssub.s32 256, 256
      %22 = vsyncadd [#allocation3], %s21
      %s23 = sshll.u32 [#allocation2], 4
      %s24 = int_to_ptr.vmem [resolvable:$true] %s23
      %29 = dma.hbm_to_vmem [thread:$0]  %s0, 256, %s24, [#allocation3], 128, 128, 8
    $region5: #{tpu_custom_call.1} parent=1 // pred_fallthru
      _
    // Predicated region
    $region6: #{tpu_custom_call.1} parent=1 // pred_check
      _
    $region7: #{tpu_custom_call.1} parent=1 // pred_check_branch
      %31 = sbr.rel (0) target = $region9
    $region8: #{tpu_custom_call.1} parent=1 // pred_region
      %s33 = ssub.s32 3072, 3072
      %34 = vsyncadd [#allocation6], %s33
      %s35 = sshll.u32 [#allocation5], 4
      %s36 = int_to_ptr.vmem [resolvable:$true] %s35
      %41 = dma.hbm_to_vmem [thread:$0]  %s1, 3072, %s36, [#allocation6], 64, 64, 4
    $region9: #{tpu_custom_call.1} parent=1 // pred_fallthru
      _
    // Predicated region
    $region10: #{tpu_custom_call.1} parent=1 // pred_check
      _
    $region11: #{tpu_custom_call.1} parent=1 // pred_check_branch
      %43 = sbr.rel (0) target = $region13
    $region12: #{tpu_custom_call.1} parent=1 // pred_region
      _
    $region13: #{tpu_custom_call.1} parent=1 // pred_fallthru
      _
    // Predicated region
    $region14: #{tpu_custom_call.1} parent=1 // pred_check
      _
    $region15: #{tpu_custom_call.1} parent=1 // pred_check_branch
      %45 = sbr.rel (0) target = $region17
    $region16: #{tpu_custom_call.1} parent=1 // pred_region
      %s47 = ssub.s32 3072, 3072
      %48 = vsyncadd [#allocation6], %s47
      %s49 = sshll.u32 [#allocation7], 4
      %s50 = int_to_ptr.vmem [resolvable:$true] %s49
      %55 = dma.hbm_to_vmem [thread:$0]  %s3, 3072, %s50, [#allocation6], 192, 192, 12
    $region17: #{tpu_custom_call.1} parent=1 // pred_fallthru
      _
    // Predicated region
    $region18: #{tpu_custom_call.1} parent=1 // pred_check
      _
    $region19: #{tpu_custom_call.1} parent=1 // pred_check_branch
      %57 = sbr.rel (0) target = $region21
    $region20: #{tpu_custom_call.1} parent=1 // pred_region
      _
    $region21: #{tpu_custom_call.1} parent=1 // pred_fallthru
      _
    // Predicated region
    $region22: #{tpu_custom_call.1} parent=1 // pred_check
      _
    $region23: #{tpu_custom_call.1} parent=1 // pred_check_branch
      %59 = sbr.rel (0) target = $region25
    $region24: #{tpu_custom_call.1} parent=1 // pred_region
      %s61 = ssub.s32 3072, 3072
      %62 = vsyncadd [#allocation9], %s61
      %s63 = sshll.u32 [#allocation8], 4
      %s64 = int_to_ptr.vmem [resolvable:$true] %s63
      %69 = dma.hbm_to_vmem [thread:$0]  %s5, 3072, %s64, [#allocation9], 64, 64, 4
    $region25: #{tpu_custom_call.1} parent=1 // pred_fallthru
      _
    // Predicated region
    $region26: #{tpu_custom_call.1} parent=1 // pred_check
      _
    $region27: #{tpu_custom_call.1} parent=1 // pred_check_branch
      %71 = sbr.rel (0) target = $region29
    $region28: #{tpu_custom_call.1} parent=1 // pred_region
      _
    $region29: #{tpu_custom_call.1} parent=1 // pred_fallthru
      _
    // Predicated region
    $region30: #{tpu_custom_call.1} parent=1 // pred_check
      _
    $region31: #{tpu_custom_call.1} parent=1 // pred_check_branch
      %73 = sbr.rel (0) target = $region33
    $region32: #{tpu_custom_call.1} parent=1 // pred_region
      %s75 = ssub.s32 3072, 3072
      %76 = vsyncadd [#allocation9], %s75
      %s77 = sshll.u32 [#allocation10], 4
      %s78 = int_to_ptr.vmem [resolvable:$true] %s77
      %83 = dma.hbm_to_vmem [thread:$0]  %s7, 3072, %s78, [#allocation9], 192, 192, 12
    $region33: #{tpu_custom_call.1} parent=1 // pred_fallthru
      _
    // Predicated region
    $region34: #{tpu_custom_call.1} parent=1 // pred_check
      _
    $region35: #{tpu_custom_call.1} parent=1 // pred_check_branch
      %85 = sbr.rel (0) target = $region37
    $region36: #{tpu_custom_call.1} parent=1 // pred_region
      _
    $region37: #{tpu_custom_call.1} parent=1 // pred_fallthru
      _
    // Predicated region
    $region38: #{tpu_custom_call.1} parent=1 // pred_check
      _
    $region39: #{tpu_custom_call.1} parent=1 // pred_check_branch
      %87 = sbr.rel (0) target = $region41
    $region40: #{tpu_custom_call.1} parent=1 // pred_region
      %88 = dma.done [#allocation3], 256
    $region41: #{tpu_custom_call.1} parent=1 // pred_fallthru
      _
    // Predicated region
    $region42: #{tpu_custom_call.1} parent=1 // pred_check
      _
    $region43: #{tpu_custom_call.1} parent=1 // pred_check_branch
      %90 = sbr.rel (0) target = $region45
    $region44: #{tpu_custom_call.1} parent=1 // pred_region
      %91 = dma.done [#allocation6], 3072
    $region45: #{tpu_custom_call.1} parent=1 // pred_fallthru
      _
    // Predicated region
    $region46: #{tpu_custom_call.1} parent=1 // pred_check
      _
    $region47: #{tpu_custom_call.1} parent=1 // pred_check_branch
      %93 = sbr.rel (0) target = $region49
    $region48: #{tpu_custom_call.1} parent=1 // pred_region
      %94 = dma.done [#allocation6], 3072
    $region49: #{tpu_custom_call.1} parent=1 // pred_fallthru
      _
    // Predicated region
    $region50: #{tpu_custom_call.1} parent=1 // pred_check
      _
    $region51: #{tpu_custom_call.1} parent=1 // pred_check_branch
      %96 = sbr.rel (0) target = $region53
    $region52: #{tpu_custom_call.1} parent=1 // pred_region
      %97 = dma.done [#allocation9], 3072
    $region53: #{tpu_custom_call.1} parent=1 // pred_fallthru
      _
    // Predicated region
    $region54: #{tpu_custom_call.1} parent=1 // pred_check
      _
    $region55: #{tpu_custom_call.1} parent=1 // pred_check_branch
      %99 = sbr.rel (0) target = $region57
    $region56: #{tpu_custom_call.1} parent=1 // pred_region
      %100 = dma.done [#allocation9], 3072
    $region57: #{tpu_custom_call.1} parent=1 // pred_fallthru
      _
    %v102 = vld [vmem:[#allocation2] sm:$0xff]
    %v103 = vpack.c.bf16 %v102, %v102
    %v104 = vld [vmem:[%s2] sm:$0x1]
    %v105 = vld [vmem:[#allocation5] sm:$0xf]
    %v106 = vld [vmem:[#allocation5 + $0x4] sm:$0xf]
    %v107 = vld [vmem:[#allocation5 + $0x8] sm:$0xf]
    %v108 = vld [vmem:[#allocation5 + $0xc] sm:$0xf]
    %v109 = vld [vmem:[#allocation5 + $0x10] sm:$0xf]
    %v110 = vld [vmem:[#allocation5 + $0x14] sm:$0xf]
    %v111 = vld [vmem:[#allocation5 + $0x18] sm:$0xf]
    %v112 = vld [vmem:[#allocation5 + $0x1c] sm:$0xf]
    %v113 = vld [vmem:[#allocation5 + $0x20] sm:$0xf]
    %v114 = vld [vmem:[#allocation5 + $0x24] sm:$0xf]
    %v115 = vld [vmem:[#allocation5 + $0x28] sm:$0xf]
    %v116 = vld [vmem:[#allocation5 + $0x2c] sm:$0xf]
    %v117 = vld [vmem:[#allocation5 + $0x30] sm:$0xf]
    %v118 = vld [vmem:[#allocation5 + $0x34] sm:$0xf]
    %v119 = vld [vmem:[#allocation5 + $0x38] sm:$0xf]
    %v120 = vld [vmem:[#allocation5 + $0x3c] sm:$0xf]
    %v137 = vunpack.c.l.b16 %v105
    %v138 = vunpack.c.l.b16 %v106
    %v139 = vunpack.c.l.b16 %v107
    %v140 = vunpack.c.l.b16 %v108
    %v141 = vunpack.c.l.b16 %v109
    %v142 = vunpack.c.l.b16 %v110
    %v143 = vunpack.c.l.b16 %v111
    %v144 = vunpack.c.l.b16 %v112
    %v145 = vunpack.c.l.b16 %v113
    %v146 = vunpack.c.l.b16 %v114
    %v147 = vunpack.c.l.b16 %v115
    %v148 = vunpack.c.l.b16 %v116
    %v149 = vunpack.c.l.b16 %v117
    %v150 = vunpack.c.l.b16 %v118
    %v151 = vunpack.c.l.b16 %v119
    %v152 = vunpack.c.l.b16 %v120
    %v153 = vpack.c.b16 %v138, %v137
    %v154 = vpack.c.b16 %v140, %v139
    %v155 = vpack.c.b16 %v142, %v141
    %v156 = vpack.c.b16 %v144, %v143
    %v157 = vpack.c.b16 %v146, %v145
    %v158 = vpack.c.b16 %v148, %v147
    %v159 = vpack.c.b16 %v150, %v149
    %v160 = vpack.c.b16 %v152, %v151
    %169 = vmatprep.subr.bf16.mxu0 0
    %170 = vmatpush1.bf16.msra.mxu0 %v153
    %171 = vmatprep.subr.bf16.mxu0 0
    %172 = vmatpush1.bf16.msra.mxu0 %v154
    %173 = vmatprep.subr.bf16.mxu0 0
    %174 = vmatpush1.bf16.msra.mxu0 %v155
    %175 = vmatprep.subr.bf16.mxu0 0
    %176 = vmatpush1.bf16.msra.mxu0 %v156
    %177 = vmatprep.subr.bf16.mxu0 0
    %178 = vmatpush1.bf16.msra.mxu0 %v157
    %179 = vmatprep.subr.bf16.mxu0 0
    %180 = vmatpush1.bf16.msra.mxu0 %v158
    %181 = vmatprep.subr.bf16.mxu0 0
    %182 = vmatpush1.bf16.msra.mxu0 %v159
    %183 = vmatprep.subr.bf16.mxu0 0
    %184 = vmatpush1.bf16.msra.mxu0 %v160
    %185 = vmatprep.subr.bf16.mxu0 0
    %186 = vmatpush1.bf16.msra.mxu0 0
    %187 = vmatprep.subr.bf16.mxu0 0
    %188 = vmatpush1.bf16.msra.mxu0 0
    %189 = vmatprep.subr.bf16.mxu0 0
    %190 = vmatpush1.bf16.msra.mxu0 0
    %191 = vmatprep.subr.bf16.mxu0 0
    %192 = vmatpush1.bf16.msra.mxu0 0
    %193 = vmatprep.subr.bf16.mxu0 0
    %194 = vmatpush1.bf16.msra.mxu0 0
    %195 = vmatprep.subr.bf16.mxu0 0
    %196 = vmatpush1.bf16.msra.mxu0 0
    %197 = vmatprep.subr.bf16.mxu0 0
    %198 = vmatpush1.bf16.msra.mxu0 0
    %199 = vmatprep.subr.bf16.mxu0 0
    %200 = vmatpush1.bf16.msra.mxu0 0
    %201 = vmatprep.mubr.bf16.mxu0 0
    %202 = vmatmul.mubr.bf16.gmra.mrb[0].mxu0 %v103
    %v203 = vpop.f32.mrb[0].mxu0
    %v204 = vadd.f32 0.0, %v203
    %v205 = vpop.f32.mrb[0].mxu0
    %v206 = vpop.f32.mrb[0].mxu0
    %v207 = vpop.f32.mrb[0].mxu0
    %208 = vdwg.mxu0
    %v210 = vlaneseq
    %v211 = vshrl.u32 %v210, 7
    %v212 = vsub.s32 0, %v211
    %v213 = vrot.slane %v104, %v212
    %v215 = vadd.f32 %v213, %v204
    %s216 = scalar_lea.vmem [#allocation5], 64
    %v217 = vld [vmem:[%s216] sm:$0xf]
    %v218 = vld [vmem:[%s216 + $0x4] sm:$0xf]
    %v219 = vld [vmem:[%s216 + $0x8] sm:$0xf]
    %v220 = vld [vmem:[%s216 + $0xc] sm:$0xf]
    %v221 = vld [vmem:[%s216 + $0x10] sm:$0xf]
    %v222 = vld [vmem:[%s216 + $0x14] sm:$0xf]
    %v223 = vld [vmem:[%s216 + $0x18] sm:$0xf]
    %v224 = vld [vmem:[%s216 + $0x1c] sm:$0xf]
    %v225 = vld [vmem:[%s216 + $0x20] sm:$0xf]
    %v226 = vld [vmem:[%s216 + $0x24] sm:$0xf]
    %v227 = vld [vmem:[%s216 + $0x28] sm:$0xf]
    %v228 = vld [vmem:[%s216 + $0x2c] sm:$0xf]
    %v229 = vld [vmem:[%s216 + $0x30] sm:$0xf]
    %v230 = vld [vmem:[%s216 + $0x34] sm:$0xf]
    %v231 = vld [vmem:[%s216 + $0x38] sm:$0xf]
    %v232 = vld [vmem:[%s216 + $0x3c] sm:$0xf]
    %v234 = vshrl.u32 %v103, 16
    %v236 = vshll.u32 %v103, 16
    %v238 = vrot.slane %v236, 1
    %v239 = vor.u32 %v234, %v238
    %v257 = vunpack.c.l.b16 %v217
    %v258 = vunpack.c.l.b16 %v218
    %v259 = vunpack.c.l.b16 %v219
    %v260 = vunpack.c.l.b16 %v220
    %v261 = vunpack.c.l.b16 %v221
    %v262 = vunpack.c.l.b16 %v222
    %v263 = vunpack.c.l.b16 %v223
    %v264 = vunpack.c.l.b16 %v224
    %v265 = vunpack.c.l.b16 %v225
    %v266 = vunpack.c.l.b16 %v226
    %v267 = vunpack.c.l.b16 %v227
    %v268 = vunpack.c.l.b16 %v228
    %v269 = vunpack.c.l.b16 %v229
    %v270 = vunpack.c.l.b16 %v230
    %v271 = vunpack.c.l.b16 %v231
    %v272 = vunpack.c.l.b16 %v232
    %v273 = vpack.c.b16 %v258, %v257
    %v274 = vpack.c.b16 %v260, %v259
    %v275 = vpack.c.b16 %v262, %v261
    %v276 = vpack.c.b16 %v264, %v263
    %v277 = vpack.c.b16 %v266, %v265
    %v278 = vpack.c.b16 %v268, %v267
    %v279 = vpack.c.b16 %v270, %v269
    %v280 = vpack.c.b16 %v272, %v271
    %289 = vmatprep.subr.bf16.mxu0 0
    %290 = vmatpush1.bf16.msra.mxu0 %v273
    %291 = vmatprep.subr.bf16.mxu0 0
    %292 = vmatpush1.bf16.msra.mxu0 %v274
    %293 = vmatprep.subr.bf16.mxu0 0
    %294 = vmatpush1.bf16.msra.mxu0 %v275
    %295 = vmatprep.subr.bf16.mxu0 0
    %296 = vmatpush1.bf16.msra.mxu0 %v276
    %297 = vmatprep.subr.bf16.mxu0 0
    %298 = vmatpush1.bf16.msra.mxu0 %v277
    %299 = vmatprep.subr.bf16.mxu0 0
    %300 = vmatpush1.bf16.msra.mxu0 %v278
    %301 = vmatprep.subr.bf16.mxu0 0
    %302 = vmatpush1.bf16.msra.mxu0 %v279
    %303 = vmatprep.subr.bf16.mxu0 0
    %304 = vmatpush1.bf16.msra.mxu0 %v280
    %305 = vmatprep.subr.bf16.mxu0 0
    %306 = vmatpush1.bf16.msra.mxu0 0
    %307 = vmatprep.subr.bf16.mxu0 0
    %308 = vmatpush1.bf16.msra.mxu0 0
    %309 = vmatprep.subr.bf16.mxu0 0
    %310 = vmatpush1.bf16.msra.mxu0 0
    %311 = vmatprep.subr.bf16.mxu0 0
    %312 = vmatpush1.bf16.msra.mxu0 0
    %313 = vmatprep.subr.bf16.mxu0 0
    %314 = vmatpush1.bf16.msra.mxu0 0
    %315 = vmatprep.subr.bf16.mxu0 0
    %316 = vmatpush1.bf16.msra.mxu0 0
    %317 = vmatprep.subr.bf16.mxu0 0
    %318 = vmatpush1.bf16.msra.mxu0 0
    %319 = vmatprep.subr.bf16.mxu0 0
    %320 = vmatpush1.bf16.msra.mxu0 0
    %321 = vmatprep.mubr.bf16.mxu0 0
    %322 = vmatmul.mubr.bf16.gmra.mrb[0].mxu0 %v239
    %v323 = vpop.f32.mrb[0].mxu0
    %v324 = vadd.f32 0.0, %v323
    %v325 = vpop.f32.mrb[0].mxu0
    %v326 = vpop.f32.mrb[0].mxu0
    %v327 = vpop.f32.mrb[0].mxu0
    %328 = vdwg.mxu0
    %v329 = vadd.f32 %v215, %v324
    %s330 = scalar_lea.vmem [#allocation5], 128
    %v331 = vld [vmem:[%s330] sm:$0xf]
    %v332 = vld [vmem:[%s330 + $0x4] sm:$0xf]
    %v333 = vld [vmem:[%s330 + $0x8] sm:$0xf]
    %v334 = vld [vmem:[%s330 + $0xc] sm:$0xf]
    %v335 = vld [vmem:[%s330 + $0x10] sm:$0xf]
    %v336 = vld [vmem:[%s330 + $0x14] sm:$0xf]
    %v337 = vld [vmem:[%s330 + $0x18] sm:$0xf]
    %v338 = vld [vmem:[%s330 + $0x1c] sm:$0xf]
    %v339 = vld [vmem:[%s330 + $0x20] sm:$0xf]
    %v340 = vld [vmem:[%s330 + $0x24] sm:$0xf]
    %v341 = vld [vmem:[%s330 + $0x28] sm:$0xf]
    %v342 = vld [vmem:[%s330 + $0x2c] sm:$0xf]
    %v343 = vld [vmem:[%s330 + $0x30] sm:$0xf]
    %v344 = vld [vmem:[%s330 + $0x34] sm:$0xf]
    %v345 = vld [vmem:[%s330 + $0x38] sm:$0xf]
    %v346 = vld [vmem:[%s330 + $0x3c] sm:$0xf]
    %v348 = vrot.slane %v103, 1
    %v366 = vunpack.c.l.b16 %v331
    %v367 = vunpack.c.l.b16 %v332
    %v368 = vunpack.c.l.b16 %v333
    %v369 = vunpack.c.l.b16 %v334
    %v370 = vunpack.c.l.b16 %v335
    %v371 = vunpack.c.l.b16 %v336
    %v372 = vunpack.c.l.b16 %v337
    %v373 = vunpack.c.l.b16 %v338
    %v374 = vunpack.c.l.b16 %v339
    %v375 = vunpack.c.l.b16 %v340
    %v376 = vunpack.c.l.b16 %v341
    %v377 = vunpack.c.l.b16 %v342
    %v378 = vunpack.c.l.b16 %v343
    %v379 = vunpack.c.l.b16 %v344
    %v380 = vunpack.c.l.b16 %v345
    %v381 = vunpack.c.l.b16 %v346
    %v382 = vpack.c.b16 %v367, %v366
    %v383 = vpack.c.b16 %v369, %v368
    %v384 = vpack.c.b16 %v371, %v370
    %v385 = vpack.c.b16 %v373, %v372
    %v386 = vpack.c.b16 %v375, %v374
    %v387 = vpack.c.b16 %v377, %v376
    %v388 = vpack.c.b16 %v379, %v378
    %v389 = vpack.c.b16 %v381, %v380
    %398 = vmatprep.subr.bf16.mxu0 0
    %399 = vmatpush1.bf16.msra.mxu0 %v382
    %400 = vmatprep.subr.bf16.mxu0 0
    %401 = vmatpush1.bf16.msra.mxu0 %v383
    %402 = vmatprep.subr.bf16.mxu0 0
    %403 = vmatpush1.bf16.msra.mxu0 %v384
    %404 = vmatprep.subr.bf16.mxu0 0
    %405 = vmatpush1.bf16.msra.mxu0 %v385
    %406 = vmatprep.subr.bf16.mxu0 0
    %407 = vmatpush1.bf16.msra.mxu0 %v386
    %408 = vmatprep.subr.bf16.mxu0 0
    %409 = vmatpush1.bf16.msra.mxu0 %v387
    %410 = vmatprep.subr.bf16.mxu0 0
    %411 = vmatpush1.bf16.msra.mxu0 %v388
    %412 = vmatprep.subr.bf16.mxu0 0
    %413 = vmatpush1.bf16.msra.mxu0 %v389
    %414 = vmatprep.subr.bf16.mxu0 0
    %415 = vmatpush1.bf16.msra.mxu0 0
    %416 = vmatprep.subr.bf16.mxu0 0
    %417 = vmatpush1.bf16.msra.mxu0 0
    %418 = vmatprep.subr.bf16.mxu0 0
    %419 = vmatpush1.bf16.msra.mxu0 0
    %420 = vmatprep.subr.bf16.mxu0 0
    %421 = vmatpush1.bf16.msra.mxu0 0
    %422 = vmatprep.subr.bf16.mxu0 0
    %423 = vmatpush1.bf16.msra.mxu0 0
    %424 = vmatprep.subr.bf16.mxu0 0
    %425 = vmatpush1.bf16.msra.mxu0 0
    %426 = vmatprep.subr.bf16.mxu0 0
    %427 = vmatpush1.bf16.msra.mxu0 0
    %428 = vmatprep.subr.bf16.mxu0 0
    %429 = vmatpush1.bf16.msra.mxu0 0
    %430 = vmatprep.mubr.bf16.mxu0 0
    %431 = vmatmul.mubr.bf16.gmra.mrb[0].mxu0 %v348
    %v432 = vpop.f32.mrb[0].mxu0
    %v433 = vadd.f32 0.0, %v432
    %v434 = vpop.f32.mrb[0].mxu0
    %v435 = vpop.f32.mrb[0].mxu0
    %v436 = vpop.f32.mrb[0].mxu0
    %437 = vdwg.mxu0
    %v438 = vadd.f32 %v329, %v433
    %v439 = vpack.c.bf16 %v438, %v438
    %v440 = vld [vmem:[#allocation7] sm:$0xff]
    %v441 = vld [vmem:[#allocation7 + $0x8] sm:$0xf]
    %v442 = vld [vmem:[#allocation7 + $0xc] sm:$0xff]
    %v443 = vld [vmem:[#allocation7 + $0x14] sm:$0xf]
    %v444 = vld [vmem:[#allocation7 + $0x18] sm:$0xff]
    %v445 = vld [vmem:[#allocation7 + $0x20] sm:$0xf]
    %v446 = vld [vmem:[#allocation7 + $0x24] sm:$0xff]
    %v447 = vld [vmem:[#allocation7 + $0x2c] sm:$0xf]
    %v448 = vld [vmem:[#allocation7 + $0x30] sm:$0xff]
    %v449 = vld [vmem:[#allocation7 + $0x38] sm:$0xf]
    %v450 = vld [vmem:[#allocation7 + $0x3c] sm:$0xff]
    %v451 = vld [vmem:[#allocation7 + $0x44] sm:$0xf]
    %v452 = vld [vmem:[#allocation7 + $0x48] sm:$0xff]
    %v453 = vld [vmem:[#allocation7 + $0x50] sm:$0xf]
    %v454 = vld [vmem:[#allocation7 + $0x54] sm:$0xff]
    %v455 = vld [vmem:[#allocation7 + $0x5c] sm:$0xf]
    %v456 = vld [vmem:[#allocation7 + $0x60] sm:$0xff]
    %v457 = vld [vmem:[#allocation7 + $0x68] sm:$0xf]
    %v458 = vld [vmem:[#allocation7 + $0x6c] sm:$0xff]
    %v459 = vld [vmem:[#allocation7 + $0x74] sm:$0xf]
    %v460 = vld [vmem:[#allocation7 + $0x78] sm:$0xff]
    %v461 = vld [vmem:[#allocation7 + $0x80] sm:$0xf]
    %v462 = vld [vmem:[#allocation7 + $0x84] sm:$0xff]
    %v463 = vld [vmem:[#allocation7 + $0x8c] sm:$0xf]
    %v464 = vld [vmem:[#allocation7 + $0x90] sm:$0xff]
    %v465 = vld [vmem:[#allocation7 + $0x98] sm:$0xf]
    %v466 = vld [vmem:[#allocation7 + $0x9c] sm:$0xff]
    %v467 = vld [vmem:[#allocation7 + $0xa4] sm:$0xf]
    %v468 = vld [vmem:[#allocation7 + $0xa8] sm:$0xff]
    %v469 = vld [vmem:[#allocation7 + $0xb0] sm:$0xf]
    %v470 = vld [vmem:[#allocation7 + $0xb4] sm:$0xff]
    %v471 = vld [vmem:[#allocation7 + $0xbc] sm:$0xf]
    %v472 = vld [vmem:[%s4] sm:$0x7]
    %v474 = vlaneseq
    %v475 = vshrl.u32 %v474, 7
    %v476 = vsub.s32 0, %v475
    %v477 = vrot.slane %v472, %v476
    %v478 = vlaneseq
    %v479 = vshrl.u32 %v478, 7
    %v480 = vsub.s32 1, %v479
    %v481 = vrot.slane %v472, %v480
    %v482 = vlaneseq
    %v483 = vshrl.u32 %v482, 7
    %v484 = vsub.s32 2, %v483
    %v485 = vrot.slane %v472, %v484
    %v521 = vunpack.c.l.b16 %v440
    %v522 = vunpack.c.h.b16 %v440
    %v523 = vunpack.c.l.b16 %v441
    %v524 = vunpack.c.l.b16 %v442
    %v525 = vunpack.c.h.b16 %v442
    %v526 = vunpack.c.l.b16 %v443
    %v527 = vunpack.c.l.b16 %v444
    %v528 = vunpack.c.h.b16 %v444
    %v529 = vunpack.c.l.b16 %v445
    %v530 = vunpack.c.l.b16 %v446
    %v531 = vunpack.c.h.b16 %v446
    %v532 = vunpack.c.l.b16 %v447
    %v533 = vunpack.c.l.b16 %v448
    %v534 = vunpack.c.h.b16 %v448
    %v535 = vunpack.c.l.b16 %v449
    %v536 = vunpack.c.l.b16 %v450
    %v537 = vunpack.c.h.b16 %v450
    %v538 = vunpack.c.l.b16 %v451
    %v539 = vunpack.c.l.b16 %v452
    %v540 = vunpack.c.h.b16 %v452
    %v541 = vunpack.c.l.b16 %v453
    %v542 = vunpack.c.l.b16 %v454
    %v543 = vunpack.c.h.b16 %v454
    %v544 = vunpack.c.l.b16 %v455
    %v545 = vunpack.c.l.b16 %v456
    %v546 = vunpack.c.h.b16 %v456
    %v547 = vunpack.c.l.b16 %v457
    %v548 = vunpack.c.l.b16 %v458
    %v549 = vunpack.c.h.b16 %v458
    %v550 = vunpack.c.l.b16 %v459
    %v551 = vunpack.c.l.b16 %v460
    %v552 = vunpack.c.h.b16 %v460
    %v553 = vunpack.c.l.b16 %v461
    %v554 = vunpack.c.l.b16 %v462
    %v555 = vunpack.c.h.b16 %v462
    %v556 = vunpack.c.l.b16 %v463
    %v557 = vunpack.c.l.b16 %v464
    %v558 = vunpack.c.h.b16 %v464
    %v559 = vunpack.c.l.b16 %v465
    %v560 = vunpack.c.l.b16 %v466
    %v561 = vunpack.c.h.b16 %v466
    %v562 = vunpack.c.l.b16 %v467
    %v563 = vunpack.c.l.b16 %v468
    %v564 = vunpack.c.h.b16 %v468
    %v565 = vunpack.c.l.b16 %v469
    %v566 = vunpack.c.l.b16 %v470
    %v567 = vunpack.c.h.b16 %v470
    %v568 = vunpack.c.l.b16 %v471
    %v569 = vpack.c.b16 %v524, %v521
    %v570 = vpack.c.b16 %v525, %v522
    %v571 = vpack.c.b16 %v526, %v523
    %v572 = vpack.c.b16 %v530, %v527
    %v573 = vpack.c.b16 %v531, %v528
    %v574 = vpack.c.b16 %v532, %v529
    %v575 = vpack.c.b16 %v536, %v533
    %v576 = vpack.c.b16 %v537, %v534
    %v577 = vpack.c.b16 %v538, %v535
    %v578 = vpack.c.b16 %v542, %v539
    %v579 = vpack.c.b16 %v543, %v540
    %v580 = vpack.c.b16 %v544, %v541
    %v581 = vpack.c.b16 %v548, %v545
    %v582 = vpack.c.b16 %v549, %v546
    %v583 = vpack.c.b16 %v550, %v547
    %v584 = vpack.c.b16 %v554, %v551
    %v585 = vpack.c.b16 %v555, %v552
    %v586 = vpack.c.b16 %v556, %v553
    %v587 = vpack.c.b16 %v560, %v557
    %v588 = vpack.c.b16 %v561, %v558
    %v589 = vpack.c.b16 %v562, %v559
    %v590 = vpack.c.b16 %v566, %v563
    %v591 = vpack.c.b16 %v567, %v564
    %v592 = vpack.c.b16 %v568, %v565
    %617 = vmatprep.subr.bf16.mxu0 %v570
    %618 = vmatpush1.bf16.msra.mxu0 %v569
    %619 = vmatprep.subr.bf16.mxu0 %v573
    %620 = vmatpush1.bf16.msra.mxu0 %v572
    %621 = vmatprep.subr.bf16.mxu0 %v576
    %622 = vmatpush1.bf16.msra.mxu0 %v575
    %623 = vmatprep.subr.bf16.mxu0 %v579
    %624 = vmatpush1.bf16.msra.mxu0 %v578
    %625 = vmatprep.subr.bf16.mxu0 %v582
    %626 = vmatpush1.bf16.msra.mxu0 %v581
    %627 = vmatprep.subr.bf16.mxu0 %v585
    %628 = vmatpush1.bf16.msra.mxu0 %v584
    %629 = vmatprep.subr.bf16.mxu0 %v588
    %630 = vmatpush1.bf16.msra.mxu0 %v587
    %631 = vmatprep.subr.bf16.mxu0 %v591
    %632 = vmatpush1.bf16.msra.mxu0 %v590
    %633 = vmatprep.subr.bf16.mxu0 0
    %634 = vmatpush1.bf16.msra.mxu0 0
    %635 = vmatprep.subr.bf16.mxu0 0
    %636 = vmatpush1.bf16.msra.mxu0 0
    %637 = vmatprep.subr.bf16.mxu0 0
    %638 = vmatpush1.bf16.msra.mxu0 0
    %639 = vmatprep.subr.bf16.mxu0 0
    %640 = vmatpush1.bf16.msra.mxu0 0
    %641 = vmatprep.subr.bf16.mxu0 0
    %642 = vmatpush1.bf16.msra.mxu0 0
    %643 = vmatprep.subr.bf16.mxu0 0
    %644 = vmatpush1.bf16.msra.mxu0 0
    %645 = vmatprep.subr.bf16.mxu0 0
    %646 = vmatpush1.bf16.msra.mxu0 0
    %647 = vmatprep.subr.bf16.mxu0 0
    %648 = vmatpush1.bf16.msra.mxu0 0
    %649 = vmatprep.mubr.bf16.mxu0 0
    %650 = vmatmul.mubr.bf16.gmra.mrb[0].mxu0 %v439
    %v651 = vpop.f32.mrb[0].mxu0
    %v652 = vadd.f32 %v477, %v651
    %v653 = vpop.f32.mrb[0].mxu0
    %v654 = vadd.f32 %v481, %v653
    %v655 = vpop.f32.mrb[0].mxu0
    %v656 = vpop.f32.mrb[0].mxu0
    %657 = vdwg.mxu0
    %658 = vmatprep.subr.bf16.mxu0 0
    %659 = vmatpush1.bf16.msra.mxu0 %v571
    %660 = vmatprep.subr.bf16.mxu0 0
    %661 = vmatpush1.bf16.msra.mxu0 %v574
    %662 = vmatprep.subr.bf16.mxu0 0
    %663 = vmatpush1.bf16.msra.mxu0 %v577
    %664 = vmatprep.subr.bf16.mxu0 0
    %665 = vmatpush1.bf16.msra.mxu0 %v580
    %666 = vmatprep.subr.bf16.mxu0 0
    %667 = vmatpush1.bf16.msra.mxu0 %v583
    %668 = vmatprep.subr.bf16.mxu0 0
    %669 = vmatpush1.bf16.msra.mxu0 %v586
    %670 = vmatprep.subr.bf16.mxu0 0
    %671 = vmatpush1.bf16.msra.mxu0 %v589
    %672 = vmatprep.subr.bf16.mxu0 0
    %673 = vmatpush1.bf16.msra.mxu0 %v592
    %674 = vmatprep.subr.bf16.mxu0 0
    %675 = vmatpush1.bf16.msra.mxu0 0
    %676 = vmatprep.subr.bf16.mxu0 0
    %677 = vmatpush1.bf16.msra.mxu0 0
    %678 = vmatprep.subr.bf16.mxu0 0
    %679 = vmatpush1.bf16.msra.mxu0 0
    %680 = vmatprep.subr.bf16.mxu0 0
    %681 = vmatpush1.bf16.msra.mxu0 0
    %682 = vmatprep.subr.bf16.mxu0 0
    %683 = vmatpush1.bf16.msra.mxu0 0
    %684 = vmatprep.subr.bf16.mxu0 0
    %685 = vmatpush1.bf16.msra.mxu0 0
    %686 = vmatprep.subr.bf16.mxu0 0
    %687 = vmatpush1.bf16.msra.mxu0 0
    %688 = vmatprep.subr.bf16.mxu0 0
    %689 = vmatpush1.bf16.msra.mxu0 0
    %690 = vmatprep.mubr.bf16.mxu0 0
    %691 = vmatmul.mubr.bf16.gmra.mrb[0].mxu0 %v439
    %v692 = vpop.f32.mrb[0].mxu0
    %v693 = vadd.f32 %v485, %v692
    %v694 = vpop.f32.mrb[0].mxu0
    %v695 = vpop.f32.mrb[0].mxu0
    %v696 = vpop.f32.mrb[0].mxu0
    %697 = vdwg.mxu0
    %v698 = vpack.c.bf16 %v652, %v652
    %v699 = vpack.c.bf16 %v654, %v654
    %700 = vmatprep.subr.bf16.mxu0 0
    %701 = vmatpush1.bf16.xpose.msra.mxu0 %v699
    %702 = vmatprep.subr.bf16.mxu0 0
    %703 = vmatpush1.bf16.xpose.msra.mxu0 0
    %704 = vmatprep.subr.bf16.mxu0 0
    %705 = vmatpush1.bf16.xpose.msra.mxu0 0
    %706 = vmatprep.subr.bf16.mxu0 0
    %707 = vmatpush1.bf16.xpose.msra.mxu0 0
    %708 = vmatprep.subr.bf16.mxu0 0
    %709 = vmatpush1.bf16.xpose.msra.mxu0 0
    %710 = vmatprep.subr.bf16.mxu0 0
    %711 = vmatpush1.bf16.xpose.msra.mxu0 0
    %712 = vmatprep.subr.bf16.mxu0 0
    %713 = vmatpush1.bf16.xpose.msra.mxu0 0
    %714 = vmatprep.subr.bf16.mxu0 0
    %715 = vmatpush1.bf16.xpose.msra.mxu0 0
    %716 = vmatprep.subr.bf16.mxu0 0
    %717 = vmatpush1.bf16.xpose.msra.mxu0 0
    %718 = vmatprep.subr.bf16.mxu0 0
    %719 = vmatpush1.bf16.xpose.msra.mxu0 0
    %720 = vmatprep.subr.bf16.mxu0 0
    %721 = vmatpush1.bf16.xpose.msra.mxu0 0
    %722 = vmatprep.subr.bf16.mxu0 0
    %723 = vmatpush1.bf16.xpose.msra.mxu0 0
    %724 = vmatprep.subr.bf16.mxu0 0
    %725 = vmatpush1.bf16.xpose.msra.mxu0 0
    %726 = vmatprep.subr.bf16.mxu0 0
    %727 = vmatpush1.bf16.xpose.msra.mxu0 0
    %728 = vmatprep.subr.bf16.mxu0 0
    %729 = vmatpush1.bf16.xpose.msra.mxu0 0
    %730 = vmatprep.subr.bf16.mxu0 0
    %731 = vmatpush1.bf16.xpose.msra.mxu0 0
    %732 = vmatprep.mubr.bf16.mxu0 0
    %733 = vmatmul.mubr.bf16.gmra.mrb[0].mxu0 %v698
    %v734 = vpop.f32.mrb[0].mxu0
    %v735 = vadd.f32 0.0, %v734
    %v736 = vpop.f32.mrb[0].mxu0
    %v737 = vpop.f32.mrb[0].mxu0
    %v738 = vpop.f32.mrb[0].mxu0
    %739 = vdwg.mxu0
    %vm740 = vcmask 46080
    %v741 = vsel %vm740, %v735, -inf
    %742 = vmax.xlane.f32.xlu0 %v741
    %v743 = vpop.xlane.xlu0 %742
    %v744 = vsub.f32 %v735, %v743
    %v745 = vmul.f32 %v744, 1.442695
    %v746 = vpow.pop %v745
    %v747 = vsel %vm740, %v746, 0.0
    %748 = vadd.xlane.f32.xlu0 %v747
    %v749 = vpop.xlane.xlu0 %748
    %v750 = vrcp.pop %v749
    %v751 = vmul.f32 %v746, %v750
    %v752 = vpack.c.bf16 %v751, %v751
    %v753 = vpack.c.bf16 %v693, %v693
    %vm754 = vcmask 48128
    %v756 = vsel %vm754, %v752, 0
    %vm758 = vcmask 1042432
    %v760 = vsel %vm758, %v753, 0
    %762 = vmatprep.subr.bf16.mxu0 0
    %763 = vmatpush1.bf16.msra.mxu0 %v760
    %764 = vmatprep.subr.bf16.mxu0 0
    %765 = vmatpush1.bf16.msra.mxu0 0
    %766 = vmatprep.subr.bf16.mxu0 0
    %767 = vmatpush1.bf16.msra.mxu0 0
    %768 = vmatprep.subr.bf16.mxu0 0
    %769 = vmatpush1.bf16.msra.mxu0 0
    %770 = vmatprep.subr.bf16.mxu0 0
    %771 = vmatpush1.bf16.msra.mxu0 0
    %772 = vmatprep.subr.bf16.mxu0 0
    %773 = vmatpush1.bf16.msra.mxu0 0
    %774 = vmatprep.subr.bf16.mxu0 0
    %775 = vmatpush1.bf16.msra.mxu0 0
    %776 = vmatprep.subr.bf16.mxu0 0
    %777 = vmatpush1.bf16.msra.mxu0 0
    %778 = vmatprep.subr.bf16.mxu0 0
    %779 = vmatpush1.bf16.msra.mxu0 0
    %780 = vmatprep.subr.bf16.mxu0 0
    %781 = vmatpush1.bf16.msra.mxu0 0
    %782 = vmatprep.subr.bf16.mxu0 0
    %783 = vmatpush1.bf16.msra.mxu0 0
    %784 = vmatprep.subr.bf16.mxu0 0
    %785 = vmatpush1.bf16.msra.mxu0 0
    %786 = vmatprep.subr.bf16.mxu0 0
    %787 = vmatpush1.bf16.msra.mxu0 0
    %788 = vmatprep.subr.bf16.mxu0 0
    %789 = vmatpush1.bf16.msra.mxu0 0
    %790 = vmatprep.subr.bf16.mxu0 0
    %791 = vmatpush1.bf16.msra.mxu0 0
    %792 = vmatprep.subr.bf16.mxu0 0
    %793 = vmatpush1.bf16.msra.mxu0 0
    %794 = vmatprep.mubr.bf16.mxu0 0
    %795 = vmatmul.mubr.bf16.gmra.mrb[0].mxu0 %v756
    %v796 = vpop.f32.mrb[0].mxu0
    %v797 = vadd.f32 0.0, %v796
    %v798 = vpop.f32.mrb[0].mxu0
    %v799 = vpop.f32.mrb[0].mxu0
    %v800 = vpop.f32.mrb[0].mxu0
    %801 = vdwg.mxu0
    %v802 = vpack.c.bf16 %v797, %v797
    %v803 = vld [vmem:[%s6] sm:$0x1]
    %v804 = vld [vmem:[#allocation8] sm:$0xf]
    %v805 = vld [vmem:[#allocation8 + $0x4] sm:$0xf]
    %v806 = vld [vmem:[#allocation8 + $0x8] sm:$0xf]
    %v807 = vld [vmem:[#allocation8 + $0xc] sm:$0xf]
    %v808 = vld [vmem:[#allocation8 + $0x10] sm:$0xf]
    %v809 = vld [vmem:[#allocation8 + $0x14] sm:$0xf]
    %v810 = vld [vmem:[#allocation8 + $0x18] sm:$0xf]
    %v811 = vld [vmem:[#allocation8 + $0x1c] sm:$0xf]
    %v812 = vld [vmem:[#allocation8 + $0x20] sm:$0xf]
    %v813 = vld [vmem:[#allocation8 + $0x24] sm:$0xf]
    %v814 = vld [vmem:[#allocation8 + $0x28] sm:$0xf]
    %v815 = vld [vmem:[#allocation8 + $0x2c] sm:$0xf]
    %v816 = vld [vmem:[#allocation8 + $0x30] sm:$0xf]
    %v817 = vld [vmem:[#allocation8 + $0x34] sm:$0xf]
    %v818 = vld [vmem:[#allocation8 + $0x38] sm:$0xf]
    %v819 = vld [vmem:[#allocation8 + $0x3c] sm:$0xf]
    %v836 = vunpack.c.l.b16 %v804
    %v837 = vunpack.c.l.b16 %v805
    %v838 = vunpack.c.l.b16 %v806
    %v839 = vunpack.c.l.b16 %v807
    %v840 = vunpack.c.l.b16 %v808
    %v841 = vunpack.c.l.b16 %v809
    %v842 = vunpack.c.l.b16 %v810
    %v843 = vunpack.c.l.b16 %v811
    %v844 = vunpack.c.l.b16 %v812
    %v845 = vunpack.c.l.b16 %v813
    %v846 = vunpack.c.l.b16 %v814
    %v847 = vunpack.c.l.b16 %v815
    %v848 = vunpack.c.l.b16 %v816
    %v849 = vunpack.c.l.b16 %v817
    %v850 = vunpack.c.l.b16 %v818
    %v851 = vunpack.c.l.b16 %v819
    %v852 = vpack.c.b16 %v837, %v836
    %v853 = vpack.c.b16 %v839, %v838
    %v854 = vpack.c.b16 %v841, %v840
    %v855 = vpack.c.b16 %v843, %v842
    %v856 = vpack.c.b16 %v845, %v844
    %v857 = vpack.c.b16 %v847, %v846
    %v858 = vpack.c.b16 %v849, %v848
    %v859 = vpack.c.b16 %v851, %v850
    %868 = vmatprep.subr.bf16.mxu0 0
    %869 = vmatpush1.bf16.msra.mxu0 %v852
    %870 = vmatprep.subr.bf16.mxu0 0
    %871 = vmatpush1.bf16.msra.mxu0 %v853
    %872 = vmatprep.subr.bf16.mxu0 0
    %873 = vmatpush1.bf16.msra.mxu0 %v854
    %874 = vmatprep.subr.bf16.mxu0 0
    %875 = vmatpush1.bf16.msra.mxu0 %v855
    %876 = vmatprep.subr.bf16.mxu0 0
    %877 = vmatpush1.bf16.msra.mxu0 %v856
    %878 = vmatprep.subr.bf16.mxu0 0
    %879 = vmatpush1.bf16.msra.mxu0 %v857
    %880 = vmatprep.subr.bf16.mxu0 0
    %881 = vmatpush1.bf16.msra.mxu0 %v858
    %882 = vmatprep.subr.bf16.mxu0 0
    %883 = vmatpush1.bf16.msra.mxu0 %v859
    %884 = vmatprep.subr.bf16.mxu0 0
    %885 = vmatpush1.bf16.msra.mxu0 0
    %886 = vmatprep.subr.bf16.mxu0 0
    %887 = vmatpush1.bf16.msra.mxu0 0
    %888 = vmatprep.subr.bf16.mxu0 0
    %889 = vmatpush1.bf16.msra.mxu0 0
    %890 = vmatprep.subr.bf16.mxu0 0
    %891 = vmatpush1.bf16.msra.mxu0 0
    %892 = vmatprep.subr.bf16.mxu0 0
    %893 = vmatpush1.bf16.msra.mxu0 0
    %894 = vmatprep.subr.bf16.mxu0 0
    %895 = vmatpush1.bf16.msra.mxu0 0
    %896 = vmatprep.subr.bf16.mxu0 0
    %897 = vmatpush1.bf16.msra.mxu0 0
    %898 = vmatprep.subr.bf16.mxu0 0
    %899 = vmatpush1.bf16.msra.mxu0 0
    %900 = vmatprep.mubr.bf16.mxu0 0
    %901 = vmatmul.mubr.bf16.gmra.mrb[0].mxu0 %v802
    %v902 = vpop.f32.mrb[0].mxu0
    %v903 = vadd.f32 0.0, %v902
    %v904 = vpop.f32.mrb[0].mxu0
    %v905 = vpop.f32.mrb[0].mxu0
    %v906 = vpop.f32.mrb[0].mxu0
    %907 = vdwg.mxu0
    %v909 = vlaneseq
    %v910 = vshrl.u32 %v909, 7
    %v911 = vsub.s32 0, %v910
    %v912 = vrot.slane %v803, %v911
    %v914 = vadd.f32 %v912, %v903
    %s915 = scalar_lea.vmem [#allocation8], 64
    %v916 = vld [vmem:[%s915] sm:$0xf]
    %v917 = vld [vmem:[%s915 + $0x4] sm:$0xf]
    %v918 = vld [vmem:[%s915 + $0x8] sm:$0xf]
    %v919 = vld [vmem:[%s915 + $0xc] sm:$0xf]
    %v920 = vld [vmem:[%s915 + $0x10] sm:$0xf]
    %v921 = vld [vmem:[%s915 + $0x14] sm:$0xf]
    %v922 = vld [vmem:[%s915 + $0x18] sm:$0xf]
    %v923 = vld [vmem:[%s915 + $0x1c] sm:$0xf]
    %v924 = vld [vmem:[%s915 + $0x20] sm:$0xf]
    %v925 = vld [vmem:[%s915 + $0x24] sm:$0xf]
    %v926 = vld [vmem:[%s915 + $0x28] sm:$0xf]
    %v927 = vld [vmem:[%s915 + $0x2c] sm:$0xf]
    %v928 = vld [vmem:[%s915 + $0x30] sm:$0xf]
    %v929 = vld [vmem:[%s915 + $0x34] sm:$0xf]
    %v930 = vld [vmem:[%s915 + $0x38] sm:$0xf]
    %v931 = vld [vmem:[%s915 + $0x3c] sm:$0xf]
    %v933 = vshrl.u32 %v802, 16
    %v935 = vshll.u32 %v802, 16
    %v937 = vrot.slane %v935, 1
    %v938 = vor.u32 %v933, %v937
    %v956 = vunpack.c.l.b16 %v916
    %v957 = vunpack.c.l.b16 %v917
    %v958 = vunpack.c.l.b16 %v918
    %v959 = vunpack.c.l.b16 %v919
    %v960 = vunpack.c.l.b16 %v920
    %v961 = vunpack.c.l.b16 %v921
    %v962 = vunpack.c.l.b16 %v922
    %v963 = vunpack.c.l.b16 %v923
    %v964 = vunpack.c.l.b16 %v924
    %v965 = vunpack.c.l.b16 %v925
    %v966 = vunpack.c.l.b16 %v926
    %v967 = vunpack.c.l.b16 %v927
    %v968 = vunpack.c.l.b16 %v928
    %v969 = vunpack.c.l.b16 %v929
    %v970 = vunpack.c.l.b16 %v930
    %v971 = vunpack.c.l.b16 %v931
    %v972 = vpack.c.b16 %v957, %v956
    %v973 = vpack.c.b16 %v959, %v958
    %v974 = vpack.c.b16 %v961, %v960
    %v975 = vpack.c.b16 %v963, %v962
    %v976 = vpack.c.b16 %v965, %v964
    %v977 = vpack.c.b16 %v967, %v966
    %v978 = vpack.c.b16 %v969, %v968
    %v979 = vpack.c.b16 %v971, %v970
    %988 = vmatprep.subr.bf16.mxu0 0
    %989 = vmatpush1.bf16.msra.mxu0 %v972
    %990 = vmatprep.subr.bf16.mxu0 0
    %991 = vmatpush1.bf16.msra.mxu0 %v973
    %992 = vmatprep.subr.bf16.mxu0 0
    %993 = vmatpush1.bf16.msra.mxu0 %v974
    %994 = vmatprep.subr.bf16.mxu0 0
    %995 = vmatpush1.bf16.msra.mxu0 %v975
    %996 = vmatprep.subr.bf16.mxu0 0
    %997 = vmatpush1.bf16.msra.mxu0 %v976
    %998 = vmatprep.subr.bf16.mxu0 0
    %999 = vmatpush1.bf16.msra.mxu0 %v977
    %1000 = vmatprep.subr.bf16.mxu0 0
    %1001 = vmatpush1.bf16.msra.mxu0 %v978
    %1002 = vmatprep.subr.bf16.mxu0 0
    %1003 = vmatpush1.bf16.msra.mxu0 %v979
    %1004 = vmatprep.subr.bf16.mxu0 0
    %1005 = vmatpush1.bf16.msra.mxu0 0
    %1006 = vmatprep.subr.bf16.mxu0 0
    %1007 = vmatpush1.bf16.msra.mxu0 0
    %1008 = vmatprep.subr.bf16.mxu0 0
    %1009 = vmatpush1.bf16.msra.mxu0 0
    %1010 = vmatprep.subr.bf16.mxu0 0
    %1011 = vmatpush1.bf16.msra.mxu0 0
    %1012 = vmatprep.subr.bf16.mxu0 0
    %1013 = vmatpush1.bf16.msra.mxu0 0
    %1014 = vmatprep.subr.bf16.mxu0 0
    %1015 = vmatpush1.bf16.msra.mxu0 0
    %1016 = vmatprep.subr.bf16.mxu0 0
    %1017 = vmatpush1.bf16.msra.mxu0 0
    %1018 = vmatprep.subr.bf16.mxu0 0
    %1019 = vmatpush1.bf16.msra.mxu0 0
    %1020 = vmatprep.mubr.bf16.mxu0 0
    %1021 = vmatmul.mubr.bf16.gmra.mrb[0].mxu0 %v938
    %v1022 = vpop.f32.mrb[0].mxu0
    %v1023 = vadd.f32 0.0, %v1022
    %v1024 = vpop.f32.mrb[0].mxu0
    %v1025 = vpop.f32.mrb[0].mxu0
    %v1026 = vpop.f32.mrb[0].mxu0
    %1027 = vdwg.mxu0
    %v1028 = vadd.f32 %v914, %v1023
    %s1029 = scalar_lea.vmem [#allocation8], 128
    %v1030 = vld [vmem:[%s1029] sm:$0xf]
    %v1031 = vld [vmem:[%s1029 + $0x4] sm:$0xf]
    %v1032 = vld [vmem:[%s1029 + $0x8] sm:$0xf]
    %v1033 = vld [vmem:[%s1029 + $0xc] sm:$0xf]
    %v1034 = vld [vmem:[%s1029 + $0x10] sm:$0xf]
    %v1035 = vld [vmem:[%s1029 + $0x14] sm:$0xf]
    %v1036 = vld [vmem:[%s1029 + $0x18] sm:$0xf]
    %v1037 = vld [vmem:[%s1029 + $0x1c] sm:$0xf]
    %v1038 = vld [vmem:[%s1029 + $0x20] sm:$0xf]
    %v1039 = vld [vmem:[%s1029 + $0x24] sm:$0xf]
    %v1040 = vld [vmem:[%s1029 + $0x28] sm:$0xf]
    %v1041 = vld [vmem:[%s1029 + $0x2c] sm:$0xf]
    %v1042 = vld [vmem:[%s1029 + $0x30] sm:$0xf]
    %v1043 = vld [vmem:[%s1029 + $0x34] sm:$0xf]
    %v1044 = vld [vmem:[%s1029 + $0x38] sm:$0xf]
    %v1045 = vld [vmem:[%s1029 + $0x3c] sm:$0xf]
    %v1047 = vrot.slane %v802, 1
    %v1065 = vunpack.c.l.b16 %v1030
    %v1066 = vunpack.c.l.b16 %v1031
    %v1067 = vunpack.c.l.b16 %v1032
    %v1068 = vunpack.c.l.b16 %v1033
    %v1069 = vunpack.c.l.b16 %v1034
    %v1070 = vunpack.c.l.b16 %v1035
    %v1071 = vunpack.c.l.b16 %v1036
    %v1072 = vunpack.c.l.b16 %v1037
    %v1073 = vunpack.c.l.b16 %v1038
    %v1074 = vunpack.c.l.b16 %v1039
    %v1075 = vunpack.c.l.b16 %v1040
    %v1076 = vunpack.c.l.b16 %v1041
    %v1077 = vunpack.c.l.b16 %v1042
    %v1078 = vunpack.c.l.b16 %v1043
    %v1079 = vunpack.c.l.b16 %v1044
    %v1080 = vunpack.c.l.b16 %v1045
    %v1081 = vpack.c.b16 %v1066, %v1065
    %v1082 = vpack.c.b16 %v1068, %v1067
    %v1083 = vpack.c.b16 %v1070, %v1069
    %v1084 = vpack.c.b16 %v1072, %v1071
    %v1085 = vpack.c.b16 %v1074, %v1073
    %v1086 = vpack.c.b16 %v1076, %v1075
    %v1087 = vpack.c.b16 %v1078, %v1077
    %v1088 = vpack.c.b16 %v1080, %v1079
    %1097 = vmatprep.subr.bf16.mxu0 0
    %1098 = vmatpush1.bf16.msra.mxu0 %v1081
    %1099 = vmatprep.subr.bf16.mxu0 0
    %1100 = vmatpush1.bf16.msra.mxu0 %v1082
    %1101 = vmatprep.subr.bf16.mxu0 0
    %1102 = vmatpush1.bf16.msra.mxu0 %v1083
    %1103 = vmatprep.subr.bf16.mxu0 0
    %1104 = vmatpush1.bf16.msra.mxu0 %v1084
    %1105 = vmatprep.subr.bf16.mxu0 0
    %1106 = vmatpush1.bf16.msra.mxu0 %v1085
    %1107 = vmatprep.subr.bf16.mxu0 0
    %1108 = vmatpush1.bf16.msra.mxu0 %v1086
    %1109 = vmatprep.subr.bf16.mxu0 0
    %1110 = vmatpush1.bf16.msra.mxu0 %v1087
    %1111 = vmatprep.subr.bf16.mxu0 0
    %1112 = vmatpush1.bf16.msra.mxu0 %v1088
    %1113 = vmatprep.subr.bf16.mxu0 0
    %1114 = vmatpush1.bf16.msra.mxu0 0
    %1115 = vmatprep.subr.bf16.mxu0 0
    %1116 = vmatpush1.bf16.msra.mxu0 0
    %1117 = vmatprep.subr.bf16.mxu0 0
    %1118 = vmatpush1.bf16.msra.mxu0 0
    %1119 = vmatprep.subr.bf16.mxu0 0
    %1120 = vmatpush1.bf16.msra.mxu0 0
    %1121 = vmatprep.subr.bf16.mxu0 0
    %1122 = vmatpush1.bf16.msra.mxu0 0
    %1123 = vmatprep.subr.bf16.mxu0 0
    %1124 = vmatpush1.bf16.msra.mxu0 0
    %1125 = vmatprep.subr.bf16.mxu0 0
    %1126 = vmatpush1.bf16.msra.mxu0 0
    %1127 = vmatprep.subr.bf16.mxu0 0
    %1128 = vmatpush1.bf16.msra.mxu0 0
    %1129 = vmatprep.mubr.bf16.mxu0 0
    %1130 = vmatmul.mubr.bf16.gmra.mrb[0].mxu0 %v1047
    %v1131 = vpop.f32.mrb[0].mxu0
    %v1132 = vadd.f32 0.0, %v1131
    %v1133 = vpop.f32.mrb[0].mxu0
    %v1134 = vpop.f32.mrb[0].mxu0
    %v1135 = vpop.f32.mrb[0].mxu0
    %1136 = vdwg.mxu0
    %v1137 = vadd.f32 %v1028, %v1132
    %v1138 = vpack.c.bf16 %v1137, %v1137
    %v1139 = vld [vmem:[#allocation10] sm:$0xff]
    %v1140 = vld [vmem:[#allocation10 + $0x8] sm:$0xf]
    %v1141 = vld [vmem:[#allocation10 + $0xc] sm:$0xff]
    %v1142 = vld [vmem:[#allocation10 + $0x14] sm:$0xf]
    %v1143 = vld [vmem:[#allocation10 + $0x18] sm:$0xff]
    %v1144 = vld [vmem:[#allocation10 + $0x20] sm:$0xf]
    %v1145 = vld [vmem:[#allocation10 + $0x24] sm:$0xff]
    %v1146 = vld [vmem:[#allocation10 + $0x2c] sm:$0xf]
    %v1147 = vld [vmem:[#allocation10 + $0x30] sm:$0xff]
    %v1148 = vld [vmem:[#allocation10 + $0x38] sm:$0xf]
    %v1149 = vld [vmem:[#allocation10 + $0x3c] sm:$0xff]
    %v1150 = vld [vmem:[#allocation10 + $0x44] sm:$0xf]
    %v1151 = vld [vmem:[#allocation10 + $0x48] sm:$0xff]
    %v1152 = vld [vmem:[#allocation10 + $0x50] sm:$0xf]
    %v1153 = vld [vmem:[#allocation10 + $0x54] sm:$0xff]
    %v1154 = vld [vmem:[#allocation10 + $0x5c] sm:$0xf]
    %v1155 = vld [vmem:[#allocation10 + $0x60] sm:$0xff]
    %v1156 = vld [vmem:[#allocation10 + $0x68] sm:$0xf]
    %v1157 = vld [vmem:[#allocation10 + $0x6c] sm:$0xff]
    %v1158 = vld [vmem:[#allocation10 + $0x74] sm:$0xf]
    %v1159 = vld [vmem:[#allocation10 + $0x78] sm:$0xff]
    %v1160 = vld [vmem:[#allocation10 + $0x80] sm:$0xf]
    %v1161 = vld [vmem:[#allocation10 + $0x84] sm:$0xff]
    %v1162 = vld [vmem:[#allocation10 + $0x8c] sm:$0xf]
    %v1163 = vld [vmem:[#allocation10 + $0x90] sm:$0xff]
    %v1164 = vld [vmem:[#allocation10 + $0x98] sm:$0xf]
    %v1165 = vld [vmem:[#allocation10 + $0x9c] sm:$0xff]
    %v1166 = vld [vmem:[#allocation10 + $0xa4] sm:$0xf]
    %v1167 = vld [vmem:[#allocation10 + $0xa8] sm:$0xff]
    %v1168 = vld [vmem:[#allocation10 + $0xb0] sm:$0xf]
    %v1169 = vld [vmem:[#allocation10 + $0xb4] sm:$0xff]
    %v1170 = vld [vmem:[#allocation10 + $0xbc] sm:$0xf]
    %v1171 = vld [vmem:[%s8] sm:$0x7]
    %v1173 = vlaneseq
    %v1174 = vshrl.u32 %v1173, 7
    %v1175 = vsub.s32 0, %v1174
    %v1176 = vrot.slane %v1171, %v1175
    %v1177 = vlaneseq
    %v1178 = vshrl.u32 %v1177, 7
    %v1179 = vsub.s32 1, %v1178
    %v1180 = vrot.slane %v1171, %v1179
    %v1181 = vlaneseq
    %v1182 = vshrl.u32 %v1181, 7
    %v1183 = vsub.s32 2, %v1182
    %v1184 = vrot.slane %v1171, %v1183
    %v1220 = vunpack.c.l.b16 %v1139
    %v1221 = vunpack.c.h.b16 %v1139
    %v1222 = vunpack.c.l.b16 %v1140
    %v1223 = vunpack.c.l.b16 %v1141
    %v1224 = vunpack.c.h.b16 %v1141
    %v1225 = vunpack.c.l.b16 %v1142
    %v1226 = vunpack.c.l.b16 %v1143
    %v1227 = vunpack.c.h.b16 %v1143
    %v1228 = vunpack.c.l.b16 %v1144
    %v1229 = vunpack.c.l.b16 %v1145
    %v1230 = vunpack.c.h.b16 %v1145
    %v1231 = vunpack.c.l.b16 %v1146
    %v1232 = vunpack.c.l.b16 %v1147
    %v1233 = vunpack.c.h.b16 %v1147
    %v1234 = vunpack.c.l.b16 %v1148
    %v1235 = vunpack.c.l.b16 %v1149
    %v1236 = vunpack.c.h.b16 %v1149
    %v1237 = vunpack.c.l.b16 %v1150
    %v1238 = vunpack.c.l.b16 %v1151
    %v1239 = vunpack.c.h.b16 %v1151
    %v1240 = vunpack.c.l.b16 %v1152
    %v1241 = vunpack.c.l.b16 %v1153
    %v1242 = vunpack.c.h.b16 %v1153
    %v1243 = vunpack.c.l.b16 %v1154
    %v1244 = vunpack.c.l.b16 %v1155
    %v1245 = vunpack.c.h.b16 %v1155
    %v1246 = vunpack.c.l.b16 %v1156
    %v1247 = vunpack.c.l.b16 %v1157
    %v1248 = vunpack.c.h.b16 %v1157
    %v1249 = vunpack.c.l.b16 %v1158
    %v1250 = vunpack.c.l.b16 %v1159
    %v1251 = vunpack.c.h.b16 %v1159
    %v1252 = vunpack.c.l.b16 %v1160
    %v1253 = vunpack.c.l.b16 %v1161
    %v1254 = vunpack.c.h.b16 %v1161
    %v1255 = vunpack.c.l.b16 %v1162
    %v1256 = vunpack.c.l.b16 %v1163
    %v1257 = vunpack.c.h.b16 %v1163
    %v1258 = vunpack.c.l.b16 %v1164
    %v1259 = vunpack.c.l.b16 %v1165
    %v1260 = vunpack.c.h.b16 %v1165
    %v1261 = vunpack.c.l.b16 %v1166
    %v1262 = vunpack.c.l.b16 %v1167
    %v1263 = vunpack.c.h.b16 %v1167
    %v1264 = vunpack.c.l.b16 %v1168
    %v1265 = vunpack.c.l.b16 %v1169
    %v1266 = vunpack.c.h.b16 %v1169
    %v1267 = vunpack.c.l.b16 %v1170
    %v1268 = vpack.c.b16 %v1223, %v1220
    %v1269 = vpack.c.b16 %v1224, %v1221
    %v1270 = vpack.c.b16 %v1225, %v1222
    %v1271 = vpack.c.b16 %v1229, %v1226
    %v1272 = vpack.c.b16 %v1230, %v1227
    %v1273 = vpack.c.b16 %v1231, %v1228
    %v1274 = vpack.c.b16 %v1235, %v1232
    %v1275 = vpack.c.b16 %v1236, %v1233
    %v1276 = vpack.c.b16 %v1237, %v1234
    %v1277 = vpack.c.b16 %v1241, %v1238
    %v1278 = vpack.c.b16 %v1242, %v1239
    %v1279 = vpack.c.b16 %v1243, %v1240
    %v1280 = vpack.c.b16 %v1247, %v1244
    %v1281 = vpack.c.b16 %v1248, %v1245
    %v1282 = vpack.c.b16 %v1249, %v1246
    %v1283 = vpack.c.b16 %v1253, %v1250
    %v1284 = vpack.c.b16 %v1254, %v1251
    %v1285 = vpack.c.b16 %v1255, %v1252
    %v1286 = vpack.c.b16 %v1259, %v1256
    %v1287 = vpack.c.b16 %v1260, %v1257
    %v1288 = vpack.c.b16 %v1261, %v1258
    %v1289 = vpack.c.b16 %v1265, %v1262
    %v1290 = vpack.c.b16 %v1266, %v1263
    %v1291 = vpack.c.b16 %v1267, %v1264
    %1316 = vmatprep.subr.bf16.mxu0 %v1269
    %1317 = vmatpush1.bf16.msra.mxu0 %v1268
    %1318 = vmatprep.subr.bf16.mxu0 %v1272
    %1319 = vmatpush1.bf16.msra.mxu0 %v1271
    %1320 = vmatprep.subr.bf16.mxu0 %v1275
    %1321 = vmatpush1.bf16.msra.mxu0 %v1274
    %1322 = vmatprep.subr.bf16.mxu0 %v1278
    %1323 = vmatpush1.bf16.msra.mxu0 %v1277
    %1324 = vmatprep.subr.bf16.mxu0 %v1281
    %1325 = vmatpush1.bf16.msra.mxu0 %v1280
    %1326 = vmatprep.subr.bf16.mxu0 %v1284
    %1327 = vmatpush1.bf16.msra.mxu0 %v1283
    %1328 = vmatprep.subr.bf16.mxu0 %v1287
    %1329 = vmatpush1.bf16.msra.mxu0 %v1286
    %1330 = vmatprep.subr.bf16.mxu0 %v1290
    %1331 = vmatpush1.bf16.msra.mxu0 %v1289
    %1332 = vmatprep.subr.bf16.mxu0 0
    %1333 = vmatpush1.bf16.msra.mxu0 0
    %1334 = vmatprep.subr.bf16.mxu0 0
    %1335 = vmatpush1.bf16.msra.mxu0 0
    %1336 = vmatprep.subr.bf16.mxu0 0
    %1337 = vmatpush1.bf16.msra.mxu0 0
    %1338 = vmatprep.subr.bf16.mxu0 0
    %1339 = vmatpush1.bf16.msra.mxu0 0
    %1340 = vmatprep.subr.bf16.mxu0 0
    %1341 = vmatpush1.bf16.msra.mxu0 0
    %1342 = vmatprep.subr.bf16.mxu0 0
    %1343 = vmatpush1.bf16.msra.mxu0 0
    %1344 = vmatprep.subr.bf16.mxu0 0
    %1345 = vmatpush1.bf16.msra.mxu0 0
    %1346 = vmatprep.subr.bf16.mxu0 0
    %1347 = vmatpush1.bf16.msra.mxu0 0
    %1348 = vmatprep.mubr.bf16.mxu0 0
    %1349 = vmatmul.mubr.bf16.gmra.mrb[0].mxu0 %v1138
    %v1350 = vpop.f32.mrb[0].mxu0
    %v1351 = vadd.f32 %v1176, %v1350
    %v1352 = vpop.f32.mrb[0].mxu0
    %v1353 = vadd.f32 %v1180, %v1352
    %v1354 = vpop.f32.mrb[0].mxu0
    %v1355 = vpop.f32.mrb[0].mxu0
    %1356 = vdwg.mxu0
    %1357 = vmatprep.subr.bf16.mxu0 0
    %1358 = vmatpush1.bf16.msra.mxu0 %v1270
    %1359 = vmatprep.subr.bf16.mxu0 0
    %1360 = vmatpush1.bf16.msra.mxu0 %v1273
    %1361 = vmatprep.subr.bf16.mxu0 0
    %1362 = vmatpush1.bf16.msra.mxu0 %v1276
    %1363 = vmatprep.subr.bf16.mxu0 0
    %1364 = vmatpush1.bf16.msra.mxu0 %v1279
    %1365 = vmatprep.subr.bf16.mxu0 0
    %1366 = vmatpush1.bf16.msra.mxu0 %v1282
    %1367 = vmatprep.subr.bf16.mxu0 0
    %1368 = vmatpush1.bf16.msra.mxu0 %v1285
    %1369 = vmatprep.subr.bf16.mxu0 0
    %1370 = vmatpush1.bf16.msra.mxu0 %v1288
    %1371 = vmatprep.subr.bf16.mxu0 0
    %1372 = vmatpush1.bf16.msra.mxu0 %v1291
    %1373 = vmatprep.subr.bf16.mxu0 0
    %1374 = vmatpush1.bf16.msra.mxu0 0
    %1375 = vmatprep.subr.bf16.mxu0 0
    %1376 = vmatpush1.bf16.msra.mxu0 0
    %1377 = vmatprep.subr.bf16.mxu0 0
    %1378 = vmatpush1.bf16.msra.mxu0 0
    %1379 = vmatprep.subr.bf16.mxu0 0
    %1380 = vmatpush1.bf16.msra.mxu0 0
    %1381 = vmatprep.subr.bf16.mxu0 0
    %1382 = vmatpush1.bf16.msra.mxu0 0
    %1383 = vmatprep.subr.bf16.mxu0 0
    %1384 = vmatpush1.bf16.msra.mxu0 0
    %1385 = vmatprep.subr.bf16.mxu0 0
    %1386 = vmatpush1.bf16.msra.mxu0 0
    %1387 = vmatprep.subr.bf16.mxu0 0
    %1388 = vmatpush1.bf16.msra.mxu0 0
    %1389 = vmatprep.mubr.bf16.mxu0 0
    %1390 = vmatmul.mubr.bf16.gmra.mrb[0].mxu0 %v1138
    %v1391 = vpop.f32.mrb[0].mxu0
    %v1392 = vadd.f32 %v1184, %v1391
    %v1393 = vpop.f32.mrb[0].mxu0
    %v1394 = vpop.f32.mrb[0].mxu0
    %v1395 = vpop.f32.mrb[0].mxu0
    %1396 = vdwg.mxu0
    %v1397 = vpack.c.bf16 %v1351, %v1351
    %v1398 = vpack.c.bf16 %v1353, %v1353
    %1399 = vmatprep.subr.bf16.mxu0 0
    %1400 = vmatpush1.bf16.xpose.msra.mxu0 %v1398
    %1401 = vmatprep.subr.bf16.mxu0 0
    %1402 = vmatpush1.bf16.xpose.msra.mxu0 0
    %1403 = vmatprep.subr.bf16.mxu0 0
    %1404 = vmatpush1.bf16.xpose.msra.mxu0 0
    %1405 = vmatprep.subr.bf16.mxu0 0
    %1406 = vmatpush1.bf16.xpose.msra.mxu0 0
    %1407 = vmatprep.subr.bf16.mxu0 0
    %1408 = vmatpush1.bf16.xpose.msra.mxu0 0
    %1409 = vmatprep.subr.bf16.mxu0 0
    %1410 = vmatpush1.bf16.xpose.msra.mxu0 0
    %1411 = vmatprep.subr.bf16.mxu0 0
    %1412 = vmatpush1.bf16.xpose.msra.mxu0 0
    %1413 = vmatprep.subr.bf16.mxu0 0
    %1414 = vmatpush1.bf16.xpose.msra.mxu0 0
    %1415 = vmatprep.subr.bf16.mxu0 0
    %1416 = vmatpush1.bf16.xpose.msra.mxu0 0
    %1417 = vmatprep.subr.bf16.mxu0 0
    %1418 = vmatpush1.bf16.xpose.msra.mxu0 0
    %1419 = vmatprep.subr.bf16.mxu0 0
    %1420 = vmatpush1.bf16.xpose.msra.mxu0 0
    %1421 = vmatprep.subr.bf16.mxu0 0
    %1422 = vmatpush1.bf16.xpose.msra.mxu0 0
    %1423 = vmatprep.subr.bf16.mxu0 0
    %1424 = vmatpush1.bf16.xpose.msra.mxu0 0
    %1425 = vmatprep.subr.bf16.mxu0 0
    %1426 = vmatpush1.bf16.xpose.msra.mxu0 0
    %1427 = vmatprep.subr.bf16.mxu0 0
    %1428 = vmatpush1.bf16.xpose.msra.mxu0 0
    %1429 = vmatprep.subr.bf16.mxu0 0
    %1430 = vmatpush1.bf16.xpose.msra.mxu0 0
    %1431 = vmatprep.mubr.bf16.mxu0 0
    %1432 = vmatmul.mubr.bf16.gmra.mrb[0].mxu0 %v1397
    %v1433 = vpop.f32.mrb[0].mxu0
    %v1434 = vadd.f32 0.0, %v1433
    %v1435 = vpop.f32.mrb[0].mxu0
    %v1436 = vpop.f32.mrb[0].mxu0
    %v1437 = vpop.f32.mrb[0].mxu0
    %1438 = vdwg.mxu0
    %vm1439 = vcmask 27648
    %v1440 = vsel %vm1439, %v1434, -inf
    %1441 = vmax.xlane.f32.xlu0 %v1440
    %v1442 = vpop.xlane.xlu0 %1441
    %v1443 = vsub.f32 %v1434, %v1442
    %v1444 = vmul.f32 %v1443, 1.442695
    %v1445 = vpow.pop %v1444
    %v1446 = vsel %vm1439, %v1445, 0.0
    %1447 = vadd.xlane.f32.xlu0 %v1446
    %v1448 = vpop.xlane.xlu0 %1447
    %v1449 = vrcp.pop %v1448
    %v1450 = vmul.f32 %v1445, %v1449
    %v1451 = vpack.c.bf16 %v1450, %v1450
    %v1452 = vpack.c.bf16 %v1392, %v1392
    %vm1453 = vcmask 31744
    %v1455 = vsel %vm1453, %v1451, 0
    %vm1457 = vcmask 1041408
    %v1459 = vsel %vm1457, %v1452, 0
    %1461 = vmatprep.subr.bf16.mxu0 0
    %1462 = vmatpush1.bf16.msra.mxu0 %v1459
    %1463 = vmatprep.subr.bf16.mxu0 0
    %1464 = vmatpush1.bf16.msra.mxu0 0
    %1465 = vmatprep.subr.bf16.mxu0 0
    %1466 = vmatpush1.bf16.msra.mxu0 0
    %1467 = vmatprep.subr.bf16.mxu0 0
    %1468 = vmatpush1.bf16.msra.mxu0 0
    %1469 = vmatprep.subr.bf16.mxu0 0
    %1470 = vmatpush1.bf16.msra.mxu0 0
    %1471 = vmatprep.subr.bf16.mxu0 0
    %1472 = vmatpush1.bf16.msra.mxu0 0
    %1473 = vmatprep.subr.bf16.mxu0 0
    %1474 = vmatpush1.bf16.msra.mxu0 0
    %1475 = vmatprep.subr.bf16.mxu0 0
    %1476 = vmatpush1.bf16.msra.mxu0 0
    %1477 = vmatprep.subr.bf16.mxu0 0
    %1478 = vmatpush1.bf16.msra.mxu0 0
    %1479 = vmatprep.subr.bf16.mxu0 0
    %1480 = vmatpush1.bf16.msra.mxu0 0
    %1481 = vmatprep.subr.bf16.mxu0 0
    %1482 = vmatpush1.bf16.msra.mxu0 0
    %1483 = vmatprep.subr.bf16.mxu0 0
    %1484 = vmatpush1.bf16.msra.mxu0 0
    %1485 = vmatprep.subr.bf16.mxu0 0
    %1486 = vmatpush1.bf16.msra.mxu0 0
    %1487 = vmatprep.subr.bf16.mxu0 0
    %1488 = vmatpush1.bf16.msra.mxu0 0
    %1489 = vmatprep.subr.bf16.mxu0 0
    %1490 = vmatpush1.bf16.msra.mxu0 0
    %1491 = vmatprep.subr.bf16.mxu0 0
    %1492 = vmatpush1.bf16.msra.mxu0 0
    %1493 = vmatprep.mubr.bf16.mxu0 0
    %1494 = vmatmul.mubr.bf16.gmra.mrb[0].mxu0 %v1455
    %v1495 = vpop.f32.mrb[0].mxu0
    %v1496 = vadd.f32 0.0, %v1495
    %v1497 = vpop.f32.mrb[0].mxu0
    %v1498 = vpop.f32.mrb[0].mxu0
    %v1499 = vpop.f32.mrb[0].mxu0
    %1500 = vdwg.mxu0
    %vm1501 = vcmask 1043456
    %v1502 = vsel %vm1501, %v1496, 0.0
    %v1503 = vrot.slane %v1502, 4
    %v1504 = vadd.f32 %v1502, %v1503
    %v1505 = vrot.slane %v1504, 2
    %v1506 = vadd.f32 %v1504, %v1505
    %v1507 = vrot.slane %v1506, 1
    %v1508 = vadd.f32 %v1506, %v1507
    %v1509 = vrcp.pop 4.0
    %v1510 = vmul.f32 %v1508, %v1509
    %s1511 = scalar_lea.vmem [#allocation2], 8
    %v1512 = vld [vmem:[%s1511] sm:$0xff]
    %v1513 = vpack.c.bf16 %v1512, %v1512
    %1514 = vmatprep.subr.bf16.mxu0 0
    %1515 = vmatpush1.bf16.msra.mxu0 %v153
    %1516 = vmatprep.subr.bf16.mxu0 0
    %1517 = vmatpush1.bf16.msra.mxu0 %v154
    %1518 = vmatprep.subr.bf16.mxu0 0
    %1519 = vmatpush1.bf16.msra.mxu0 %v155
    %1520 = vmatprep.subr.bf16.mxu0 0
    %1521 = vmatpush1.bf16.msra.mxu0 %v156
    %1522 = vmatprep.subr.bf16.mxu0 0
    %1523 = vmatpush1.bf16.msra.mxu0 %v157
    %1524 = vmatprep.subr.bf16.mxu0 0
    %1525 = vmatpush1.bf16.msra.mxu0 %v158
    %1526 = vmatprep.subr.bf16.mxu0 0
    %1527 = vmatpush1.bf16.msra.mxu0 %v159
    %1528 = vmatprep.subr.bf16.mxu0 0
    %1529 = vmatpush1.bf16.msra.mxu0 %v160
    %1530 = vmatprep.subr.bf16.mxu0 0
    %1531 = vmatpush1.bf16.msra.mxu0 0
    %1532 = vmatprep.subr.bf16.mxu0 0
    %1533 = vmatpush1.bf16.msra.mxu0 0
    %1534 = vmatprep.subr.bf16.mxu0 0
    %1535 = vmatpush1.bf16.msra.mxu0 0
    %1536 = vmatprep.subr.bf16.mxu0 0
    %1537 = vmatpush1.bf16.msra.mxu0 0
    %1538 = vmatprep.subr.bf16.mxu0 0
    %1539 = vmatpush1.bf16.msra.mxu0 0
    %1540 = vmatprep.subr.bf16.mxu0 0
    %1541 = vmatpush1.bf16.msra.mxu0 0
    %1542 = vmatprep.subr.bf16.mxu0 0
    %1543 = vmatpush1.bf16.msra.mxu0 0
    %1544 = vmatprep.subr.bf16.mxu0 0
    %1545 = vmatpush1.bf16.msra.mxu0 0
    %1546 = vmatprep.mubr.bf16.mxu0 0
    %1547 = vmatmul.mubr.bf16.gmra.mrb[0].mxu0 %v1513
    %v1548 = vpop.f32.mrb[0].mxu0
    %v1549 = vadd.f32 0.0, %v1548
    %v1550 = vpop.f32.mrb[0].mxu0
    %v1551 = vpop.f32.mrb[0].mxu0
    %v1552 = vpop.f32.mrb[0].mxu0
    %1553 = vdwg.mxu0
    %v1554 = vadd.f32 %v213, %v1549
    %v1556 = vshrl.u32 %v1513, 16
    %v1558 = vshll.u32 %v1513, 16
    %v1560 = vrot.slane %v1558, 1
    %v1561 = vor.u32 %v1556, %v1560
    %1563 = vmatprep.subr.bf16.mxu0 0
    %1564 = vmatpush1.bf16.msra.mxu0 %v273
    %1565 = vmatprep.subr.bf16.mxu0 0
    %1566 = vmatpush1.bf16.msra.mxu0 %v274
    %1567 = vmatprep.subr.bf16.mxu0 0
    %1568 = vmatpush1.bf16.msra.mxu0 %v275
    %1569 = vmatprep.subr.bf16.mxu0 0
    %1570 = vmatpush1.bf16.msra.mxu0 %v276
    %1571 = vmatprep.subr.bf16.mxu0 0
    %1572 = vmatpush1.bf16.msra.mxu0 %v277
    %1573 = vmatprep.subr.bf16.mxu0 0
    %1574 = vmatpush1.bf16.msra.mxu0 %v278
    %1575 = vmatprep.subr.bf16.mxu0 0
    %1576 = vmatpush1.bf16.msra.mxu0 %v279
    %1577 = vmatprep.subr.bf16.mxu0 0
    %1578 = vmatpush1.bf16.msra.mxu0 %v280
    %1579 = vmatprep.subr.bf16.mxu0 0
    %1580 = vmatpush1.bf16.msra.mxu0 0
    %1581 = vmatprep.subr.bf16.mxu0 0
    %1582 = vmatpush1.bf16.msra.mxu0 0
    %1583 = vmatprep.subr.bf16.mxu0 0
    %1584 = vmatpush1.bf16.msra.mxu0 0
    %1585 = vmatprep.subr.bf16.mxu0 0
    %1586 = vmatpush1.bf16.msra.mxu0 0
    %1587 = vmatprep.subr.bf16.mxu0 0
    %1588 = vmatpush1.bf16.msra.mxu0 0
    %1589 = vmatprep.subr.bf16.mxu0 0
    %1590 = vmatpush1.bf16.msra.mxu0 0
    %1591 = vmatprep.subr.bf16.mxu0 0
    %1592 = vmatpush1.bf16.msra.mxu0 0
    %1593 = vmatprep.subr.bf16.mxu0 0
    %1594 = vmatpush1.bf16.msra.mxu0 0
    %1595 = vmatprep.mubr.bf16.mxu0 0
    %1596 = vmatmul.mubr.bf16.gmra.mrb[0].mxu0 %v1561
    %v1597 = vpop.f32.mrb[0].mxu0
    %v1598 = vadd.f32 0.0, %v1597
    %v1599 = vpop.f32.mrb[0].mxu0
    %v1600 = vpop.f32.mrb[0].mxu0
    %v1601 = vpop.f32.mrb[0].mxu0
    %1602 = vdwg.mxu0
    %v1603 = vadd.f32 %v1554, %v1598
    %v1605 = vrot.slane %v1513, 1
    %1607 = vmatprep.subr.bf16.mxu0 0
    %1608 = vmatpush1.bf16.msra.mxu0 %v382
    %1609 = vmatprep.subr.bf16.mxu0 0
    %1610 = vmatpush1.bf16.msra.mxu0 %v383
    %1611 = vmatprep.subr.bf16.mxu0 0
    %1612 = vmatpush1.bf16.msra.mxu0 %v384
    %1613 = vmatprep.subr.bf16.mxu0 0
    %1614 = vmatpush1.bf16.msra.mxu0 %v385
    %1615 = vmatprep.subr.bf16.mxu0 0
    %1616 = vmatpush1.bf16.msra.mxu0 %v386
    %1617 = vmatprep.subr.bf16.mxu0 0
    %1618 = vmatpush1.bf16.msra.mxu0 %v387
    %1619 = vmatprep.subr.bf16.mxu0 0
    %1620 = vmatpush1.bf16.msra.mxu0 %v388
    %1621 = vmatprep.subr.bf16.mxu0 0
    %1622 = vmatpush1.bf16.msra.mxu0 %v389
    %1623 = vmatprep.subr.bf16.mxu0 0
    %1624 = vmatpush1.bf16.msra.mxu0 0
    %1625 = vmatprep.subr.bf16.mxu0 0
    %1626 = vmatpush1.bf16.msra.mxu0 0
    %1627 = vmatprep.subr.bf16.mxu0 0
    %1628 = vmatpush1.bf16.msra.mxu0 0
    %1629 = vmatprep.subr.bf16.mxu0 0
    %1630 = vmatpush1.bf16.msra.mxu0 0
    %1631 = vmatprep.subr.bf16.mxu0 0
    %1632 = vmatpush1.bf16.msra.mxu0 0
    %1633 = vmatprep.subr.bf16.mxu0 0
    %1634 = vmatpush1.bf16.msra.mxu0 0
    %1635 = vmatprep.subr.bf16.mxu0 0
    %1636 = vmatpush1.bf16.msra.mxu0 0
    %1637 = vmatprep.subr.bf16.mxu0 0
    %1638 = vmatpush1.bf16.msra.mxu0 0
    %1639 = vmatprep.mubr.bf16.mxu0 0
    %1640 = vmatmul.mubr.bf16.gmra.mrb[0].mxu0 %v1605
    %v1641 = vpop.f32.mrb[0].mxu0
    %v1642 = vadd.f32 0.0, %v1641
    %v1643 = vpop.f32.mrb[0].mxu0
    %v1644 = vpop.f32.mrb[0].mxu0
    %v1645 = vpop.f32.mrb[0].mxu0
    %1646 = vdwg.mxu0
    %v1647 = vadd.f32 %v1603, %v1642
    %v1648 = vpack.c.bf16 %v1647, %v1647
    %1649 = vmatprep.subr.bf16.mxu0 %v570
    %1650 = vmatpush1.bf16.msra.mxu0 %v569
    %1651 = vmatprep.subr.bf16.mxu0 %v573
    %1652 = vmatpush1.bf16.msra.mxu0 %v572
    %1653 = vmatprep.subr.bf16.mxu0 %v576
    %1654 = vmatpush1.bf16.msra.mxu0 %v575
    %1655 = vmatprep.subr.bf16.mxu0 %v579
    %1656 = vmatpush1.bf16.msra.mxu0 %v578
    %1657 = vmatprep.subr.bf16.mxu0 %v582
    %1658 = vmatpush1.bf16.msra.mxu0 %v581
    %1659 = vmatprep.subr.bf16.mxu0 %v585
    %1660 = vmatpush1.bf16.msra.mxu0 %v584
    %1661 = vmatprep.subr.bf16.mxu0 %v588
    %1662 = vmatpush1.bf16.msra.mxu0 %v587
    %1663 = vmatprep.subr.bf16.mxu0 %v591
    %1664 = vmatpush1.bf16.msra.mxu0 %v590
    %1665 = vmatprep.subr.bf16.mxu0 0
    %1666 = vmatpush1.bf16.msra.mxu0 0
    %1667 = vmatprep.subr.bf16.mxu0 0
    %1668 = vmatpush1.bf16.msra.mxu0 0
    %1669 = vmatprep.subr.bf16.mxu0 0
    %1670 = vmatpush1.bf16.msra.mxu0 0
    %1671 = vmatprep.subr.bf16.mxu0 0
    %1672 = vmatpush1.bf16.msra.mxu0 0
    %1673 = vmatprep.subr.bf16.mxu0 0
    %1674 = vmatpush1.bf16.msra.mxu0 0
    %1675 = vmatprep.subr.bf16.mxu0 0
    %1676 = vmatpush1.bf16.msra.mxu0 0
    %1677 = vmatprep.subr.bf16.mxu0 0
    %1678 = vmatpush1.bf16.msra.mxu0 0
    %1679 = vmatprep.subr.bf16.mxu0 0
    %1680 = vmatpush1.bf16.msra.mxu0 0
    %1681 = vmatprep.mubr.bf16.mxu0 0
    %1682 = vmatmul.mubr.bf16.gmra.mrb[0].mxu0 %v1648
    %v1683 = vpop.f32.mrb[0].mxu0
    %v1684 = vadd.f32 %v477, %v1683
    %v1685 = vpop.f32.mrb[0].mxu0
    %v1686 = vadd.f32 %v481, %v1685
    %v1687 = vpop.f32.mrb[0].mxu0
    %v1688 = vpop.f32.mrb[0].mxu0
    %1689 = vdwg.mxu0
    %1690 = vmatprep.subr.bf16.mxu0 0
    %1691 = vmatpush1.bf16.msra.mxu0 %v571
    %1692 = vmatprep.subr.bf16.mxu0 0
    %1693 = vmatpush1.bf16.msra.mxu0 %v574
    %1694 = vmatprep.subr.bf16.mxu0 0
    %1695 = vmatpush1.bf16.msra.mxu0 %v577
    %1696 = vmatprep.subr.bf16.mxu0 0
    %1697 = vmatpush1.bf16.msra.mxu0 %v580
    %1698 = vmatprep.subr.bf16.mxu0 0
    %1699 = vmatpush1.bf16.msra.mxu0 %v583
    %1700 = vmatprep.subr.bf16.mxu0 0
    %1701 = vmatpush1.bf16.msra.mxu0 %v586
    %1702 = vmatprep.subr.bf16.mxu0 0
    %1703 = vmatpush1.bf16.msra.mxu0 %v589
    %1704 = vmatprep.subr.bf16.mxu0 0
    %1705 = vmatpush1.bf16.msra.mxu0 %v592
    %1706 = vmatprep.subr.bf16.mxu0 0
    %1707 = vmatpush1.bf16.msra.mxu0 0
    %1708 = vmatprep.subr.bf16.mxu0 0
    %1709 = vmatpush1.bf16.msra.mxu0 0
    %1710 = vmatprep.subr.bf16.mxu0 0
    %1711 = vmatpush1.bf16.msra.mxu0 0
    %1712 = vmatprep.subr.bf16.mxu0 0
    %1713 = vmatpush1.bf16.msra.mxu0 0
    %1714 = vmatprep.subr.bf16.mxu0 0
    %1715 = vmatpush1.bf16.msra.mxu0 0
    %1716 = vmatprep.subr.bf16.mxu0 0
    %1717 = vmatpush1.bf16.msra.mxu0 0
    %1718 = vmatprep.subr.bf16.mxu0 0
    %1719 = vmatpush1.bf16.msra.mxu0 0
    %1720 = vmatprep.subr.bf16.mxu0 0
    %1721 = vmatpush1.bf16.msra.mxu0 0
    %1722 = vmatprep.mubr.bf16.mxu0 0
    %1723 = vmatmul.mubr.bf16.gmra.mrb[0].mxu0 %v1648
    %v1724 = vpop.f32.mrb[0].mxu0
    %v1725 = vadd.f32 %v485, %v1724
    %v1726 = vpop.f32.mrb[0].mxu0
    %v1727 = vpop.f32.mrb[0].mxu0
    %v1728 = vpop.f32.mrb[0].mxu0
    %1729 = vdwg.mxu0
    %v1730 = vpack.c.bf16 %v1684, %v1684
    %v1731 = vpack.c.bf16 %v1686, %v1686
    %1732 = vmatprep.subr.bf16.mxu0 0
    %1733 = vmatpush1.bf16.xpose.msra.mxu0 %v1731
    %1734 = vmatprep.subr.bf16.mxu0 0
    %1735 = vmatpush1.bf16.xpose.msra.mxu0 0
    %1736 = vmatprep.subr.bf16.mxu0 0
    %1737 = vmatpush1.bf16.xpose.msra.mxu0 0
    %1738 = vmatprep.subr.bf16.mxu0 0
    %1739 = vmatpush1.bf16.xpose.msra.mxu0 0
    %1740 = vmatprep.subr.bf16.mxu0 0
    %1741 = vmatpush1.bf16.xpose.msra.mxu0 0
    %1742 = vmatprep.subr.bf16.mxu0 0
    %1743 = vmatpush1.bf16.xpose.msra.mxu0 0
    %1744 = vmatprep.subr.bf16.mxu0 0
    %1745 = vmatpush1.bf16.xpose.msra.mxu0 0
    %1746 = vmatprep.subr.bf16.mxu0 0
    %1747 = vmatpush1.bf16.xpose.msra.mxu0 0
    %1748 = vmatprep.subr.bf16.mxu0 0
    %1749 = vmatpush1.bf16.xpose.msra.mxu0 0
    %1750 = vmatprep.subr.bf16.mxu0 0
    %1751 = vmatpush1.bf16.xpose.msra.mxu0 0
    %1752 = vmatprep.subr.bf16.mxu0 0
    %1753 = vmatpush1.bf16.xpose.msra.mxu0 0
    %1754 = vmatprep.subr.bf16.mxu0 0
    %1755 = vmatpush1.bf16.xpose.msra.mxu0 0
    %1756 = vmatprep.subr.bf16.mxu0 0
    %1757 = vmatpush1.bf16.xpose.msra.mxu0 0
    %1758 = vmatprep.subr.bf16.mxu0 0
    %1759 = vmatpush1.bf16.xpose.msra.mxu0 0
    %1760 = vmatprep.subr.bf16.mxu0 0
    %1761 = vmatpush1.bf16.xpose.msra.mxu0 0
    %1762 = vmatprep.subr.bf16.mxu0 0
    %1763 = vmatpush1.bf16.xpose.msra.mxu0 0
    %1764 = vmatprep.mubr.bf16.mxu0 0
    %1765 = vmatmul.mubr.bf16.gmra.mrb[0].mxu0 %v1730
    %v1766 = vpop.f32.mrb[0].mxu0
    %v1767 = vadd.f32 0.0, %v1766
    %v1768 = vpop.f32.mrb[0].mxu0
    %v1769 = vpop.f32.mrb[0].mxu0
    %v1770 = vpop.f32.mrb[0].mxu0
    %1771 = vdwg.mxu0
    %v1772 = vsel %vm740, %v1767, -inf
    %1773 = vmax.xlane.f32.xlu0 %v1772
    %v1774 = vpop.xlane.xlu0 %1773
    %v1775 = vsub.f32 %v1767, %v1774
    %v1776 = vmul.f32 %v1775, 1.442695
    %v1777 = vpow.pop %v1776
    %v1778 = vsel %vm740, %v1777, 0.0
    %1779 = vadd.xlane.f32.xlu0 %v1778
    %v1780 = vpop.xlane.xlu0 %1779
    %v1781 = vrcp.pop %v1780
    %v1782 = vmul.f32 %v1777, %v1781
    %v1783 = vpack.c.bf16 %v1782, %v1782
    %v1784 = vpack.c.bf16 %v1725, %v1725
    %v1786 = vsel %vm754, %v1783, 0
    %v1789 = vsel %vm758, %v1784, 0
    %1791 = vmatprep.subr.bf16.mxu0 0
    %1792 = vmatpush1.bf16.msra.mxu0 %v1789
    %1793 = vmatprep.subr.bf16.mxu0 0
    %1794 = vmatpush1.bf16.msra.mxu0 0
    %1795 = vmatprep.subr.bf16.mxu0 0
    %1796 = vmatpush1.bf16.msra.mxu0 0
    %1797 = vmatprep.subr.bf16.mxu0 0
    %1798 = vmatpush1.bf16.msra.mxu0 0
    %1799 = vmatprep.subr.bf16.mxu0 0
    %1800 = vmatpush1.bf16.msra.mxu0 0
    %1801 = vmatprep.subr.bf16.mxu0 0
    %1802 = vmatpush1.bf16.msra.mxu0 0
    %1803 = vmatprep.subr.bf16.mxu0 0
    %1804 = vmatpush1.bf16.msra.mxu0 0
    %1805 = vmatprep.subr.bf16.mxu0 0
    %1806 = vmatpush1.bf16.msra.mxu0 0
    %1807 = vmatprep.subr.bf16.mxu0 0
    %1808 = vmatpush1.bf16.msra.mxu0 0
    %1809 = vmatprep.subr.bf16.mxu0 0
    %1810 = vmatpush1.bf16.msra.mxu0 0
    %1811 = vmatprep.subr.bf16.mxu0 0
    %1812 = vmatpush1.bf16.msra.mxu0 0
    %1813 = vmatprep.subr.bf16.mxu0 0
    %1814 = vmatpush1.bf16.msra.mxu0 0
    %1815 = vmatprep.subr.bf16.mxu0 0
    %1816 = vmatpush1.bf16.msra.mxu0 0
    %1817 = vmatprep.subr.bf16.mxu0 0
    %1818 = vmatpush1.bf16.msra.mxu0 0
    %1819 = vmatprep.subr.bf16.mxu0 0
    %1820 = vmatpush1.bf16.msra.mxu0 0
    %1821 = vmatprep.subr.bf16.mxu0 0
    %1822 = vmatpush1.bf16.msra.mxu0 0
    %1823 = vmatprep.mubr.bf16.mxu0 0
    %1824 = vmatmul.mubr.bf16.gmra.mrb[0].mxu0 %v1786
    %v1825 = vpop.f32.mrb[0].mxu0
    %v1826 = vadd.f32 0.0, %v1825
    %v1827 = vpop.f32.mrb[0].mxu0
    %v1828 = vpop.f32.mrb[0].mxu0
    %v1829 = vpop.f32.mrb[0].mxu0
    %1830 = vdwg.mxu0
    %v1831 = vpack.c.bf16 %v1826, %v1826
    %1832 = vmatprep.subr.bf16.mxu0 0
    %1833 = vmatpush1.bf16.msra.mxu0 %v852
    %1834 = vmatprep.subr.bf16.mxu0 0
    %1835 = vmatpush1.bf16.msra.mxu0 %v853
    %1836 = vmatprep.subr.bf16.mxu0 0
    %1837 = vmatpush1.bf16.msra.mxu0 %v854
    %1838 = vmatprep.subr.bf16.mxu0 0
    %1839 = vmatpush1.bf16.msra.mxu0 %v855
    %1840 = vmatprep.subr.bf16.mxu0 0
    %1841 = vmatpush1.bf16.msra.mxu0 %v856
    %1842 = vmatprep.subr.bf16.mxu0 0
    %1843 = vmatpush1.bf16.msra.mxu0 %v857
    %1844 = vmatprep.subr.bf16.mxu0 0
    %1845 = vmatpush1.bf16.msra.mxu0 %v858
    %1846 = vmatprep.subr.bf16.mxu0 0
    %1847 = vmatpush1.bf16.msra.mxu0 %v859
    %1848 = vmatprep.subr.bf16.mxu0 0
    %1849 = vmatpush1.bf16.msra.mxu0 0
    %1850 = vmatprep.subr.bf16.mxu0 0
    %1851 = vmatpush1.bf16.msra.mxu0 0
    %1852 = vmatprep.subr.bf16.mxu0 0
    %1853 = vmatpush1.bf16.msra.mxu0 0
    %1854 = vmatprep.subr.bf16.mxu0 0
    %1855 = vmatpush1.bf16.msra.mxu0 0
    %1856 = vmatprep.subr.bf16.mxu0 0
    %1857 = vmatpush1.bf16.msra.mxu0 0
    %1858 = vmatprep.subr.bf16.mxu0 0
    %1859 = vmatpush1.bf16.msra.mxu0 0
    %1860 = vmatprep.subr.bf16.mxu0 0
    %1861 = vmatpush1.bf16.msra.mxu0 0
    %1862 = vmatprep.subr.bf16.mxu0 0
    %1863 = vmatpush1.bf16.msra.mxu0 0
    %1864 = vmatprep.mubr.bf16.mxu0 0
    %1865 = vmatmul.mubr.bf16.gmra.mrb[0].mxu0 %v1831
    %v1866 = vpop.f32.mrb[0].mxu0
    %v1867 = vadd.f32 0.0, %v1866
    %v1868 = vpop.f32.mrb[0].mxu0
    %v1869 = vpop.f32.mrb[0].mxu0
    %v1870 = vpop.f32.mrb[0].mxu0
    %1871 = vdwg.mxu0
    %v1872 = vadd.f32 %v912, %v1867
    %v1874 = vshrl.u32 %v1831, 16
    %v1876 = vshll.u32 %v1831, 16
    %v1878 = vrot.slane %v1876, 1
    %v1879 = vor.u32 %v1874, %v1878
    %1881 = vmatprep.subr.bf16.mxu0 0
    %1882 = vmatpush1.bf16.msra.mxu0 %v972
    %1883 = vmatprep.subr.bf16.mxu0 0
    %1884 = vmatpush1.bf16.msra.mxu0 %v973
    %1885 = vmatprep.subr.bf16.mxu0 0
    %1886 = vmatpush1.bf16.msra.mxu0 %v974
    %1887 = vmatprep.subr.bf16.mxu0 0
    %1888 = vmatpush1.bf16.msra.mxu0 %v975
    %1889 = vmatprep.subr.bf16.mxu0 0
    %1890 = vmatpush1.bf16.msra.mxu0 %v976
    %1891 = vmatprep.subr.bf16.mxu0 0
    %1892 = vmatpush1.bf16.msra.mxu0 %v977
    %1893 = vmatprep.subr.bf16.mxu0 0
    %1894 = vmatpush1.bf16.msra.mxu0 %v978
    %1895 = vmatprep.subr.bf16.mxu0 0
    %1896 = vmatpush1.bf16.msra.mxu0 %v979
    %1897 = vmatprep.subr.bf16.mxu0 0
    %1898 = vmatpush1.bf16.msra.mxu0 0
    %1899 = vmatprep.subr.bf16.mxu0 0
    %1900 = vmatpush1.bf16.msra.mxu0 0
    %1901 = vmatprep.subr.bf16.mxu0 0
    %1902 = vmatpush1.bf16.msra.mxu0 0
    %1903 = vmatprep.subr.bf16.mxu0 0
    %1904 = vmatpush1.bf16.msra.mxu0 0
    %1905 = vmatprep.subr.bf16.mxu0 0
    %1906 = vmatpush1.bf16.msra.mxu0 0
    %1907 = vmatprep.subr.bf16.mxu0 0
    %1908 = vmatpush1.bf16.msra.mxu0 0
    %1909 = vmatprep.subr.bf16.mxu0 0
    %1910 = vmatpush1.bf16.msra.mxu0 0
    %1911 = vmatprep.subr.bf16.mxu0 0
    %1912 = vmatpush1.bf16.msra.mxu0 0
    %1913 = vmatprep.mubr.bf16.mxu0 0
    %1914 = vmatmul.mubr.bf16.gmra.mrb[0].mxu0 %v1879
    %v1915 = vpop.f32.mrb[0].mxu0
    %v1916 = vadd.f32 0.0, %v1915
    %v1917 = vpop.f32.mrb[0].mxu0
    %v1918 = vpop.f32.mrb[0].mxu0
    %v1919 = vpop.f32.mrb[0].mxu0
    %1920 = vdwg.mxu0
    %v1921 = vadd.f32 %v1872, %v1916
    %v1923 = vrot.slane %v1831, 1
    %1925 = vmatprep.subr.bf16.mxu0 0
    %1926 = vmatpush1.bf16.msra.mxu0 %v1081
    %1927 = vmatprep.subr.bf16.mxu0 0
    %1928 = vmatpush1.bf16.msra.mxu0 %v1082
    %1929 = vmatprep.subr.bf16.mxu0 0
    %1930 = vmatpush1.bf16.msra.mxu0 %v1083
    %1931 = vmatprep.subr.bf16.mxu0 0
    %1932 = vmatpush1.bf16.msra.mxu0 %v1084
    %1933 = vmatprep.subr.bf16.mxu0 0
    %1934 = vmatpush1.bf16.msra.mxu0 %v1085
    %1935 = vmatprep.subr.bf16.mxu0 0
    %1936 = vmatpush1.bf16.msra.mxu0 %v1086
    %1937 = vmatprep.subr.bf16.mxu0 0
    %1938 = vmatpush1.bf16.msra.mxu0 %v1087
    %1939 = vmatprep.subr.bf16.mxu0 0
    %1940 = vmatpush1.bf16.msra.mxu0 %v1088
    %1941 = vmatprep.subr.bf16.mxu0 0
    %1942 = vmatpush1.bf16.msra.mxu0 0
    %1943 = vmatprep.subr.bf16.mxu0 0
    %1944 = vmatpush1.bf16.msra.mxu0 0
    %1945 = vmatprep.subr.bf16.mxu0 0
    %1946 = vmatpush1.bf16.msra.mxu0 0
    %1947 = vmatprep.subr.bf16.mxu0 0
    %1948 = vmatpush1.bf16.msra.mxu0 0
    %1949 = vmatprep.subr.bf16.mxu0 0
    %1950 = vmatpush1.bf16.msra.mxu0 0
    %1951 = vmatprep.subr.bf16.mxu0 0
    %1952 = vmatpush1.bf16.msra.mxu0 0
    %1953 = vmatprep.subr.bf16.mxu0 0
    %1954 = vmatpush1.bf16.msra.mxu0 0
    %1955 = vmatprep.subr.bf16.mxu0 0
    %1956 = vmatpush1.bf16.msra.mxu0 0
    %1957 = vmatprep.mubr.bf16.mxu0 0
    %1958 = vmatmul.mubr.bf16.gmra.mrb[0].mxu0 %v1923
    %v1959 = vpop.f32.mrb[0].mxu0
    %v1960 = vadd.f32 0.0, %v1959
    %v1961 = vpop.f32.mrb[0].mxu0
    %v1962 = vpop.f32.mrb[0].mxu0
    %v1963 = vpop.f32.mrb[0].mxu0
    %1964 = vdwg.mxu0
    %v1965 = vadd.f32 %v1921, %v1960
    %v1966 = vpack.c.bf16 %v1965, %v1965
    %1967 = vmatprep.subr.bf16.mxu0 %v1269
    %1968 = vmatpush1.bf16.msra.mxu0 %v1268
    %1969 = vmatprep.subr.bf16.mxu0 %v1272
    %1970 = vmatpush1.bf16.msra.mxu0 %v1271
    %1971 = vmatprep.subr.bf16.mxu0 %v1275
    %1972 = vmatpush1.bf16.msra.mxu0 %v1274
    %1973 = vmatprep.subr.bf16.mxu0 %v1278
    %1974 = vmatpush1.bf16.msra.mxu0 %v1277
    %1975 = vmatprep.subr.bf16.mxu0 %v1281
    %1976 = vmatpush1.bf16.msra.mxu0 %v1280
    %1977 = vmatprep.subr.bf16.mxu0 %v1284
    %1978 = vmatpush1.bf16.msra.mxu0 %v1283
    %1979 = vmatprep.subr.bf16.mxu0 %v1287
    %1980 = vmatpush1.bf16.msra.mxu0 %v1286
    %1981 = vmatprep.subr.bf16.mxu0 %v1290
    %1982 = vmatpush1.bf16.msra.mxu0 %v1289
    %1983 = vmatprep.subr.bf16.mxu0 0
    %1984 = vmatpush1.bf16.msra.mxu0 0
    %1985 = vmatprep.subr.bf16.mxu0 0
    %1986 = vmatpush1.bf16.msra.mxu0 0
    %1987 = vmatprep.subr.bf16.mxu0 0
    %1988 = vmatpush1.bf16.msra.mxu0 0
    %1989 = vmatprep.subr.bf16.mxu0 0
    %1990 = vmatpush1.bf16.msra.mxu0 0
    %1991 = vmatprep.subr.bf16.mxu0 0
    %1992 = vmatpush1.bf16.msra.mxu0 0
    %1993 = vmatprep.subr.bf16.mxu0 0
    %1994 = vmatpush1.bf16.msra.mxu0 0
    %1995 = vmatprep.subr.bf16.mxu0 0
    %1996 = vmatpush1.bf16.msra.mxu0 0
    %1997 = vmatprep.subr.bf16.mxu0 0
    %1998 = vmatpush1.bf16.msra.mxu0 0
    %1999 = vmatprep.mubr.bf16.mxu0 0
    %2000 = vmatmul.mubr.bf16.gmra.mrb[0].mxu0 %v1966
    %v2001 = vpop.f32.mrb[0].mxu0
    %v2002 = vadd.f32 %v1176, %v2001
    %v2003 = vpop.f32.mrb[0].mxu0
    %v2004 = vadd.f32 %v1180, %v2003
    %v2005 = vpop.f32.mrb[0].mxu0
    %v2006 = vpop.f32.mrb[0].mxu0
    %2007 = vdwg.mxu0
    %2008 = vmatprep.subr.bf16.mxu0 0
    %2009 = vmatpush1.bf16.msra.mxu0 %v1270
    %2010 = vmatprep.subr.bf16.mxu0 0
    %2011 = vmatpush1.bf16.msra.mxu0 %v1273
    %2012 = vmatprep.subr.bf16.mxu0 0
    %2013 = vmatpush1.bf16.msra.mxu0 %v1276
    %2014 = vmatprep.subr.bf16.mxu0 0
    %2015 = vmatpush1.bf16.msra.mxu0 %v1279
    %2016 = vmatprep.subr.bf16.mxu0 0
    %2017 = vmatpush1.bf16.msra.mxu0 %v1282
    %2018 = vmatprep.subr.bf16.mxu0 0
    %2019 = vmatpush1.bf16.msra.mxu0 %v1285
    %2020 = vmatprep.subr.bf16.mxu0 0
    %2021 = vmatpush1.bf16.msra.mxu0 %v1288
    %2022 = vmatprep.subr.bf16.mxu0 0
    %2023 = vmatpush1.bf16.msra.mxu0 %v1291
    %2024 = vmatprep.subr.bf16.mxu0 0
    %2025 = vmatpush1.bf16.msra.mxu0 0
    %2026 = vmatprep.subr.bf16.mxu0 0
    %2027 = vmatpush1.bf16.msra.mxu0 0
    %2028 = vmatprep.subr.bf16.mxu0 0
    %2029 = vmatpush1.bf16.msra.mxu0 0
    %2030 = vmatprep.subr.bf16.mxu0 0
    %2031 = vmatpush1.bf16.msra.mxu0 0
    %2032 = vmatprep.subr.bf16.mxu0 0
    %2033 = vmatpush1.bf16.msra.mxu0 0
    %2034 = vmatprep.subr.bf16.mxu0 0
    %2035 = vmatpush1.bf16.msra.mxu0 0
    %2036 = vmatprep.subr.bf16.mxu0 0
    %2037 = vmatpush1.bf16.msra.mxu0 0
    %2038 = vmatprep.subr.bf16.mxu0 0
    %2039 = vmatpush1.bf16.msra.mxu0 0
    %2040 = vmatprep.mubr.bf16.mxu0 0
    %2041 = vmatmul.mubr.bf16.gmra.mrb[0].mxu0 %v1966
    %v2042 = vpop.f32.mrb[0].mxu0
    %v2043 = vadd.f32 %v1184, %v2042
    %v2044 = vpop.f32.mrb[0].mxu0
    %v2045 = vpop.f32.mrb[0].mxu0
    %v2046 = vpop.f32.mrb[0].mxu0
    %2047 = vdwg.mxu0
    %v2048 = vpack.c.bf16 %v2002, %v2002
    %v2049 = vpack.c.bf16 %v2004, %v2004
    %2050 = vmatprep.subr.bf16.mxu0 0
    %2051 = vmatpush1.bf16.xpose.msra.mxu0 %v2049
    %2052 = vmatprep.subr.bf16.mxu0 0
    %2053 = vmatpush1.bf16.xpose.msra.mxu0 0
    %2054 = vmatprep.subr.bf16.mxu0 0
    %2055 = vmatpush1.bf16.xpose.msra.mxu0 0
    %2056 = vmatprep.subr.bf16.mxu0 0
    %2057 = vmatpush1.bf16.xpose.msra.mxu0 0
    %2058 = vmatprep.subr.bf16.mxu0 0
    %2059 = vmatpush1.bf16.xpose.msra.mxu0 0
    %2060 = vmatprep.subr.bf16.mxu0 0
    %2061 = vmatpush1.bf16.xpose.msra.mxu0 0
    %2062 = vmatprep.subr.bf16.mxu0 0
    %2063 = vmatpush1.bf16.xpose.msra.mxu0 0
    %2064 = vmatprep.subr.bf16.mxu0 0
    %2065 = vmatpush1.bf16.xpose.msra.mxu0 0
    %2066 = vmatprep.subr.bf16.mxu0 0
    %2067 = vmatpush1.bf16.xpose.msra.mxu0 0
    %2068 = vmatprep.subr.bf16.mxu0 0
    %2069 = vmatpush1.bf16.xpose.msra.mxu0 0
    %2070 = vmatprep.subr.bf16.mxu0 0
    %2071 = vmatpush1.bf16.xpose.msra.mxu0 0
    %2072 = vmatprep.subr.bf16.mxu0 0
    %2073 = vmatpush1.bf16.xpose.msra.mxu0 0
    %2074 = vmatprep.subr.bf16.mxu0 0
    %2075 = vmatpush1.bf16.xpose.msra.mxu0 0
    %2076 = vmatprep.subr.bf16.mxu0 0
    %2077 = vmatpush1.bf16.xpose.msra.mxu0 0
    %2078 = vmatprep.subr.bf16.mxu0 0
    %2079 = vmatpush1.bf16.xpose.msra.mxu0 0
    %2080 = vmatprep.subr.bf16.mxu0 0
    %2081 = vmatpush1.bf16.xpose.msra.mxu0 0
    %2082 = vmatprep.mubr.bf16.mxu0 0
    %2083 = vmatmul.mubr.bf16.gmra.mrb[0].mxu0 %v2048
    %v2084 = vpop.f32.mrb[0].mxu0
    %v2085 = vadd.f32 0.0, %v2084
    %v2086 = vpop.f32.mrb[0].mxu0
    %v2087 = vpop.f32.mrb[0].mxu0
    %v2088 = vpop.f32.mrb[0].mxu0
    %2089 = vdwg.mxu0
    %v2090 = vsel %vm1439, %v2085, -inf
    %2091 = vmax.xlane.f32.xlu0 %v2090
    %v2092 = vpop.xlane.xlu0 %2091
    %v2093 = vsub.f32 %v2085, %v2092
    %v2094 = vmul.f32 %v2093, 1.442695
    %v2095 = vpow.pop %v2094
    %v2096 = vsel %vm1439, %v2095, 0.0
    %2097 = vadd.xlane.f32.xlu0 %v2096
    %v2098 = vpop.xlane.xlu0 %2097
    %v2099 = vrcp.pop %v2098
    %v2100 = vmul.f32 %v2095, %v2099
    %v2101 = vpack.c.bf16 %v2100, %v2100
    %v2102 = vpack.c.bf16 %v2043, %v2043
    %v2104 = vsel %vm1453, %v2101, 0
    %v2107 = vsel %vm1457, %v2102, 0
    %2109 = vmatprep.subr.bf16.mxu0 0
    %2110 = vmatpush1.bf16.msra.mxu0 %v2107
    %2111 = vmatprep.subr.bf16.mxu0 0
    %2112 = vmatpush1.bf16.msra.mxu0 0
    %2113 = vmatprep.subr.bf16.mxu0 0
    %2114 = vmatpush1.bf16.msra.mxu0 0
    %2115 = vmatprep.subr.bf16.mxu0 0
    %2116 = vmatpush1.bf16.msra.mxu0 0
    %2117 = vmatprep.subr.bf16.mxu0 0
    %2118 = vmatpush1.bf16.msra.mxu0 0
    %2119 = vmatprep.subr.bf16.mxu0 0
    %2120 = vmatpush1.bf16.msra.mxu0 0
    %2121 = vmatprep.subr.bf16.mxu0 0
    %2122 = vmatpush1.bf16.msra.mxu0 0
    %2123 = vmatprep.subr.bf16.mxu0 0
    %2124 = vmatpush1.bf16.msra.mxu0 0
    %2125 = vmatprep.subr.bf16.mxu0 0
    %2126 = vmatpush1.bf16.msra.mxu0 0
    %2127 = vmatprep.subr.bf16.mxu0 0
    %2128 = vmatpush1.bf16.msra.mxu0 0
    %2129 = vmatprep.subr.bf16.mxu0 0
    %2130 = vmatpush1.bf16.msra.mxu0 0
    %2131 = vmatprep.subr.bf16.mxu0 0
    %2132 = vmatpush1.bf16.msra.mxu0 0
    %2133 = vmatprep.subr.bf16.mxu0 0
    %2134 = vmatpush1.bf16.msra.mxu0 0
    %2135 = vmatprep.subr.bf16.mxu0 0
    %2136 = vmatpush1.bf16.msra.mxu0 0
    %2137 = vmatprep.subr.bf16.mxu0 0
    %2138 = vmatpush1.bf16.msra.mxu0 0
    %2139 = vmatprep.subr.bf16.mxu0 0
    %2140 = vmatpush1.bf16.msra.mxu0 0
    %2141 = vmatprep.mubr.bf16.mxu0 0
    %2142 = vmatmul.mubr.bf16.gmra.mrb[0].mxu0 %v2104
    %v2143 = vpop.f32.mrb[0].mxu0
    %v2144 = vadd.f32 0.0, %v2143
    %v2145 = vpop.f32.mrb[0].mxu0
    %v2146 = vpop.f32.mrb[0].mxu0
    %v2147 = vpop.f32.mrb[0].mxu0
    %2148 = vdwg.mxu0
    %v2149 = vsel %vm1501, %v2144, 0.0
    %v2150 = vrot.slane %v2149, 4
    %v2151 = vadd.f32 %v2149, %v2150
    %v2152 = vrot.slane %v2151, 2
    %v2153 = vadd.f32 %v2151, %v2152
    %v2154 = vrot.slane %v2153, 1
    %v2155 = vadd.f32 %v2153, %v2154
    %v2156 = vmul.f32 %v2155, %v1509
    %vm2157 = vcmask 1040384
    %v2158 = vsel %vm2157, %v1510, %v2156
    %2159 = vst [vmem:[#allocation11] sm:$0x3] %v2158
    // Predicated region
    $region58: #{tpu_custom_call.1} parent=1 // pred_check
      _
    $region59: #{tpu_custom_call.1} parent=1 // pred_check_branch
      %2161 = sbr.rel (0) target = $region61
    $region60: #{tpu_custom_call.1} parent=1 // pred_region
      %s2163 = ssub.s32 32, 32
      %2164 = vsyncadd [#allocation4], %s2163
      %s2166 = sshll.u32 [#allocation11], 4
      %s2167 = int_to_ptr.vmem [resolvable:$true] %s2166
      %2169 = dma.vmem_to_hbm [thread:$0]  %s2167, 32, %s9, [#allocation4]
    $region61: #{tpu_custom_call.1} parent=1 // pred_fallthru
      _
    // Predicated region
    $region62: #{tpu_custom_call.1} parent=1 // pred_check
      _
    $region63: #{tpu_custom_call.1} parent=1 // pred_check_branch
      %2171 = sbr.rel (0) target = $region65
    $region64: #{tpu_custom_call.1} parent=1 // pred_region
      %2172 = dma.done [#allocation4], 32
    $region65: #{tpu_custom_call.1} parent=1 // pred_fallthru
      _
    %2173 = vsyncpa [#allocation3], 1
    %2174 = vsyncpa [#allocation6], 1
    %2175 = vsyncpa [#allocation9], 1
    %2176 = vsyncpa [#allocation4], 1

</llo_original>
